<compile_context>
chip_gen: v6e
topology: v6e:2x2x1
jax: 0.10.0
libtpu: 0.0.40
codegen_flags: <defaults>
</compile_context>

<pallas_src>
import math

import numpy as np
import jax
import jax.numpy as jnp
from jax.experimental import pallas as pl
from jax.experimental.pallas import tpu as pltpu

EPS = 1e-5        # BatchNorm1d default eps
K1 = 15           # layer1 kernel size (padded to 16 taps)
K = 3             # layers 2-4 kernel size
N_HEADS = 8
HEAD_DIM = 16
HIDDEN = 128
SEQ = 4           # AdaptiveMaxPool1d(4) output length
FEAT = 256

# Packed per-channel shift/bias vector: (offset, length) at 128-aligned lane offsets.
_SH = dict(t1=(0, 16), t2=(128, 32), t3=(256, 64), t4=(384, 128),
           bqkv=(512, 384), b5=(896, 256))
_SH_TOTAL = 1152


# --------------------------------------------------------------------------
# Pallas kernel (one batch tile per grid step; weights resident in VMEM)
# --------------------------------------------------------------------------
def _make_kernel(mxu_dtype, precise):
    def mm(a, w):
        # 2-D MXU matmul; operands cast at the MXU boundary, f32 accumulation.
        return jnp.dot(a.astype(mxu_dtype), w.astype(mxu_dtype),
                       preferred_element_type=jnp.float32)

    def kernel(xc_ref, w1_ref, w2_ref, w3_ref, w4_ref, wqkv_ref, w5_ref,
               seg_ref, exp_ref, sh_ref, out_ref):
        def sh(name):                       # lane-aligned slice of the packed shifts
            o, n = _SH[name]
            return sh_ref[:, o:o + n]

        xc = xc_ref[...]                    # (Bt, L1, 16) layer-1 im2col (taps padded)
        Bt, L1, T1 = xc.shape

        # ---- layer1: Conv1d(1,16,15)+bias+BN+ReLU == one matmul (BN scale in w1)
        y = mm(xc.reshape(Bt * L1, T1), w1_ref[...])              # (Bt*L1, 16)
        h = jnp.maximum(y + sh('t1'), 0.0).reshape(Bt, L1, 16)

        def conv_bn_relu(h, w_ref, t):
            # K=3 per-tap accumulated matmuls (no lane-concat im2col); BN scale folded
            # into the per-tap weights, so only shift + ReLU remain elementwise.
            Bt, Lh, Cin = h.shape
            Lo = Lh - (K - 1)
            Cout = w_ref.shape[-1]
            acc = None
            for k in range(K):
                term = mm(h[:, k:k + Lo, :].reshape(Bt * Lo, Cin), w_ref[k])
                acc = term if acc is None else acc + term
            return jnp.maximum(acc + t, 0.0).reshape(Bt, Lo, Cout)

        # ---- layer2 + MaxPool1d(kernel=2, stride=2)
        h = conv_bn_relu(h, w2_ref, sh('t2'))
        Lp = h.shape[1] // 2
        hr = h[:, :Lp * 2, :].reshape(Bt, Lp, 2, h.shape[2])
        h = jnp.maximum(hr[:, :, 0, :], hr[:, :, 1, :])

        # ---- layer3 / layer4
        h = conv_bn_relu(h, w3_ref, sh('t3'))
        h = conv_bn_relu(h, w4_ref, sh('t4'))

        # ---- AdaptiveMaxPool1d(4): window i = [floor(i*L/4), ceil((i+1)*L/4))
        L4 = h.shape[1]
        pooled = []
        for i in range(SEQ):
            s = (i * L4) // SEQ
            e = ((i + 1) * L4 + SEQ - 1) // SEQ
            pooled.append(jnp.max(h[:, s:e, :], axis=1, keepdims=True))
        h = jnp.concatenate(pooled, axis=1)               # (Bt, 4, 128) == x.transpose(1,2)

        # ---- SelfAttention(128, 8): fused QKV projection, no per-head loop.
        qkv = mm(h.reshape(Bt * SEQ, HIDDEN), wqkv_ref[...]) + sh('bqkv')   # (Bt*4, 384)
        q = qkv[:, 0 * HIDDEN:1 * HIDDEN].reshape(Bt, SEQ, HIDDEN)
        k_ = qkv[:, 1 * HIDDEN:2 * HIDDEN].reshape(Bt, SEQ, HIDDEN)
        v = qkv[:, 2 * HIDDEN:3 * HIDDEN].reshape(Bt, SEQ, HIDDEN)

        # scores: VPU broadcast-multiply + ONE matmul against the head-segment
        # indicator (scale folded in) -> (Bt, Sq, Sk, H).  Replaces 16*Bt tiny
        # per-head MXU dispatches.
        prod = q[:, :, None, :] * k_[:, None, :, :]                    # (Bt, 4, 4, 128)
        sc = mm(prod.reshape(Bt * SEQ * SEQ, HIDDEN), seg_ref[...])    # (Bt*16, 8)
        sc = sc.reshape(Bt, SEQ, SEQ, N_HEADS)

        m = jnp.max(sc, axis=2, keepdims=True)                         # softmax over k
        e = jnp.exp(sc - m)
        den = jnp.sum(e, axis=2, keepdims=True)
        if precise:
            p = e / den
        else:
            p = e * pl.reciprocal(den, approx=True)                    # EUP slot

        # context: expand per-head probs across their 16 lanes (one matmul against
        # the transposed indicator), then VPU multiply + reduce over k.
        pe = mm(p.reshape(Bt * SEQ * SEQ, N_HEADS), exp_ref[...])      # (Bt*16, 128)
        pe = pe.reshape(Bt, SEQ, SEQ, HIDDEN)
        ctx = jnp.sum(pe * v[:, None, :, :], axis=2)                   # (Bt, 4, 128)

        # ---- layer5: Linear(512, 256) + ReLU (Dropout = identity)
        out = mm(ctx.reshape(Bt, SEQ * HIDDEN), w5_ref[...]) + sh('b5')
        out_ref[...] = jnp.maximum(out, 0.0)

    return kernel


# --------------------------------------------------------------------------
# Batch-tile selection: VMEM-capacity aware, multiple grid steps when B allows.
# --------------------------------------------------------------------------
def _choose_batch_tile(B, L, requested=None):
    if requested is None:
        vmem_cap = 128 << 20
        try:
            vmem_cap = int(pltpu.get_tpu_info().vmem_capacity_bytes)   # 64 MiB on v7x
        except Exception:
            pass
        # rough per-batch-element live f32 activation footprint (a few layers live)
        per_elem = 4 * (L - K1 + 1) * 16 * 10
        budget = min(vmem_cap // 2, 48 << 20)       # headroom: weights + double buffers
        requested = int(max(8, min(256, budget // max(per_elem, 1))))
        requested -= requested % 8
    if B <= 8:
        return B                                    # single full tile (block == full dims)
    bt = min(requested, B)
    min_steps = 4 if B >= 32 else 2                 # pipeline x_col DMA / use both TCs
    bt = min(bt, max(8, -(-B // min_steps)))
    bt = max(8, bt - bt % 8)                        # out-block sublane dim multiple of 8
    return bt


# --------------------------------------------------------------------------
# Wrapper: parameter re-layout, BN fold into weights, layer-1 im2col (glue only)
# --------------------------------------------------------------------------
def cnn_features_pallas(x, p, *, precise=False, batch_tile=None):
    B, cin, L = x.shape
    assert cin == 1
    mxu_dtype = jnp.float32 if precise else jnp.bfloat16
    L1 = L - K1 + 1

    # ---- fold conv bias + BatchNorm (eval running stats) into scale/shift (f32)
    def bn_fold(b, g, beta, m, v):
        scale = (g / jnp.sqrt(v + EPS)).astype(jnp.float32)
        shift = ((b - m) * scale + beta).astype(jnp.float32)
        return scale, shift

    s1, t1 = bn_fold(p['b1'], p['g1'], p['be1'], p['m1'], p['v1'])
    s2, t2 = bn_fold(p['b2'], p['g2'], p['be2'], p['m2'], p['v2'])
    s3, t3 = bn_fold(p['b3'], p['g3'], p['be3'], p['m3'], p['v3'])
    s4, t4 = bn_fold(p['b4'], p['g4'], p['be4'], p['m4'], p['v4'])

    # ---- BN scale folded into the weights in f32, single cast to the MXU dtype
    w1 = jnp.transpose(p['w1'][:, 0, :], (1, 0))                 # (15, 16) tap-major
    w1 = jnp.pad(w1, ((0, 1), (0, 0)))                           # pad taps 15 -> 16
    w1 = (w1 * s1[None, :]).astype(mxu_dtype)

    def conv_taps(w, s):   # (Cout, Cin, K) -> (K, Cin, Cout), scale-folded per tap
        return (jnp.transpose(w, (2, 1, 0)) * s[None, None, :]).astype(mxu_dtype)

    w2 = conv_taps(p['w2'], s2)
    w3 = conv_taps(p['w3'], s3)
    w4 = conv_taps(p['w4'], s4)

    wqkv = jnp.concatenate([p['wq'].T, p['wk'].T, p['wv'].T], axis=1).astype(mxu_dtype)
    w5 = p['w5'].T.astype(mxu_dtype)                              # (512, 256)

    # head-segment matrices: score reduction (1/sqrt(d) folded) and prob expansion
    seg_np = (np.arange(HIDDEN)[:, None] // HEAD_DIM
              == np.arange(N_HEADS)[None, :]).astype(np.float32)
    seg = jnp.asarray(seg_np / math.sqrt(HEAD_DIM)).astype(mxu_dtype)   # (128, 8)
    exp_m = jnp.asarray(seg_np.T).astype(mxu_dtype)                     # (8, 128)

    # ---- all per-channel shifts / biases packed into ONE lane-aligned f32 vector
    def pad128(v):
        return jnp.pad(v, (0, (-v.shape[0]) % 128))

    bqkv = jnp.concatenate([p['bq'], p['bk'], p['bv']]).astype(jnp.float32)
    shifts = jnp.concatenate([pad128(t1), pad128(t2), pad128(t3), pad128(t4),
                              pad128(bqkv), pad128(p['b5'].astype(jnp.float32))])
    shifts = shifts.reshape(1, _SH_TOTAL)

    # ---- layer-1 im2col (pure gather, zero FLOPs), taps padded 15 -> 16, kept f32
    # TODO(synk): for long L, pass the raw (B, L) signal and build the taps in-kernel
    # to avoid the ~15x im2col HBM inflation (negligible at L=64).
    x2d = x[:, 0, :].astype(jnp.float32)                                # (B, L)
    x_col = jnp.stack([x2d[:, k:k + L1] for k in range(K1)], axis=-1)   # (B, L1, 15)
    x_col = jnp.pad(x_col, ((0, 0), (0, 0), (0, 1)))                    # (B, L1, 16)

    # ---- batch tiling: pad B to a multiple of Bt so the grid actually pipelines
    Bt = _choose_batch_tile(B, L, batch_tile)
    grid_b = pl.cdiv(B, Bt)
    B_pad = grid_b * Bt
    if B_pad != B:
        x_col = jnp.pad(x_col, ((0, B_pad - B), (0, 0), (0, 0)))

    weights = [w1, w2, w3, w4, wqkv, w5, seg, exp_m, shifts]
    in_specs = [pl.BlockSpec((Bt, L1, K1 + 1), lambda b: (b, 0, 0))]
    for w in weights:                                   # full-array, resident in VMEM
        in_specs.append(pl.BlockSpec(w.shape, (lambda b, _n=w.ndim: (0,) * _n)))
    out_spec = pl.BlockSpec((Bt, FEAT), lambda b: (b, 0))

    vmem_cap = 128 << 20
    try:
        vmem_cap = int(pltpu.get_tpu_info().vmem_capacity_bytes)
    except Exception:
        pass
    vmem_limit = int(min(vmem_cap * 3 // 4, 100 << 20))

    # Rough cost estimate (helps XLA schedule the surrounding glue).
    L2 = L1 - (K - 1); Lp = L2 // 2; L3 = Lp - (K - 1); L4 = L3 - (K - 1)
    flops = 2 * B_pad * (L1 * 16 * 16
                         + K * (L2 * 16 * 32 + L3 * 32 * 64 + L4 * 64 * 128)
                         + SEQ * HIDDEN * 3 * HIDDEN
                         + 2 * SEQ * SEQ * HIDDEN
                         + 2 * SEQ * SEQ * HIDDEN * N_HEADS
                         + SEQ * HIDDEN * FEAT)
    bytes_accessed = int(sum(int(np.prod(a.shape)) * a.dtype.itemsize
                             for a in [x_col] + weights) + B_pad * FEAT * 4)
    cost = pl.CostEstimate(flops=int(flops),
                           transcendentals=int(B_pad * SEQ * SEQ * N_HEADS),
                           bytes_accessed=bytes_accessed)

    out = pl.pallas_call(
        _make_kernel(mxu_dtype, precise),
        out_shape=jax.ShapeDtypeStruct((B_pad, FEAT), jnp.float32),
        grid=(grid_b,),
        in_specs=in_specs,
        out_specs=out_spec,
        compiler_params=pltpu.CompilerParams(
            dimension_semantics=("parallel",),
            vmem_limit_bytes=vmem_limit),
        cost_estimate=cost,
    )(x_col, *weights)
    return out[:B]


# --------------------------------------------------------------------------
# Deterministic parameter init (synthetic, no checkpoint)
# --------------------------------------------------------------------------
def init_params(key):
    ks = iter(jax.random.split(key, 40))

    def nrm(shape, scale):
        return jax.random.normal(next(ks), shape, jnp.float32) * scale

    p = {}
    conv_shapes = [((16, 1, 15), 16), ((32, 16, 3), 32),
                   ((64, 32, 3), 64), ((128, 64, 3), 128)]
    for i, (wshape, c) in enumerate(conv_shapes, start=1):
        p[f'w{i}'] = nrm(wshape, 0.15)
        p[f'b{i}'] = nrm((c,), 0.1)
        p[f'g{i}'] = 1.0 + nrm((c,), 0.1)           # BN gamma
        p[f'be{i}'] = nrm((c,), 0.1)                # BN beta
        p[f'm{i}'] = nrm((c,), 0.05)                # BN running_mean
        p[f'v{i}'] = 1.0 + jnp.abs(nrm((c,), 0.1))  # BN running_var
    for name in ('q', 'k', 'v'):
        p[f'w{name}'] = nrm((128, 128), 0.05)
        p[f'b{name}'] = nrm((128,), 0.05)
    p['w5'] = nrm((256, 512), 0.05)
    p['b5'] = nrm((256,), 0.05)
    return p


# --------------------------------------------------------------------------
# Pure-JAX reference mirroring the PyTorch module (NCW layout), for checking.
# --------------------------------------------------------------------------
def cnn_features_ref(x, p):
    def conv1d(x, w, b):
        y = jax.lax.conv_general_dilated(
            x, w, window_strides=(1,), padding='VALID',
            dimension_numbers=('NCH', 'OIH', 'NCH'))
        return y + b[None, :, None]

    def bn(x, g, bta, m, v):
        return ((x - m[None, :, None]) / jnp.sqrt(v[None, :, None] + EPS)
                * g[None, :, None] + bta[None, :, None])

    h = jax.nn.relu(bn(conv1d(x, p['w1'], p['b1']), p['g1'], p['be1'], p['m1'], p['v1']))
    h = jax.nn.relu(bn(conv1d(h, p['w2'], p['b2']), p['g2'], p['be2'], p['m2'], p['v2']))
    B, C, L = h.shape
    h = jnp.max(h[:, :, :(L // 2) * 2].reshape(B, C, L // 2, 2), axis=-1)
    h = jax.nn.relu(bn(conv1d(h, p['w3'], p['b3']), p['g3'], p['be3'], p['m3'], p['v3']))
    h = jax.nn.relu(bn(conv1d(h, p['w4'], p['b4']), p['g4'], p['be4'], p['m4'], p['v4']))
    B, C, L = h.shape
    cols = []
    for i in range(4):
        s = (i * L) // 4
        e = ((i + 1) * L + 3) // 4
        cols.append(jnp.max(h[:, :, s:e], axis=-1, keepdims=True))
    h = jnp.concatenate(cols, axis=-1)                 # (B, 128, 4)
    h = jnp.transpose(h, (0, 2, 1))                    # (B, 4, 128)

    def split_heads(t):
        return t.reshape(B, 4, 8, 16).transpose(0, 2, 1, 3)

    q = split_heads(h @ p['wq'].T + p['bq'])
    k = split_heads(h @ p['wk'].T + p['bk'])
    v = split_heads(h @ p['wv'].T + p['bv'])
    sc = jnp.einsum('bhqd,bhkd->bhqk', q, k) / math.sqrt(16)
    pr = jax.nn.softmax(sc, axis=-1)
    ctx = jnp.einsum('bhqk,bhkd->bhqd', pr, v).transpose(0, 2, 1, 3).reshape(B, 512)
    return jax.nn.relu(ctx @ p['w5'].T + p['b5'])


if __name__ == "__main__":
    key = jax.random.PRNGKey(0)
    pkey, xkey, xkey2 = jax.random.split(key, 3)
    params = init_params(pkey)

    # Small input consistent with the module: (batch=2, in_channel=1, length=64)
    x = jax.random.normal(xkey, (2, 1, 64), jnp.float32)
    ref = cnn_features_ref(x, params)

    # Strict check: f32 MXU operands, exact softmax divide.
    out_precise = jax.block_until_ready(
        jax.jit(lambda xx, pp: cnn_features_pallas(xx, pp, precise=True))(x, params))
    assert out_precise.shape == (2, 256)
    np.testing.assert_allclose(np.asarray(out_precise), np.asarray(ref),
                               rtol=1e-3, atol=1e-3)

    # Fast path (default): bf16 MXU operands + approx reciprocal softmax.
    out_fast = jax.block_until_ready(
        jax.jit(lambda xx, pp: cnn_features_pallas(xx, pp, precise=False))(x, params))
    assert out_fast.shape == (2, 256)
    np.testing.assert_allclose(np.asarray(out_fast), np.asarray(ref),
                               rtol=5e-2, atol=5e-2)

    # Exercise the padded multi-step grid path (grid > 1, B not a multiple of Bt).
    xb = jax.random.normal(xkey2, (18, 1, 64), jnp.float32)
    refb = cnn_features_ref(xb, params)
    outb = jax.block_until_ready(
        jax.jit(lambda xx, pp: cnn_features_pallas(xx, pp, precise=False,
                                                   batch_tile=8))(xb, params))
    assert outb.shape == (18, 256)
    np.testing.assert_allclose(np.asarray(outb), np.asarray(refb),
                               rtol=5e-2, atol=5e-2)

    print("KERNEL_OK")
</pallas_src>

<mosaic_0001>
module attributes {stable_mosaic.version = 11 : i64} {
  func.func @kernel(%arg0: i32, %arg1: memref<2x50x16xf32, #tpu.memory_space<vmem>>, %arg2: memref<16x16xf32, #tpu.memory_space<vmem>>, %arg3: memref<3x16x32xf32, #tpu.memory_space<vmem>>, %arg4: memref<3x32x64xf32, #tpu.memory_space<vmem>>, %arg5: memref<3x64x128xf32, #tpu.memory_space<vmem>>, %arg6: memref<128x384xf32, #tpu.memory_space<vmem>>, %arg7: memref<512x256xf32, #tpu.memory_space<vmem>>, %arg8: memref<128x8xf32, #tpu.memory_space<vmem>>, %arg9: memref<8x128xf32, #tpu.memory_space<vmem>>, %arg10: memref<1x1152xf32, #tpu.memory_space<vmem>>, %arg11: memref<2x256xf32, #tpu.memory_space<vmem>>) attributes {dimension_semantics = [#tpu.dimension_semantics<parallel>], iteration_bounds = array<i64: 1>, scalar_prefetch = 0 : i64, scratch_operands = 0 : i64, tpu.core_type = #tpu.core_type<tc>, window_params = [{transform_indices = @transform_0, window_bounds = array<i64: 2, 50, 16>}, {pipeline_mode = #tpu.pipeline_mode<synchronous>, transform_indices = @transform_1, window_bounds = array<i64: 16, 16>}, {pipeline_mode = #tpu.pipeline_mode<synchronous>, transform_indices = @transform_2, window_bounds = array<i64: 3, 16, 32>}, {pipeline_mode = #tpu.pipeline_mode<synchronous>, transform_indices = @transform_3, window_bounds = array<i64: 3, 32, 64>}, {pipeline_mode = #tpu.pipeline_mode<synchronous>, transform_indices = @transform_4, window_bounds = array<i64: 3, 64, 128>}, {pipeline_mode = #tpu.pipeline_mode<synchronous>, transform_indices = @transform_5, window_bounds = array<i64: 128, 384>}, {pipeline_mode = #tpu.pipeline_mode<synchronous>, transform_indices = @transform_6, window_bounds = array<i64: 512, 256>}, {pipeline_mode = #tpu.pipeline_mode<synchronous>, transform_indices = @transform_7, window_bounds = array<i64: 128, 8>}, {pipeline_mode = #tpu.pipeline_mode<synchronous>, transform_indices = @transform_8, window_bounds = array<i64: 8, 128>}, {pipeline_mode = #tpu.pipeline_mode<synchronous>, transform_indices = @transform_9, window_bounds = array<i64: 1, 1152>}, {transform_indices = @transform_10, window_bounds = array<i64: 2, 256>}]} {
    %c0 = arith.constant 0 : index
    %c0_0 = arith.constant 0 : index
    %c0_1 = arith.constant 0 : index
    %0 = vector.load %arg1[%c0, %c0_0, %c0_1] : memref<2x50x16xf32, #tpu.memory_space<vmem>>, vector<2x50x16xf32>
    %1 = vector.shape_cast %0 : vector<2x50x16xf32> to vector<100x16xf32>
    %c0_2 = arith.constant 0 : index
    %c0_3 = arith.constant 0 : index
    %2 = vector.load %arg2[%c0_2, %c0_3] : memref<16x16xf32, #tpu.memory_space<vmem>>, vector<16x16xf32>
    %cst = arith.constant dense<0.000000e+00> : vector<100x16xf32>
    %3 = tpu.matmul %1, %2, %cst {dimension_numbers = #tpu.dot_dimension_numbers<[1], [0], [0], [1], [0, 0, 1, 1], [], []>} : vector<100x16xf32>, vector<16x16xf32>, vector<100x16xf32> -> vector<100x16xf32>
    %c0_4 = arith.constant 0 : index
    %c0_5 = arith.constant 0 : index
    %4 = vector.load %arg10[%c0_4, %c0_5] : memref<1x1152xf32, #tpu.memory_space<vmem>>, vector<1x16xf32>
    %5 = vector.broadcast %4 : vector<1x16xf32> to vector<100x16xf32>
    %6 = arith.addf %3, %5 : vector<100x16xf32>
    %cst_6 = arith.constant 0.000000e+00 : f32
    %7 = vector.broadcast %cst_6 : f32 to vector<100x16xf32>
    %8 = arith.maximumf %6, %7 : vector<100x16xf32>
    %9 = vector.shape_cast %8 : vector<100x16xf32> to vector<2x50x16xf32>
    %c0_7 = arith.constant 0 : index
    %c128 = arith.constant 128 : index
    %10 = vector.load %arg10[%c0_7, %c128] : memref<1x1152xf32, #tpu.memory_space<vmem>>, vector<1x32xf32>
    %11 = vector.extract_strided_slice %9 {offsets = [0, 0, 0], sizes = [2, 48, 16], strides = [1, 1, 1]} : vector<2x50x16xf32> to vector<2x48x16xf32>
    %12 = vector.shape_cast %11 : vector<2x48x16xf32> to vector<96x16xf32>
    %c0_8 = arith.constant 0 : index
    %c0_9 = arith.constant 0 : index
    %c0_10 = arith.constant 0 : index
    %13 = vector.load %arg3[%c0_8, %c0_9, %c0_10] : memref<3x16x32xf32, #tpu.memory_space<vmem>>, vector<1x16x32xf32>
    %14 = vector.shape_cast %13 : vector<1x16x32xf32> to vector<16x32xf32>
    %cst_11 = arith.constant dense<0.000000e+00> : vector<96x32xf32>
    %15 = tpu.matmul %12, %14, %cst_11 {dimension_numbers = #tpu.dot_dimension_numbers<[1], [0], [0], [1], [0, 0, 1, 1], [], []>} : vector<96x16xf32>, vector<16x32xf32>, vector<96x32xf32> -> vector<96x32xf32>
    %16 = vector.extract_strided_slice %9 {offsets = [0, 1, 0], sizes = [2, 48, 16], strides = [1, 1, 1]} : vector<2x50x16xf32> to vector<2x48x16xf32>
    %17 = vector.shape_cast %16 : vector<2x48x16xf32> to vector<96x16xf32>
    %c1 = arith.constant 1 : index
    %c0_12 = arith.constant 0 : index
    %c0_13 = arith.constant 0 : index
    %18 = vector.load %arg3[%c1, %c0_12, %c0_13] : memref<3x16x32xf32, #tpu.memory_space<vmem>>, vector<1x16x32xf32>
    %19 = vector.shape_cast %18 : vector<1x16x32xf32> to vector<16x32xf32>
    %cst_14 = arith.constant dense<0.000000e+00> : vector<96x32xf32>
    %20 = tpu.matmul %17, %19, %cst_14 {dimension_numbers = #tpu.dot_dimension_numbers<[1], [0], [0], [1], [0, 0, 1, 1], [], []>} : vector<96x16xf32>, vector<16x32xf32>, vector<96x32xf32> -> vector<96x32xf32>
    %21 = arith.addf %15, %20 : vector<96x32xf32>
    %22 = vector.extract_strided_slice %9 {offsets = [0, 2, 0], sizes = [2, 48, 16], strides = [1, 1, 1]} : vector<2x50x16xf32> to vector<2x48x16xf32>
    %23 = vector.shape_cast %22 : vector<2x48x16xf32> to vector<96x16xf32>
    %c2 = arith.constant 2 : index
    %c0_15 = arith.constant 0 : index
    %c0_16 = arith.constant 0 : index
    %24 = vector.load %arg3[%c2, %c0_15, %c0_16] : memref<3x16x32xf32, #tpu.memory_space<vmem>>, vector<1x16x32xf32>
    %25 = vector.shape_cast %24 : vector<1x16x32xf32> to vector<16x32xf32>
    %cst_17 = arith.constant dense<0.000000e+00> : vector<96x32xf32>
    %26 = tpu.matmul %23, %25, %cst_17 {dimension_numbers = #tpu.dot_dimension_numbers<[1], [0], [0], [1], [0, 0, 1, 1], [], []>} : vector<96x16xf32>, vector<16x32xf32>, vector<96x32xf32> -> vector<96x32xf32>
    %27 = arith.addf %21, %26 : vector<96x32xf32>
    %28 = vector.broadcast %10 : vector<1x32xf32> to vector<96x32xf32>
    %29 = arith.addf %27, %28 : vector<96x32xf32>
    %cst_18 = arith.constant 0.000000e+00 : f32
    %30 = vector.broadcast %cst_18 : f32 to vector<96x32xf32>
    %31 = arith.maximumf %29, %30 : vector<96x32xf32>
    %32 = vector.shape_cast %31 : vector<96x32xf32> to vector<2x48x32xf32>
    %33 = vector.shape_cast %32 : vector<2x48x32xf32> to vector<2x24x2x32xf32>
    %34 = vector.extract_strided_slice %33 {offsets = [0, 0, 0, 0], sizes = [2, 24, 1, 32], strides = [1, 1, 1, 1]} : vector<2x24x2x32xf32> to vector<2x24x1x32xf32>
    %35 = vector.shape_cast %34 : vector<2x24x1x32xf32> to vector<2x24x32xf32>
    %36 = vector.extract_strided_slice %33 {offsets = [0, 0, 1, 0], sizes = [2, 24, 1, 32], strides = [1, 1, 1, 1]} : vector<2x24x2x32xf32> to vector<2x24x1x32xf32>
    %37 = vector.shape_cast %36 : vector<2x24x1x32xf32> to vector<2x24x32xf32>
    %38 = arith.maximumf %35, %37 : vector<2x24x32xf32>
    %c0_19 = arith.constant 0 : index
    %c256 = arith.constant 256 : index
    %39 = vector.load %arg10[%c0_19, %c256] : memref<1x1152xf32, #tpu.memory_space<vmem>>, vector<1x64xf32>
    %40 = vector.extract_strided_slice %38 {offsets = [0, 0, 0], sizes = [2, 22, 32], strides = [1, 1, 1]} : vector<2x24x32xf32> to vector<2x22x32xf32>
    %41 = vector.shape_cast %40 : vector<2x22x32xf32> to vector<44x32xf32>
    %c0_20 = arith.constant 0 : index
    %c0_21 = arith.constant 0 : index
    %c0_22 = arith.constant 0 : index
    %42 = vector.load %arg4[%c0_20, %c0_21, %c0_22] : memref<3x32x64xf32, #tpu.memory_space<vmem>>, vector<1x32x64xf32>
    %43 = vector.shape_cast %42 : vector<1x32x64xf32> to vector<32x64xf32>
    %cst_23 = arith.constant dense<0.000000e+00> : vector<44x64xf32>
    %44 = tpu.matmul %41, %43, %cst_23 {dimension_numbers = #tpu.dot_dimension_numbers<[1], [0], [0], [1], [0, 0, 1, 1], [], []>} : vector<44x32xf32>, vector<32x64xf32>, vector<44x64xf32> -> vector<44x64xf32>
    %45 = vector.extract_strided_slice %38 {offsets = [0, 1, 0], sizes = [2, 22, 32], strides = [1, 1, 1]} : vector<2x24x32xf32> to vector<2x22x32xf32>
    %46 = vector.shape_cast %45 : vector<2x22x32xf32> to vector<44x32xf32>
    %c1_24 = arith.constant 1 : index
    %c0_25 = arith.constant 0 : index
    %c0_26 = arith.constant 0 : index
    %47 = vector.load %arg4[%c1_24, %c0_25, %c0_26] : memref<3x32x64xf32, #tpu.memory_space<vmem>>, vector<1x32x64xf32>
    %48 = vector.shape_cast %47 : vector<1x32x64xf32> to vector<32x64xf32>
    %cst_27 = arith.constant dense<0.000000e+00> : vector<44x64xf32>
    %49 = tpu.matmul %46, %48, %cst_27 {dimension_numbers = #tpu.dot_dimension_numbers<[1], [0], [0], [1], [0, 0, 1, 1], [], []>} : vector<44x32xf32>, vector<32x64xf32>, vector<44x64xf32> -> vector<44x64xf32>
    %50 = arith.addf %44, %49 : vector<44x64xf32>
    %51 = vector.extract_strided_slice %38 {offsets = [0, 2, 0], sizes = [2, 22, 32], strides = [1, 1, 1]} : vector<2x24x32xf32> to vector<2x22x32xf32>
    %52 = vector.shape_cast %51 : vector<2x22x32xf32> to vector<44x32xf32>
    %c2_28 = arith.constant 2 : index
    %c0_29 = arith.constant 0 : index
    %c0_30 = arith.constant 0 : index
    %53 = vector.load %arg4[%c2_28, %c0_29, %c0_30] : memref<3x32x64xf32, #tpu.memory_space<vmem>>, vector<1x32x64xf32>
    %54 = vector.shape_cast %53 : vector<1x32x64xf32> to vector<32x64xf32>
    %cst_31 = arith.constant dense<0.000000e+00> : vector<44x64xf32>
    %55 = tpu.matmul %52, %54, %cst_31 {dimension_numbers = #tpu.dot_dimension_numbers<[1], [0], [0], [1], [0, 0, 1, 1], [], []>} : vector<44x32xf32>, vector<32x64xf32>, vector<44x64xf32> -> vector<44x64xf32>
    %56 = arith.addf %50, %55 : vector<44x64xf32>
    %57 = vector.broadcast %39 : vector<1x64xf32> to vector<44x64xf32>
    %58 = arith.addf %56, %57 : vector<44x64xf32>
    %cst_32 = arith.constant 0.000000e+00 : f32
    %59 = vector.broadcast %cst_32 : f32 to vector<44x64xf32>
    %60 = arith.maximumf %58, %59 : vector<44x64xf32>
    %61 = vector.shape_cast %60 : vector<44x64xf32> to vector<2x22x64xf32>
    %c0_33 = arith.constant 0 : index
    %c384 = arith.constant 384 : index
    %62 = vector.load %arg10[%c0_33, %c384] : memref<1x1152xf32, #tpu.memory_space<vmem>>, vector<1x128xf32>
    %63 = vector.extract_strided_slice %61 {offsets = [0, 0, 0], sizes = [2, 20, 64], strides = [1, 1, 1]} : vector<2x22x64xf32> to vector<2x20x64xf32>
    %64 = vector.shape_cast %63 : vector<2x20x64xf32> to vector<40x64xf32>
    %c0_34 = arith.constant 0 : index
    %c0_35 = arith.constant 0 : index
    %c0_36 = arith.constant 0 : index
    %65 = vector.load %arg5[%c0_34, %c0_35, %c0_36] : memref<3x64x128xf32, #tpu.memory_space<vmem>>, vector<1x64x128xf32>
    %66 = vector.shape_cast %65 : vector<1x64x128xf32> to vector<64x128xf32>
    %cst_37 = arith.constant dense<0.000000e+00> : vector<40x128xf32>
    %67 = tpu.matmul %64, %66, %cst_37 {dimension_numbers = #tpu.dot_dimension_numbers<[1], [0], [0], [1], [0, 0, 1, 1], [], []>} : vector<40x64xf32>, vector<64x128xf32>, vector<40x128xf32> -> vector<40x128xf32>
    %68 = vector.extract_strided_slice %61 {offsets = [0, 1, 0], sizes = [2, 20, 64], strides = [1, 1, 1]} : vector<2x22x64xf32> to vector<2x20x64xf32>
    %69 = vector.shape_cast %68 : vector<2x20x64xf32> to vector<40x64xf32>
    %c1_38 = arith.constant 1 : index
    %c0_39 = arith.constant 0 : index
    %c0_40 = arith.constant 0 : index
    %70 = vector.load %arg5[%c1_38, %c0_39, %c0_40] : memref<3x64x128xf32, #tpu.memory_space<vmem>>, vector<1x64x128xf32>
    %71 = vector.shape_cast %70 : vector<1x64x128xf32> to vector<64x128xf32>
    %cst_41 = arith.constant dense<0.000000e+00> : vector<40x128xf32>
    %72 = tpu.matmul %69, %71, %cst_41 {dimension_numbers = #tpu.dot_dimension_numbers<[1], [0], [0], [1], [0, 0, 1, 1], [], []>} : vector<40x64xf32>, vector<64x128xf32>, vector<40x128xf32> -> vector<40x128xf32>
    %73 = arith.addf %67, %72 : vector<40x128xf32>
    %74 = vector.extract_strided_slice %61 {offsets = [0, 2, 0], sizes = [2, 20, 64], strides = [1, 1, 1]} : vector<2x22x64xf32> to vector<2x20x64xf32>
    %75 = vector.shape_cast %74 : vector<2x20x64xf32> to vector<40x64xf32>
    %c2_42 = arith.constant 2 : index
    %c0_43 = arith.constant 0 : index
    %c0_44 = arith.constant 0 : index
    %76 = vector.load %arg5[%c2_42, %c0_43, %c0_44] : memref<3x64x128xf32, #tpu.memory_space<vmem>>, vector<1x64x128xf32>
    %77 = vector.shape_cast %76 : vector<1x64x128xf32> to vector<64x128xf32>
    %cst_45 = arith.constant dense<0.000000e+00> : vector<40x128xf32>
    %78 = tpu.matmul %75, %77, %cst_45 {dimension_numbers = #tpu.dot_dimension_numbers<[1], [0], [0], [1], [0, 0, 1, 1], [], []>} : vector<40x64xf32>, vector<64x128xf32>, vector<40x128xf32> -> vector<40x128xf32>
    %79 = arith.addf %73, %78 : vector<40x128xf32>
    %80 = vector.broadcast %62 : vector<1x128xf32> to vector<40x128xf32>
    %81 = arith.addf %79, %80 : vector<40x128xf32>
    %cst_46 = arith.constant 0.000000e+00 : f32
    %82 = vector.broadcast %cst_46 : f32 to vector<40x128xf32>
    %83 = arith.maximumf %81, %82 : vector<40x128xf32>
    %84 = vector.shape_cast %83 : vector<40x128xf32> to vector<2x20x128xf32>
    %85 = vector.extract_strided_slice %84 {offsets = [0, 0, 0], sizes = [2, 5, 128], strides = [1, 1, 1]} : vector<2x20x128xf32> to vector<2x5x128xf32>
    %cst_47 = arith.constant dense<0xFF800000> : vector<2x128xf32>
    %86 = vector.multi_reduction <maximumf>, %85, %cst_47 [1] : vector<2x5x128xf32> to vector<2x128xf32>
    %87 = vector.shape_cast %86 : vector<2x128xf32> to vector<2x1x128xf32>
    %88 = vector.extract_strided_slice %84 {offsets = [0, 5, 0], sizes = [2, 5, 128], strides = [1, 1, 1]} : vector<2x20x128xf32> to vector<2x5x128xf32>
    %cst_48 = arith.constant dense<0xFF800000> : vector<2x128xf32>
    %89 = vector.multi_reduction <maximumf>, %88, %cst_48 [1] : vector<2x5x128xf32> to vector<2x128xf32>
    %90 = vector.shape_cast %89 : vector<2x128xf32> to vector<2x1x128xf32>
    %91 = vector.extract_strided_slice %84 {offsets = [0, 10, 0], sizes = [2, 5, 128], strides = [1, 1, 1]} : vector<2x20x128xf32> to vector<2x5x128xf32>
    %cst_49 = arith.constant dense<0xFF800000> : vector<2x128xf32>
    %92 = vector.multi_reduction <maximumf>, %91, %cst_49 [1] : vector<2x5x128xf32> to vector<2x128xf32>
    %93 = vector.shape_cast %92 : vector<2x128xf32> to vector<2x1x128xf32>
    %94 = vector.extract_strided_slice %84 {offsets = [0, 15, 0], sizes = [2, 5, 128], strides = [1, 1, 1]} : vector<2x20x128xf32> to vector<2x5x128xf32>
    %cst_50 = arith.constant dense<0xFF800000> : vector<2x128xf32>
    %95 = vector.multi_reduction <maximumf>, %94, %cst_50 [1] : vector<2x5x128xf32> to vector<2x128xf32>
    %96 = vector.shape_cast %95 : vector<2x128xf32> to vector<2x1x128xf32>
    %97 = tpu.concatenate %87, %90, %93, %96 in 1 : vector<2x1x128xf32>, vector<2x1x128xf32>, vector<2x1x128xf32>, vector<2x1x128xf32> -> vector<2x4x128xf32>
    %98 = vector.shape_cast %97 : vector<2x4x128xf32> to vector<8x128xf32>
    %c0_51 = arith.constant 0 : index
    %c0_52 = arith.constant 0 : index
    %99 = vector.load %arg6[%c0_51, %c0_52] : memref<128x384xf32, #tpu.memory_space<vmem>>, vector<128x384xf32>
    %cst_53 = arith.constant dense<0.000000e+00> : vector<8x384xf32>
    %100 = tpu.matmul %98, %99, %cst_53 {dimension_numbers = #tpu.dot_dimension_numbers<[1], [0], [0], [1], [0, 0, 1, 1], [], []>} : vector<8x128xf32>, vector<128x384xf32>, vector<8x384xf32> -> vector<8x384xf32>
    %c0_54 = arith.constant 0 : index
    %c512 = arith.constant 512 : index
    %101 = vector.load %arg10[%c0_54, %c512] : memref<1x1152xf32, #tpu.memory_space<vmem>>, vector<1x384xf32>
    %102 = vector.broadcast %101 : vector<1x384xf32> to vector<8x384xf32>
    %103 = arith.addf %100, %102 : vector<8x384xf32>
    %104 = vector.extract_strided_slice %103 {offsets = [0, 0], sizes = [8, 128], strides = [1, 1]} : vector<8x384xf32> to vector<8x128xf32>
    %105 = vector.shape_cast %104 : vector<8x128xf32> to vector<2x4x128xf32>
    %106 = vector.extract_strided_slice %103 {offsets = [0, 128], sizes = [8, 128], strides = [1, 1]} : vector<8x384xf32> to vector<8x128xf32>
    %107 = vector.shape_cast %106 : vector<8x128xf32> to vector<2x4x128xf32>
    %108 = vector.extract_strided_slice %103 {offsets = [0, 256], sizes = [8, 128], strides = [1, 1]} : vector<8x384xf32> to vector<8x128xf32>
    %109 = vector.shape_cast %108 : vector<8x128xf32> to vector<2x4x128xf32>
    %110 = vector.shape_cast %105 : vector<2x4x128xf32> to vector<2x4x1x128xf32>
    %111 = vector.shape_cast %107 : vector<2x4x128xf32> to vector<2x1x4x128xf32>
    %112 = vector.broadcast %110 : vector<2x4x1x128xf32> to vector<2x4x4x128xf32>
    %113 = vector.broadcast %111 : vector<2x1x4x128xf32> to vector<2x4x4x128xf32>
    %114 = arith.mulf %112, %113 : vector<2x4x4x128xf32>
    %115 = vector.shape_cast %114 : vector<2x4x4x128xf32> to vector<32x128xf32>
    %c0_55 = arith.constant 0 : index
    %c0_56 = arith.constant 0 : index
    %116 = vector.load %arg8[%c0_55, %c0_56] : memref<128x8xf32, #tpu.memory_space<vmem>>, vector<128x8xf32>
    %cst_57 = arith.constant dense<0.000000e+00> : vector<32x8xf32>
    %117 = tpu.matmul %115, %116, %cst_57 {dimension_numbers = #tpu.dot_dimension_numbers<[1], [0], [0], [1], [0, 0, 1, 1], [], []>} : vector<32x128xf32>, vector<128x8xf32>, vector<32x8xf32> -> vector<32x8xf32>
    %118 = vector.shape_cast %117 : vector<32x8xf32> to vector<2x4x4x8xf32>
    %cst_58 = arith.constant dense<0xFF800000> : vector<2x4x8xf32>
    %119 = vector.multi_reduction <maximumf>, %118, %cst_58 [2] : vector<2x4x4x8xf32> to vector<2x4x8xf32>
    %120 = vector.shape_cast %119 : vector<2x4x8xf32> to vector<2x4x1x8xf32>
    %121 = vector.broadcast %120 : vector<2x4x1x8xf32> to vector<2x4x4x8xf32>
    %122 = arith.subf %118, %121 : vector<2x4x4x8xf32>
    %123 = math.exp %122 : vector<2x4x4x8xf32>
    %cst_59 = arith.constant dense<0.000000e+00> : vector<2x4x8xf32>
    %124 = vector.multi_reduction <add>, %123, %cst_59 [2] : vector<2x4x4x8xf32> to vector<2x4x8xf32>
    %125 = vector.shape_cast %124 : vector<2x4x8xf32> to vector<2x4x1x8xf32>
    %126 = vector.broadcast %125 : vector<2x4x1x8xf32> to vector<2x4x4x8xf32>
    %127 = arith.divf %123, %126 : vector<2x4x4x8xf32>
    %128 = vector.shape_cast %127 : vector<2x4x4x8xf32> to vector<32x8xf32>
    %c0_60 = arith.constant 0 : index
    %c0_61 = arith.constant 0 : index
    %129 = vector.load %arg9[%c0_60, %c0_61] : memref<8x128xf32, #tpu.memory_space<vmem>>, vector<8x128xf32>
    %cst_62 = arith.constant dense<0.000000e+00> : vector<32x128xf32>
    %130 = tpu.matmul %128, %129, %cst_62 {dimension_numbers = #tpu.dot_dimension_numbers<[1], [0], [0], [1], [0, 0, 1, 1], [], []>} : vector<32x8xf32>, vector<8x128xf32>, vector<32x128xf32> -> vector<32x128xf32>
    %131 = vector.shape_cast %130 : vector<32x128xf32> to vector<2x4x4x128xf32>
    %132 = vector.shape_cast %109 : vector<2x4x128xf32> to vector<2x1x4x128xf32>
    %133 = vector.broadcast %132 : vector<2x1x4x128xf32> to vector<2x4x4x128xf32>
    %134 = arith.mulf %131, %133 : vector<2x4x4x128xf32>
    %cst_63 = arith.constant dense<0.000000e+00> : vector<2x4x128xf32>
    %135 = vector.multi_reduction <add>, %134, %cst_63 [2] : vector<2x4x4x128xf32> to vector<2x4x128xf32>
    %136 = vector.shape_cast %135 : vector<2x4x128xf32> to vector<2x512xf32>
    %c0_64 = arith.constant 0 : index
    %c0_65 = arith.constant 0 : index
    %137 = vector.load %arg7[%c0_64, %c0_65] : memref<512x256xf32, #tpu.memory_space<vmem>>, vector<512x256xf32>
    %cst_66 = arith.constant dense<0.000000e+00> : vector<2x256xf32>
    %138 = tpu.matmul %136, %137, %cst_66 {dimension_numbers = #tpu.dot_dimension_numbers<[1], [0], [0], [1], [0, 0, 1, 1], [], []>} : vector<2x512xf32>, vector<512x256xf32>, vector<2x256xf32> -> vector<2x256xf32>
    %c0_67 = arith.constant 0 : index
    %c896 = arith.constant 896 : index
    %139 = vector.load %arg10[%c0_67, %c896] : memref<1x1152xf32, #tpu.memory_space<vmem>>, vector<1x256xf32>
    %140 = vector.broadcast %139 : vector<1x256xf32> to vector<2x256xf32>
    %141 = arith.addf %138, %140 : vector<2x256xf32>
    %cst_68 = arith.constant 0.000000e+00 : f32
    %142 = vector.broadcast %cst_68 : f32 to vector<2x256xf32>
    %143 = arith.maximumf %141, %142 : vector<2x256xf32>
    %c0_69 = arith.constant 0 : index
    %c0_70 = arith.constant 0 : index
    %144 = vector.load %arg11[%c0_69, %c0_70] : memref<2x256xf32, #tpu.memory_space<vmem>>, vector<2x256xf32>
    tpu.vector_store %arg11[%c0_69, %c0_70], %143 {strides = array<i32>} : memref<2x256xf32, #tpu.memory_space<vmem>>, vector<2x256xf32>,
    return
  }
  func.func @transform_0(%arg0: i32) -> (i32, i32, i32) {
    %c0_i32 = arith.constant 0 : i32
    %c0_i32_0 = arith.constant 0 : i32
    %c0_i32_1 = arith.constant 0 : i32
    return %arg0, %c0_i32, %c0_i32_0 : i32, i32, i32
  }
  func.func @transform_1(%arg0: i32) -> (i32, i32) {
    %c0_i32 = arith.constant 0 : i32
    %c0_i32_0 = arith.constant 0 : i32
    %c0_i32_1 = arith.constant 0 : i32
    return %c0_i32, %c0_i32_0 : i32, i32
  }
  func.func @transform_2(%arg0: i32) -> (i32, i32, i32) {
    %c0_i32 = arith.constant 0 : i32
    %c0_i32_0 = arith.constant 0 : i32
    %c0_i32_1 = arith.constant 0 : i32
    %c0_i32_2 = arith.constant 0 : i32
    return %c0_i32, %c0_i32_0, %c0_i32_1 : i32, i32, i32
  }
  func.func @transform_3(%arg0: i32) -> (i32, i32, i32) {
    %c0_i32 = arith.constant 0 : i32
    %c0_i32_0 = arith.constant 0 : i32
    %c0_i32_1 = arith.constant 0 : i32
    %c0_i32_2 = arith.constant 0 : i32
    return %c0_i32, %c0_i32_0, %c0_i32_1 : i32, i32, i32
  }
  func.func @transform_4(%arg0: i32) -> (i32, i32, i32) {
    %c0_i32 = arith.constant 0 : i32
    %c0_i32_0 = arith.constant 0 : i32
    %c0_i32_1 = arith.constant 0 : i32
    %c0_i32_2 = arith.constant 0 : i32
    return %c0_i32, %c0_i32_0, %c0_i32_1 : i32, i32, i32
  }
  func.func @transform_5(%arg0: i32) -> (i32, i32) {
    %c0_i32 = arith.constant 0 : i32
    %c0_i32_0 = arith.constant 0 : i32
    %c0_i32_1 = arith.constant 0 : i32
    return %c0_i32, %c0_i32_0 : i32, i32
  }
  func.func @transform_6(%arg0: i32) -> (i32, i32) {
    %c0_i32 = arith.constant 0 : i32
    %c0_i32_0 = arith.constant 0 : i32
    %c0_i32_1 = arith.constant 0 : i32
    return %c0_i32, %c0_i32_0 : i32, i32
  }
  func.func @transform_7(%arg0: i32) -> (i32, i32) {
    %c0_i32 = arith.constant 0 : i32
    %c0_i32_0 = arith.constant 0 : i32
    %c0_i32_1 = arith.constant 0 : i32
    return %c0_i32, %c0_i32_0 : i32, i32
  }
  func.func @transform_8(%arg0: i32) -> (i32, i32) {
    %c0_i32 = arith.constant 0 : i32
    %c0_i32_0 = arith.constant 0 : i32
    %c0_i32_1 = arith.constant 0 : i32
    return %c0_i32, %c0_i32_0 : i32, i32
  }
  func.func @transform_9(%arg0: i32) -> (i32, i32) {
    %c0_i32 = arith.constant 0 : i32
    %c0_i32_0 = arith.constant 0 : i32
    %c0_i32_1 = arith.constant 0 : i32
    return %c0_i32, %c0_i32_0 : i32, i32
  }
  func.func @transform_10(%arg0: i32) -> (i32, i32) {
    %c0_i32 = arith.constant 0 : i32
    %c0_i32_0 = arith.constant 0 : i32
    return %arg0, %c0_i32 : i32, i32
  }
}

</mosaic_0001>

<llo_original>
// kernel: custom-call
$region0: #{custom-call}
  %s0 = inlined_call_operand.vmem [shape: f32[1152], index: 0, kind: output, shape index: {}]

// kernel: _lambda_.1
$region0: #{_lambda_.1}
  #allocation0 [shape = 'u32[]', space=smem, size = 0x4, offset = 0x4, fixed_abs, tag = 'smem constant byte address 0x4 - core index']
  #allocation1 [shape = 'u32[144,128]{1,0:T(1,128)}', space=vmem, size = 0x12000, scoped, tag = 'internal scratch']
  %s0 = inlined_call_operand.vmem [shape: f32[2,50,16], index: 0, kind: input, shape index: {}]
  %s1 = inlined_call_operand.vmem [shape: f32[16,16], index: 1, kind: input, shape index: {}]
  %s2 = inlined_call_operand.vmem [shape: f32[3,16,32], index: 2, kind: input, shape index: {}]
  %s3 = inlined_call_operand.vmem [shape: f32[3,32,64], index: 3, kind: input, shape index: {}]
  %s4 = inlined_call_operand.vmem [shape: f32[3,64,128], index: 4, kind: input, shape index: {}]
  %s5 = inlined_call_operand.vmem [shape: f32[128,384], index: 5, kind: input, shape index: {}]
  %s6 = inlined_call_operand.vmem [shape: f32[512,256], index: 6, kind: input, shape index: {}]
  %s7 = inlined_call_operand.vmem [shape: f32[128,8], index: 7, kind: input, shape index: {}]
  %s8 = inlined_call_operand.vmem [shape: f32[8,128], index: 8, kind: input, shape index: {}]
  %s9 = inlined_call_operand.vmem [shape: f32[1,1152], index: 9, kind: input, shape index: {}]
  %s10 = inlined_call_operand.hbm [shape: f32[2,256], index: 10, kind: output, shape index: {}]
  %s11 = sld [smem:[#allocation0]]
  $region50: #{_lambda_.1} parent=0
    _
  %s13 = ssub.s32 1, %s11
  %s14 = scalar_select 0, %s13, %s11
  $region1: #{_lambda_.1} parent=0
    #allocation2 [shape = 'u8[2048]{0}', space=vmem, size = 0x800, scoped, tag = 'output window, operand 0, single buffered']
    #allocation3 [shape = 's32[1]{0}', space=sflag, size = 0x4, scoped, tag = 'scoped memory for _lambda_.1']
    %15 = vsyncpa [#allocation3], 0
    // Predicated region
    $region2: #{_lambda_.1} parent=1 // pred_check
      _
    $region3: #{_lambda_.1} parent=1 // pred_check_branch
      %17 = sbr.rel (0) target = $region5
    $region4: #{_lambda_.1} parent=1 // pred_region
      _
    $region5: #{_lambda_.1} parent=1 // pred_fallthru
      _
    // Predicated region
    $region6: #{_lambda_.1} parent=1 // pred_check
      _
    $region7: #{_lambda_.1} parent=1 // pred_check_branch
      %19 = sbr.rel (0) target = $region9
    $region8: #{_lambda_.1} parent=1 // pred_region
      _
    $region9: #{_lambda_.1} parent=1 // pred_fallthru
      _
    // Predicated region
    $region10: #{_lambda_.1} parent=1 // pred_check
      _
    $region11: #{_lambda_.1} parent=1 // pred_check_branch
      %21 = sbr.rel (0) target = $region13
    $region12: #{_lambda_.1} parent=1 // pred_region
      _
    $region13: #{_lambda_.1} parent=1 // pred_fallthru
      _
    // Predicated region
    $region14: #{_lambda_.1} parent=1 // pred_check
      _
    $region15: #{_lambda_.1} parent=1 // pred_check_branch
      %23 = sbr.rel (0) target = $region17
    $region16: #{_lambda_.1} parent=1 // pred_region
      _
    $region17: #{_lambda_.1} parent=1 // pred_fallthru
      _
    // Predicated region
    $region18: #{_lambda_.1} parent=1 // pred_check
      _
    $region19: #{_lambda_.1} parent=1 // pred_check_branch
      %25 = sbr.rel (0) target = $region21
    $region20: #{_lambda_.1} parent=1 // pred_region
      _
    $region21: #{_lambda_.1} parent=1 // pred_fallthru
      _
    // Predicated region
    $region22: #{_lambda_.1} parent=1 // pred_check
      _
    $region23: #{_lambda_.1} parent=1 // pred_check_branch
      %27 = sbr.rel (0) target = $region25
    $region24: #{_lambda_.1} parent=1 // pred_region
      _
    $region25: #{_lambda_.1} parent=1 // pred_fallthru
      _
    // Predicated region
    $region26: #{_lambda_.1} parent=1 // pred_check
      _
    $region27: #{_lambda_.1} parent=1 // pred_check_branch
      %29 = sbr.rel (0) target = $region29
    $region28: #{_lambda_.1} parent=1 // pred_region
      _
    $region29: #{_lambda_.1} parent=1 // pred_fallthru
      _
    // Predicated region
    $region30: #{_lambda_.1} parent=1 // pred_check
      _
    $region31: #{_lambda_.1} parent=1 // pred_check_branch
      %31 = sbr.rel (0) target = $region33
    $region32: #{_lambda_.1} parent=1 // pred_region
      _
    $region33: #{_lambda_.1} parent=1 // pred_fallthru
      _
    // Predicated region
    $region34: #{_lambda_.1} parent=1 // pred_check
      _
    $region35: #{_lambda_.1} parent=1 // pred_check_branch
      %33 = sbr.rel (0) target = $region37
    $region36: #{_lambda_.1} parent=1 // pred_region
      _
    $region37: #{_lambda_.1} parent=1 // pred_fallthru
      _
    // Predicated region
    $region38: #{_lambda_.1} parent=1 // pred_check
      _
    $region39: #{_lambda_.1} parent=1 // pred_check_branch
      %35 = sbr.rel (0) target = $region41
    $region40: #{_lambda_.1} parent=1 // pred_region
      _
    $region41: #{_lambda_.1} parent=1 // pred_fallthru
      _
    %v36 = vld [vmem:[%s0] sm:$0xff]
    %v37 = vld [vmem:[%s0 + $0x8] sm:$0xff]
    %v38 = vld [vmem:[%s0 + $0x10] sm:$0xff]
    %v39 = vld [vmem:[%s0 + $0x18] sm:$0xff]
    %v40 = vld [vmem:[%s0 + $0x20] sm:$0xff]
    %v41 = vld [vmem:[%s0 + $0x28] sm:$0xff]
    %v42 = vld [vmem:[%s0 + $0x30] sm:$0x3]
    %v43 = vld [vmem:[%s0 + $0x38] sm:$0xff]
    %v44 = vld [vmem:[%s0 + $0x40] sm:$0xff]
    %v45 = vld [vmem:[%s0 + $0x48] sm:$0xff]
    %v46 = vld [vmem:[%s0 + $0x50] sm:$0xff]
    %v47 = vld [vmem:[%s0 + $0x58] sm:$0xff]
    %v48 = vld [vmem:[%s0 + $0x60] sm:$0xff]
    %v49 = vld [vmem:[%s0 + $0x68] sm:$0x3]
    %v64 = vcombine.high %v36, %v36
    %v66 = vunpack.c.l.s4 1983009808
    %v67 = vunpack.c.0.s8 %v66
    %v68 = vlaneseq
    %v69 = vshrl.u32 %v68, 7
    %v70 = vsub.s32 %v67, %v69
    %v71 = vrot.slane %v36, %v70
    %v73 = vunpack.c.l.s4 1983009808
    %v74 = vunpack.c.0.s8 %v73
    %v75 = vlaneseq
    %v76 = vshrl.u32 %v75, 7
    %v77 = vsub.s32 %v74, %v76
    %v78 = vrot.slane %v64, %v77
    %v79 = vcombine.high %v71, %v71
    %v80 = vcombine.high %v78, %v78
    %v81 = vcombine.high %v37, %v37
    %v83 = vunpack.c.l.s4 1983009808
    %v84 = vunpack.c.0.s8 %v83
    %v85 = vlaneseq
    %v86 = vshrl.u32 %v85, 7
    %v87 = vsub.s32 %v84, %v86
    %v88 = vrot.slane %v37, %v87
    %v90 = vunpack.c.l.s4 1983009808
    %v91 = vunpack.c.0.s8 %v90
    %v92 = vlaneseq
    %v93 = vshrl.u32 %v92, 7
    %v94 = vsub.s32 %v91, %v93
    %v95 = vrot.slane %v81, %v94
    %v96 = vcombine.high %v88, %v88
    %v97 = vcombine.high %v95, %v95
    %v98 = vcombine.high %v38, %v38
    %v100 = vunpack.c.l.s4 1983009808
    %v101 = vunpack.c.0.s8 %v100
    %v102 = vlaneseq
    %v103 = vshrl.u32 %v102, 7
    %v104 = vsub.s32 %v101, %v103
    %v105 = vrot.slane %v38, %v104
    %v107 = vunpack.c.l.s4 1983009808
    %v108 = vunpack.c.0.s8 %v107
    %v109 = vlaneseq
    %v110 = vshrl.u32 %v109, 7
    %v111 = vsub.s32 %v108, %v110
    %v112 = vrot.slane %v98, %v111
    %v113 = vcombine.high %v105, %v105
    %v114 = vcombine.high %v112, %v112
    %v115 = vcombine.high %v39, %v39
    %v117 = vunpack.c.l.s4 1983009808
    %v118 = vunpack.c.0.s8 %v117
    %v119 = vlaneseq
    %v120 = vshrl.u32 %v119, 7
    %v121 = vsub.s32 %v118, %v120
    %v122 = vrot.slane %v39, %v121
    %v124 = vunpack.c.l.s4 1983009808
    %v125 = vunpack.c.0.s8 %v124
    %v126 = vlaneseq
    %v127 = vshrl.u32 %v126, 7
    %v128 = vsub.s32 %v125, %v127
    %v129 = vrot.slane %v115, %v128
    %v130 = vcombine.high %v122, %v122
    %v131 = vcombine.high %v129, %v129
    %v132 = vcombine.high %v40, %v40
    %v134 = vunpack.c.l.s4 1983009808
    %v135 = vunpack.c.0.s8 %v134
    %v136 = vlaneseq
    %v137 = vshrl.u32 %v136, 7
    %v138 = vsub.s32 %v135, %v137
    %v139 = vrot.slane %v40, %v138
    %v141 = vunpack.c.l.s4 1983009808
    %v142 = vunpack.c.0.s8 %v141
    %v143 = vlaneseq
    %v144 = vshrl.u32 %v143, 7
    %v145 = vsub.s32 %v142, %v144
    %v146 = vrot.slane %v132, %v145
    %v147 = vcombine.high %v139, %v139
    %v148 = vcombine.high %v146, %v146
    %v149 = vcombine.high %v41, %v41
    %v151 = vunpack.c.l.s4 1983009808
    %v152 = vunpack.c.0.s8 %v151
    %v153 = vlaneseq
    %v154 = vshrl.u32 %v153, 7
    %v155 = vsub.s32 %v152, %v154
    %v156 = vrot.slane %v41, %v155
    %v158 = vunpack.c.l.s4 1983009808
    %v159 = vunpack.c.0.s8 %v158
    %v160 = vlaneseq
    %v161 = vshrl.u32 %v160, 7
    %v162 = vsub.s32 %v159, %v161
    %v163 = vrot.slane %v149, %v162
    %v164 = vcombine.high %v156, %v156
    %v165 = vcombine.high %v163, %v163
    %v167 = vunpack.c.l.s4 1983009808
    %v168 = vunpack.c.0.s8 %v167
    %v169 = vlaneseq
    %v170 = vshrl.u32 %v169, 7
    %v171 = vsub.s32 %v168, %v170
    %v172 = vrot.slane %v42, %v171
    %v173 = vcombine.high %v43, %v43
    %v175 = vunpack.c.l.s4 1983009808
    %v176 = vunpack.c.0.s8 %v175
    %v177 = vlaneseq
    %v178 = vshrl.u32 %v177, 7
    %v179 = vsub.s32 %v176, %v178
    %v180 = vrot.slane %v43, %v179
    %v182 = vunpack.c.l.s4 1983009808
    %v183 = vunpack.c.0.s8 %v182
    %v184 = vlaneseq
    %v185 = vshrl.u32 %v184, 7
    %v186 = vsub.s32 %v183, %v185
    %v187 = vrot.slane %v173, %v186
    %v188 = vcombine.high %v180, %v180
    %v189 = vcombine.high %v187, %v187
    %v190 = vcombine.high %v44, %v44
    %v192 = vunpack.c.l.s4 1983009808
    %v193 = vunpack.c.0.s8 %v192
    %v194 = vlaneseq
    %v195 = vshrl.u32 %v194, 7
    %v196 = vsub.s32 %v193, %v195
    %v197 = vrot.slane %v44, %v196
    %v199 = vunpack.c.l.s4 1983009808
    %v200 = vunpack.c.0.s8 %v199
    %v201 = vlaneseq
    %v202 = vshrl.u32 %v201, 7
    %v203 = vsub.s32 %v200, %v202
    %v204 = vrot.slane %v190, %v203
    %v205 = vcombine.high %v197, %v197
    %v206 = vcombine.high %v204, %v204
    %v207 = vcombine.high %v45, %v45
    %v209 = vunpack.c.l.s4 1983009808
    %v210 = vunpack.c.0.s8 %v209
    %v211 = vlaneseq
    %v212 = vshrl.u32 %v211, 7
    %v213 = vsub.s32 %v210, %v212
    %v214 = vrot.slane %v45, %v213
    %v216 = vunpack.c.l.s4 1983009808
    %v217 = vunpack.c.0.s8 %v216
    %v218 = vlaneseq
    %v219 = vshrl.u32 %v218, 7
    %v220 = vsub.s32 %v217, %v219
    %v221 = vrot.slane %v207, %v220
    %v222 = vcombine.high %v214, %v214
    %v223 = vcombine.high %v221, %v221
    %v224 = vcombine.high %v46, %v46
    %v226 = vunpack.c.l.s4 1983009808
    %v227 = vunpack.c.0.s8 %v226
    %v228 = vlaneseq
    %v229 = vshrl.u32 %v228, 7
    %v230 = vsub.s32 %v227, %v229
    %v231 = vrot.slane %v46, %v230
    %v233 = vunpack.c.l.s4 1983009808
    %v234 = vunpack.c.0.s8 %v233
    %v235 = vlaneseq
    %v236 = vshrl.u32 %v235, 7
    %v237 = vsub.s32 %v234, %v236
    %v238 = vrot.slane %v224, %v237
    %v239 = vcombine.high %v231, %v231
    %v240 = vcombine.high %v238, %v238
    %v241 = vcombine.high %v47, %v47
    %v243 = vunpack.c.l.s4 1983009808
    %v244 = vunpack.c.0.s8 %v243
    %v245 = vlaneseq
    %v246 = vshrl.u32 %v245, 7
    %v247 = vsub.s32 %v244, %v246
    %v248 = vrot.slane %v47, %v247
    %v250 = vunpack.c.l.s4 1983009808
    %v251 = vunpack.c.0.s8 %v250
    %v252 = vlaneseq
    %v253 = vshrl.u32 %v252, 7
    %v254 = vsub.s32 %v251, %v253
    %v255 = vrot.slane %v241, %v254
    %v256 = vcombine.high %v248, %v248
    %v257 = vcombine.high %v255, %v255
    %v258 = vcombine.high %v48, %v48
    %v260 = vunpack.c.l.s4 1983009808
    %v261 = vunpack.c.0.s8 %v260
    %v262 = vlaneseq
    %v263 = vshrl.u32 %v262, 7
    %v264 = vsub.s32 %v261, %v263
    %v265 = vrot.slane %v48, %v264
    %v267 = vunpack.c.l.s4 1983009808
    %v268 = vunpack.c.0.s8 %v267
    %v269 = vlaneseq
    %v270 = vshrl.u32 %v269, 7
    %v271 = vsub.s32 %v268, %v270
    %v272 = vrot.slane %v258, %v271
    %v273 = vcombine.high %v265, %v265
    %v274 = vcombine.high %v272, %v272
    %v276 = vunpack.c.l.s4 1983009808
    %v277 = vunpack.c.0.s8 %v276
    %v278 = vlaneseq
    %v279 = vshrl.u32 %v278, 7
    %v280 = vsub.s32 %v277, %v279
    %v281 = vrot.slane %v49, %v280
    %v282 = vld [vmem:[%s1] sm:$0xff]
    %v283 = vld [vmem:[%s1 + $0x8] sm:$0xff]
    %v284 = vld [vmem:[%s9] sm:$0x1]
    %v286 = vlaneseq
    %v287 = vshrl.u32 %v286, 7
    %v288 = vsub.s32 0, %v287
    %v289 = vrot.slane %v284, %v288
    %v291 = vcombine.low %v71, %v79
    %v292 = vcombine.low %v78, %v80
    %v294 = vunpack.c.l.s4 1983009808
    %v295 = vunpack.c.0.s8 %v294
    %v296 = vlaneseq
    %v297 = vshrl.u32 %v296, 7
    %v298 = vsub.s32 %v295, %v297
    %v299 = vrot.slane %v291, %v298
    %v301 = vunpack.c.l.s4 1983009808
    %v302 = vunpack.c.0.s8 %v301
    %v303 = vlaneseq
    %v304 = vshrl.u32 %v303, 7
    %v305 = vsub.s32 %v302, %v304
    %v306 = vrot.slane %v292, %v305
    %v307 = vcombine.low %v299, %v306
    %v308 = vcombine.low %v88, %v96
    %v309 = vcombine.low %v95, %v97
    %v311 = vunpack.c.l.s4 1983009808
    %v312 = vunpack.c.0.s8 %v311
    %v313 = vlaneseq
    %v314 = vshrl.u32 %v313, 7
    %v315 = vsub.s32 %v312, %v314
    %v316 = vrot.slane %v308, %v315
    %v318 = vunpack.c.l.s4 1983009808
    %v319 = vunpack.c.0.s8 %v318
    %v320 = vlaneseq
    %v321 = vshrl.u32 %v320, 7
    %v322 = vsub.s32 %v319, %v321
    %v323 = vrot.slane %v309, %v322
    %v324 = vcombine.low %v316, %v323
    %v325 = vcombine.low %v105, %v113
    %v326 = vcombine.low %v112, %v114
    %v328 = vunpack.c.l.s4 1983009808
    %v329 = vunpack.c.0.s8 %v328
    %v330 = vlaneseq
    %v331 = vshrl.u32 %v330, 7
    %v332 = vsub.s32 %v329, %v331
    %v333 = vrot.slane %v325, %v332
    %v335 = vunpack.c.l.s4 1983009808
    %v336 = vunpack.c.0.s8 %v335
    %v337 = vlaneseq
    %v338 = vshrl.u32 %v337, 7
    %v339 = vsub.s32 %v336, %v338
    %v340 = vrot.slane %v326, %v339
    %v341 = vcombine.low %v333, %v340
    %v342 = vcombine.low %v122, %v130
    %v343 = vcombine.low %v129, %v131
    %v345 = vunpack.c.l.s4 1983009808
    %v346 = vunpack.c.0.s8 %v345
    %v347 = vlaneseq
    %v348 = vshrl.u32 %v347, 7
    %v349 = vsub.s32 %v346, %v348
    %v350 = vrot.slane %v342, %v349
    %v352 = vunpack.c.l.s4 1983009808
    %v353 = vunpack.c.0.s8 %v352
    %v354 = vlaneseq
    %v355 = vshrl.u32 %v354, 7
    %v356 = vsub.s32 %v353, %v355
    %v357 = vrot.slane %v343, %v356
    %v358 = vcombine.low %v350, %v357
    %v359 = vcombine.low %v139, %v147
    %v360 = vcombine.low %v146, %v148
    %v362 = vunpack.c.l.s4 1983009808
    %v363 = vunpack.c.0.s8 %v362
    %v364 = vlaneseq
    %v365 = vshrl.u32 %v364, 7
    %v366 = vsub.s32 %v363, %v365
    %v367 = vrot.slane %v359, %v366
    %v369 = vunpack.c.l.s4 1983009808
    %v370 = vunpack.c.0.s8 %v369
    %v371 = vlaneseq
    %v372 = vshrl.u32 %v371, 7
    %v373 = vsub.s32 %v370, %v372
    %v374 = vrot.slane %v360, %v373
    %v375 = vcombine.low %v367, %v374
    %v376 = vcombine.low %v156, %v164
    %v377 = vcombine.low %v163, %v165
    %v379 = vunpack.c.l.s4 1983009808
    %v380 = vunpack.c.0.s8 %v379
    %v381 = vlaneseq
    %v382 = vshrl.u32 %v381, 7
    %v383 = vsub.s32 %v380, %v382
    %v384 = vrot.slane %v376, %v383
    %v386 = vunpack.c.l.s4 1983009808
    %v387 = vunpack.c.0.s8 %v386
    %v388 = vlaneseq
    %v389 = vshrl.u32 %v388, 7
    %v390 = vsub.s32 %v387, %v389
    %v391 = vrot.slane %v377, %v390
    %v392 = vcombine.low %v384, %v391
    %v393 = vcombine.low %v172, %v180
    %v394 = vcombine.low %v188, %v187
    %v396 = vunpack.c.l.s4 1983009808
    %v397 = vunpack.c.0.s8 %v396
    %v398 = vlaneseq
    %v399 = vshrl.u32 %v398, 7
    %v400 = vsub.s32 %v397, %v399
    %v401 = vrot.slane %v393, %v400
    %v403 = vunpack.c.l.s4 1983009808
    %v404 = vunpack.c.0.s8 %v403
    %v405 = vlaneseq
    %v406 = vshrl.u32 %v405, 7
    %v407 = vsub.s32 %v404, %v406
    %v408 = vrot.slane %v394, %v407
    %v409 = vcombine.low %v401, %v408
    %v410 = vcombine.low %v189, %v197
    %v411 = vcombine.low %v205, %v204
    %v413 = vunpack.c.l.s4 1983009808
    %v414 = vunpack.c.0.s8 %v413
    %v415 = vlaneseq
    %v416 = vshrl.u32 %v415, 7
    %v417 = vsub.s32 %v414, %v416
    %v418 = vrot.slane %v410, %v417
    %v420 = vunpack.c.l.s4 1983009808
    %v421 = vunpack.c.0.s8 %v420
    %v422 = vlaneseq
    %v423 = vshrl.u32 %v422, 7
    %v424 = vsub.s32 %v421, %v423
    %v425 = vrot.slane %v411, %v424
    %v426 = vcombine.low %v418, %v425
    %v427 = vcombine.low %v206, %v214
    %v428 = vcombine.low %v222, %v221
    %v430 = vunpack.c.l.s4 1983009808
    %v431 = vunpack.c.0.s8 %v430
    %v432 = vlaneseq
    %v433 = vshrl.u32 %v432, 7
    %v434 = vsub.s32 %v431, %v433
    %v435 = vrot.slane %v427, %v434
    %v437 = vunpack.c.l.s4 1983009808
    %v438 = vunpack.c.0.s8 %v437
    %v439 = vlaneseq
    %v440 = vshrl.u32 %v439, 7
    %v441 = vsub.s32 %v438, %v440
    %v442 = vrot.slane %v428, %v441
    %v443 = vcombine.low %v435, %v442
    %v444 = vcombine.low %v223, %v231
    %v445 = vcombine.low %v239, %v238
    %v447 = vunpack.c.l.s4 1983009808
    %v448 = vunpack.c.0.s8 %v447
    %v449 = vlaneseq
    %v450 = vshrl.u32 %v449, 7
    %v451 = vsub.s32 %v448, %v450
    %v452 = vrot.slane %v444, %v451
    %v454 = vunpack.c.l.s4 1983009808
    %v455 = vunpack.c.0.s8 %v454
    %v456 = vlaneseq
    %v457 = vshrl.u32 %v456, 7
    %v458 = vsub.s32 %v455, %v457
    %v459 = vrot.slane %v445, %v458
    %v460 = vcombine.low %v452, %v459
    %v461 = vcombine.low %v240, %v248
    %v462 = vcombine.low %v256, %v255
    %v464 = vunpack.c.l.s4 1983009808
    %v465 = vunpack.c.0.s8 %v464
    %v466 = vlaneseq
    %v467 = vshrl.u32 %v466, 7
    %v468 = vsub.s32 %v465, %v467
    %v469 = vrot.slane %v461, %v468
    %v471 = vunpack.c.l.s4 1983009808
    %v472 = vunpack.c.0.s8 %v471
    %v473 = vlaneseq
    %v474 = vshrl.u32 %v473, 7
    %v475 = vsub.s32 %v472, %v474
    %v476 = vrot.slane %v462, %v475
    %v477 = vcombine.low %v469, %v476
    %v478 = vcombine.low %v257, %v265
    %v479 = vcombine.low %v273, %v272
    %v481 = vunpack.c.l.s4 1983009808
    %v482 = vunpack.c.0.s8 %v481
    %v483 = vlaneseq
    %v484 = vshrl.u32 %v483, 7
    %v485 = vsub.s32 %v482, %v484
    %v486 = vrot.slane %v478, %v485
    %v488 = vunpack.c.l.s4 1983009808
    %v489 = vunpack.c.0.s8 %v488
    %v490 = vlaneseq
    %v491 = vshrl.u32 %v490, 7
    %v492 = vsub.s32 %v489, %v491
    %v493 = vrot.slane %v479, %v492
    %v494 = vcombine.low %v486, %v493
    %v495 = vcombine.low %v274, %v281
    %v497 = vunpack.c.l.s4 1983009808
    %v498 = vunpack.c.0.s8 %v497
    %v499 = vlaneseq
    %v500 = vshrl.u32 %v499, 7
    %v501 = vsub.s32 %v498, %v500
    %v502 = vrot.slane %v495, %v501
    %vm503 = vcmask 130048
    %v504 = vsel %vm503, %v307, 0
    %v506 = vsel %vm503, %v324, 0
    %v508 = vsel %vm503, %v341, 0
    %v510 = vsel %vm503, %v358, 0
    %v512 = vsel %vm503, %v375, 0
    %v514 = vsel %vm503, %v392, 0
    %v516 = vsel %vm503, %v409, 0
    %v518 = vsel %vm503, %v426, 0
    %v520 = vsel %vm503, %v443, 0
    %v522 = vsel %vm503, %v460, 0
    %v524 = vsel %vm503, %v477, 0
    %v526 = vsel %vm503, %v494, 0
    %v528 = vsel %vm503, %v502, 0
    %530 = vmatprep.subr.mxu0 0.0
    %531 = vmatpush1.msra.mxu0 0.0
    %532 = vmatprep.subr.mxu0 0.0
    %533 = vmatpush1.msra.mxu0 0.0
    %534 = vmatprep.subr.mxu0 0.0
    %535 = vmatpush1.msra.mxu0 0.0
    %536 = vmatprep.subr.mxu0 0.0
    %537 = vmatpush1.msra.mxu0 0.0
    %538 = vmatprep.subr.mxu0 0.0
    %539 = vmatpush1.msra.mxu0 0.0
    %540 = vmatprep.subr.mxu0 0.0
    %541 = vmatpush1.msra.mxu0 0.0
    %542 = vmatprep.subr.mxu0 0.0
    %543 = vmatpush1.msra.mxu0 0.0
    %544 = vmatprep.subr.mxu0 0.0
    %545 = vmatpush1.msra.mxu0 0.0
    %546 = vmatprep.subr.mxu0 0.0
    %547 = vmatpush1.msra.mxu0 0.0
    %548 = vmatprep.subr.mxu0 0.0
    %549 = vmatpush1.msra.mxu0 0.0
    %550 = vmatprep.subr.mxu0 0.0
    %551 = vmatpush1.msra.mxu0 0.0
    %552 = vmatprep.subr.mxu0 0.0
    %553 = vmatpush1.msra.mxu0 0.0
    %554 = vmatprep.subr.mxu0 0.0
    %555 = vmatpush1.msra.mxu0 0.0
    %556 = vmatprep.subr.mxu0 0.0
    %557 = vmatpush1.msra.mxu0 0.0
    %558 = vmatprep.subr.mxu0 0.0
    %559 = vmatpush1.msra.mxu0 %v283
    %560 = vmatprep.subr.mxu0 0.0
    %561 = vmatpush1.msra.mxu0 %v282
    %562 = vmatprep.subr.mxu0 0.0
    %563 = vmatpush2.msra.mxu0 0.0
    %564 = vmatprep.subr.mxu0 0.0
    %565 = vmatpush2.msra.mxu0 0.0
    %566 = vmatprep.subr.mxu0 0.0
    %567 = vmatpush2.msra.mxu0 0.0
    %568 = vmatprep.subr.mxu0 0.0
    %569 = vmatpush2.msra.mxu0 0.0
    %570 = vmatprep.subr.mxu0 0.0
    %571 = vmatpush2.msra.mxu0 0.0
    %572 = vmatprep.subr.mxu0 0.0
    %573 = vmatpush2.msra.mxu0 0.0
    %574 = vmatprep.subr.mxu0 0.0
    %575 = vmatpush2.msra.mxu0 0.0
    %576 = vmatprep.subr.mxu0 0.0
    %577 = vmatpush2.msra.mxu0 0.0
    %578 = vmatprep.subr.mxu0 0.0
    %579 = vmatpush2.msra.mxu0 0.0
    %580 = vmatprep.subr.mxu0 0.0
    %581 = vmatpush2.msra.mxu0 0.0
    %582 = vmatprep.subr.mxu0 0.0
    %583 = vmatpush2.msra.mxu0 0.0
    %584 = vmatprep.subr.mxu0 0.0
    %585 = vmatpush2.msra.mxu0 0.0
    %586 = vmatprep.subr.mxu0 0.0
    %587 = vmatpush2.msra.mxu0 0.0
    %588 = vmatprep.subr.mxu0 0.0
    %589 = vmatpush2.msra.mxu0 0.0
    %590 = vmatprep.subr.mxu0 0.0
    %591 = vmatpush2.msra.mxu0 0.0
    %592 = vmatprep.subr.mxu0 0.0
    %593 = vmatpush2.msra.mxu0 0.0
    %594 = vmatprep.mubr.f32.mxu0 0.0
    %595 = vmatmul.mubr.f32.gmra.mxu0 %v504
    %v596 = vpop.f32.mrf.mxu0
    %v597 = vadd.f32 %v289, %v596
    %v598 = vpop.f32.mrf.mxu0
    %599 = vmatprep.mubr.f32.mxu0 0.0
    %600 = vmatmul.mubr.f32.gmra.mxu0 %v506
    %v601 = vpop.f32.mrf.mxu0
    %v602 = vadd.f32 %v289, %v601
    %v603 = vpop.f32.mrf.mxu0
    %604 = vmatprep.mubr.f32.mxu0 0.0
    %605 = vmatmul.mubr.f32.gmra.mxu0 %v508
    %v606 = vpop.f32.mrf.mxu0
    %v607 = vadd.f32 %v289, %v606
    %v608 = vpop.f32.mrf.mxu0
    %609 = vmatprep.mubr.f32.mxu0 0.0
    %610 = vmatmul.mubr.f32.gmra.mxu0 %v510
    %v611 = vpop.f32.mrf.mxu0
    %v612 = vadd.f32 %v289, %v611
    %v613 = vpop.f32.mrf.mxu0
    %614 = vmatprep.mubr.f32.mxu0 0.0
    %615 = vmatmul.mubr.f32.gmra.mxu0 %v512
    %v616 = vpop.f32.mrf.mxu0
    %v617 = vadd.f32 %v289, %v616
    %v618 = vpop.f32.mrf.mxu0
    %619 = vmatprep.mubr.f32.mxu0 0.0
    %620 = vmatmul.mubr.f32.gmra.mxu0 %v514
    %v621 = vpop.f32.mrf.mxu0
    %v622 = vadd.f32 %v289, %v621
    %v623 = vpop.f32.mrf.mxu0
    %624 = vmatprep.mubr.f32.mxu0 0.0
    %625 = vmatmul.mubr.f32.gmra.mxu0 %v516
    %v626 = vpop.f32.mrf.mxu0
    %v627 = vadd.f32 %v289, %v626
    %v628 = vpop.f32.mrf.mxu0
    %629 = vmatprep.mubr.f32.mxu0 0.0
    %630 = vmatmul.mubr.f32.gmra.mxu0 %v518
    %v631 = vpop.f32.mrf.mxu0
    %v632 = vadd.f32 %v289, %v631
    %v633 = vpop.f32.mrf.mxu0
    %634 = vmatprep.mubr.f32.mxu0 0.0
    %635 = vmatmul.mubr.f32.gmra.mxu0 %v520
    %v636 = vpop.f32.mrf.mxu0
    %v637 = vadd.f32 %v289, %v636
    %v638 = vpop.f32.mrf.mxu0
    %639 = vmatprep.mubr.f32.mxu0 0.0
    %640 = vmatmul.mubr.f32.gmra.mxu0 %v522
    %v641 = vpop.f32.mrf.mxu0
    %v642 = vadd.f32 %v289, %v641
    %v643 = vpop.f32.mrf.mxu0
    %644 = vmatprep.mubr.f32.mxu0 0.0
    %645 = vmatmul.mubr.f32.gmra.mxu0 %v524
    %v646 = vpop.f32.mrf.mxu0
    %v647 = vadd.f32 %v289, %v646
    %v648 = vpop.f32.mrf.mxu0
    %649 = vmatprep.mubr.f32.mxu0 0.0
    %650 = vmatmul.mubr.f32.gmra.mxu0 %v526
    %v651 = vpop.f32.mrf.mxu0
    %v652 = vadd.f32 %v289, %v651
    %v653 = vpop.f32.mrf.mxu0
    %654 = vmatprep.mubr.f32.mxu0 0.0
    %655 = vmatmul.mubr.f32.gmra.mxu0 %v528
    %v656 = vpop.f32.mrf.mxu0
    %v657 = vadd.f32 %v289, %v656
    %v658 = vpop.f32.mrf.mxu0
    %659 = vdwg.mxu0
    %v660 = vmax.f32 %v597, 0.0
    %v661 = vmax.f32 %v602, 0.0
    %v662 = vmax.f32 %v607, 0.0
    %v663 = vmax.f32 %v612, 0.0
    %v664 = vmax.f32 %v617, 0.0
    %v665 = vmax.f32 %v622, 0.0
    %v666 = vmax.f32 %v627, 0.0
    %v667 = vmax.f32 %v632, 0.0
    %v668 = vmax.f32 %v637, 0.0
    %v669 = vmax.f32 %v642, 0.0
    %v670 = vmax.f32 %v647, 0.0
    %v671 = vmax.f32 %v652, 0.0
    %v672 = vmax.f32 %v657, 0.0
    %v686 = vcombine.high %v660, %v660
    %v688 = vunpack.c.l.s4 1983009808
    %v689 = vunpack.c.0.s8 %v688
    %v690 = vlaneseq
    %v691 = vshrl.u32 %v690, 7
    %v692 = vsub.s32 %v689, %v691
    %v693 = vrot.slane %v660, %v692
    %v695 = vunpack.c.l.s4 1983009808
    %v696 = vunpack.c.0.s8 %v695
    %v697 = vlaneseq
    %v698 = vshrl.u32 %v697, 7
    %v699 = vsub.s32 %v696, %v698
    %v700 = vrot.slane %v686, %v699
    %v701 = vcombine.high %v693, %v693
    %v702 = vcombine.high %v700, %v700
    %v703 = vcombine.high %v661, %v661
    %v705 = vunpack.c.l.s4 1983009808
    %v706 = vunpack.c.0.s8 %v705
    %v707 = vlaneseq
    %v708 = vshrl.u32 %v707, 7
    %v709 = vsub.s32 %v706, %v708
    %v710 = vrot.slane %v661, %v709
    %v712 = vunpack.c.l.s4 1983009808
    %v713 = vunpack.c.0.s8 %v712
    %v714 = vlaneseq
    %v715 = vshrl.u32 %v714, 7
    %v716 = vsub.s32 %v713, %v715
    %v717 = vrot.slane %v703, %v716
    %v718 = vcombine.high %v710, %v710
    %v719 = vcombine.high %v717, %v717
    %v720 = vcombine.high %v662, %v662
    %v722 = vunpack.c.l.s4 1983009808
    %v723 = vunpack.c.0.s8 %v722
    %v724 = vlaneseq
    %v725 = vshrl.u32 %v724, 7
    %v726 = vsub.s32 %v723, %v725
    %v727 = vrot.slane %v662, %v726
    %v729 = vunpack.c.l.s4 1983009808
    %v730 = vunpack.c.0.s8 %v729
    %v731 = vlaneseq
    %v732 = vshrl.u32 %v731, 7
    %v733 = vsub.s32 %v730, %v732
    %v734 = vrot.slane %v720, %v733
    %v735 = vcombine.high %v727, %v727
    %v736 = vcombine.high %v734, %v734
    %v737 = vcombine.high %v663, %v663
    %v739 = vunpack.c.l.s4 1983009808
    %v740 = vunpack.c.0.s8 %v739
    %v741 = vlaneseq
    %v742 = vshrl.u32 %v741, 7
    %v743 = vsub.s32 %v740, %v742
    %v744 = vrot.slane %v663, %v743
    %v746 = vunpack.c.l.s4 1983009808
    %v747 = vunpack.c.0.s8 %v746
    %v748 = vlaneseq
    %v749 = vshrl.u32 %v748, 7
    %v750 = vsub.s32 %v747, %v749
    %v751 = vrot.slane %v737, %v750
    %v752 = vcombine.high %v744, %v744
    %v753 = vcombine.high %v751, %v751
    %v754 = vcombine.high %v664, %v664
    %v756 = vunpack.c.l.s4 1983009808
    %v757 = vunpack.c.0.s8 %v756
    %v758 = vlaneseq
    %v759 = vshrl.u32 %v758, 7
    %v760 = vsub.s32 %v757, %v759
    %v761 = vrot.slane %v664, %v760
    %v763 = vunpack.c.l.s4 1983009808
    %v764 = vunpack.c.0.s8 %v763
    %v765 = vlaneseq
    %v766 = vshrl.u32 %v765, 7
    %v767 = vsub.s32 %v764, %v766
    %v768 = vrot.slane %v754, %v767
    %v769 = vcombine.high %v761, %v761
    %v770 = vcombine.high %v768, %v768
    %v771 = vcombine.high %v665, %v665
    %v773 = vunpack.c.l.s4 1983009808
    %v774 = vunpack.c.0.s8 %v773
    %v775 = vlaneseq
    %v776 = vshrl.u32 %v775, 7
    %v777 = vsub.s32 %v774, %v776
    %v778 = vrot.slane %v665, %v777
    %v780 = vunpack.c.l.s4 1983009808
    %v781 = vunpack.c.0.s8 %v780
    %v782 = vlaneseq
    %v783 = vshrl.u32 %v782, 7
    %v784 = vsub.s32 %v781, %v783
    %v785 = vrot.slane %v771, %v784
    %v786 = vcombine.high %v778, %v778
    %v787 = vcombine.high %v785, %v785
    %v788 = vcombine.high %v666, %v666
    %v790 = vunpack.c.l.s4 1983009808
    %v791 = vunpack.c.0.s8 %v790
    %v792 = vlaneseq
    %v793 = vshrl.u32 %v792, 7
    %v794 = vsub.s32 %v791, %v793
    %v795 = vrot.slane %v666, %v794
    %v797 = vunpack.c.l.s4 1983009808
    %v798 = vunpack.c.0.s8 %v797
    %v799 = vlaneseq
    %v800 = vshrl.u32 %v799, 7
    %v801 = vsub.s32 %v798, %v800
    %v802 = vrot.slane %v788, %v801
    %v803 = vcombine.high %v795, %v795
    %v804 = vcombine.high %v802, %v802
    %v805 = vcombine.high %v667, %v667
    %v807 = vunpack.c.l.s4 1983009808
    %v808 = vunpack.c.0.s8 %v807
    %v809 = vlaneseq
    %v810 = vshrl.u32 %v809, 7
    %v811 = vsub.s32 %v808, %v810
    %v812 = vrot.slane %v667, %v811
    %v814 = vunpack.c.l.s4 1983009808
    %v815 = vunpack.c.0.s8 %v814
    %v816 = vlaneseq
    %v817 = vshrl.u32 %v816, 7
    %v818 = vsub.s32 %v815, %v817
    %v819 = vrot.slane %v805, %v818
    %v820 = vcombine.high %v812, %v812
    %v821 = vcombine.high %v819, %v819
    %v822 = vcombine.high %v668, %v668
    %v824 = vunpack.c.l.s4 1983009808
    %v825 = vunpack.c.0.s8 %v824
    %v826 = vlaneseq
    %v827 = vshrl.u32 %v826, 7
    %v828 = vsub.s32 %v825, %v827
    %v829 = vrot.slane %v668, %v828
    %v831 = vunpack.c.l.s4 1983009808
    %v832 = vunpack.c.0.s8 %v831
    %v833 = vlaneseq
    %v834 = vshrl.u32 %v833, 7
    %v835 = vsub.s32 %v832, %v834
    %v836 = vrot.slane %v822, %v835
    %v837 = vcombine.high %v829, %v829
    %v838 = vcombine.high %v836, %v836
    %v839 = vcombine.high %v669, %v669
    %v841 = vunpack.c.l.s4 1983009808
    %v842 = vunpack.c.0.s8 %v841
    %v843 = vlaneseq
    %v844 = vshrl.u32 %v843, 7
    %v845 = vsub.s32 %v842, %v844
    %v846 = vrot.slane %v669, %v845
    %v848 = vunpack.c.l.s4 1983009808
    %v849 = vunpack.c.0.s8 %v848
    %v850 = vlaneseq
    %v851 = vshrl.u32 %v850, 7
    %v852 = vsub.s32 %v849, %v851
    %v853 = vrot.slane %v839, %v852
    %v854 = vcombine.high %v846, %v846
    %v855 = vcombine.high %v853, %v853
    %v856 = vcombine.high %v670, %v670
    %v858 = vunpack.c.l.s4 1983009808
    %v859 = vunpack.c.0.s8 %v858
    %v860 = vlaneseq
    %v861 = vshrl.u32 %v860, 7
    %v862 = vsub.s32 %v859, %v861
    %v863 = vrot.slane %v670, %v862
    %v865 = vunpack.c.l.s4 1983009808
    %v866 = vunpack.c.0.s8 %v865
    %v867 = vlaneseq
    %v868 = vshrl.u32 %v867, 7
    %v869 = vsub.s32 %v866, %v868
    %v870 = vrot.slane %v856, %v869
    %v871 = vcombine.high %v863, %v863
    %v872 = vcombine.high %v870, %v870
    %v873 = vcombine.high %v671, %v671
    %v875 = vunpack.c.l.s4 1983009808
    %v876 = vunpack.c.0.s8 %v875
    %v877 = vlaneseq
    %v878 = vshrl.u32 %v877, 7
    %v879 = vsub.s32 %v876, %v878
    %v880 = vrot.slane %v671, %v879
    %v882 = vunpack.c.l.s4 1983009808
    %v883 = vunpack.c.0.s8 %v882
    %v884 = vlaneseq
    %v885 = vshrl.u32 %v884, 7
    %v886 = vsub.s32 %v883, %v885
    %v887 = vrot.slane %v873, %v886
    %v888 = vcombine.high %v880, %v880
    %v889 = vcombine.high %v887, %v887
    %v891 = vunpack.c.l.s4 1983009808
    %v892 = vunpack.c.0.s8 %v891
    %v893 = vlaneseq
    %v894 = vshrl.u32 %v893, 7
    %v895 = vsub.s32 %v892, %v894
    %v896 = vrot.slane %v672, %v895
    %v897 = vcombine.high %v896, %v896
    %v898 = vld [vmem:[%s9 + $0x1] sm:$0x1]
    %v899 = vld [vmem:[%s2] sm:$0xff]
    %v900 = vld [vmem:[%s2 + $0x8] sm:$0xff]
    %vm901 = vcmask 1040384
    %vm902 = vcmask 1042434
    %vm903 = vmor %vm901, %vm902
    %vm904 = vcmask 1044484
    %vm905 = vmor %vm903, %vm904
    %vm906 = vcmask 1046534
    %vm907 = vmor %vm905, %vm906
    %v908 = vrot.slane %v693, 7
    %v909 = vrot.slane %v908, 2
    %v910 = vrot.slane %v701, 7
    %v911 = vsel %vm907, %v909, %v910
    %v912 = vrot.slane %v910, 2
    %v913 = vrot.slane %v700, 7
    %v914 = vsel %vm907, %v912, %v913
    %v915 = vrot.slane %v913, 2
    %v916 = vrot.slane %v702, 7
    %v917 = vsel %vm907, %v915, %v916
    %v918 = vrot.slane %v916, 2
    %v919 = vrot.slane %v710, 7
    %v920 = vsel %vm907, %v918, %v919
    %v921 = vrot.slane %v919, 2
    %v922 = vrot.slane %v718, 7
    %v923 = vsel %vm907, %v921, %v922
    %v924 = vrot.slane %v922, 2
    %v925 = vrot.slane %v717, 7
    %v926 = vsel %vm907, %v924, %v925
    %v927 = vrot.slane %v925, 2
    %v928 = vrot.slane %v719, 7
    %v929 = vsel %vm907, %v927, %v928
    %v930 = vrot.slane %v928, 2
    %v931 = vrot.slane %v727, 7
    %v932 = vsel %vm907, %v930, %v931
    %v933 = vrot.slane %v931, 2
    %v934 = vrot.slane %v735, 7
    %v935 = vsel %vm907, %v933, %v934
    %v936 = vrot.slane %v934, 2
    %v937 = vrot.slane %v734, 7
    %v938 = vsel %vm907, %v936, %v937
    %v939 = vrot.slane %v937, 2
    %v940 = vrot.slane %v736, 7
    %v941 = vsel %vm907, %v939, %v940
    %v942 = vrot.slane %v940, 2
    %v943 = vrot.slane %v744, 7
    %v944 = vsel %vm907, %v942, %v943
    %v945 = vrot.slane %v943, 2
    %v946 = vrot.slane %v752, 7
    %v947 = vsel %vm907, %v945, %v946
    %v948 = vrot.slane %v946, 2
    %v949 = vrot.slane %v751, 7
    %v950 = vsel %vm907, %v948, %v949
    %v951 = vrot.slane %v949, 2
    %v952 = vrot.slane %v753, 7
    %v953 = vsel %vm907, %v951, %v952
    %v954 = vrot.slane %v952, 2
    %v955 = vrot.slane %v761, 7
    %v956 = vsel %vm907, %v954, %v955
    %v957 = vrot.slane %v955, 2
    %v958 = vrot.slane %v769, 7
    %v959 = vsel %vm907, %v957, %v958
    %v960 = vrot.slane %v958, 2
    %v961 = vrot.slane %v768, 7
    %v962 = vsel %vm907, %v960, %v961
    %v963 = vrot.slane %v961, 2
    %v964 = vrot.slane %v770, 7
    %v965 = vsel %vm907, %v963, %v964
    %v966 = vrot.slane %v964, 2
    %v967 = vrot.slane %v778, 7
    %v968 = vsel %vm907, %v966, %v967
    %v969 = vrot.slane %v967, 2
    %v970 = vrot.slane %v786, 7
    %v971 = vsel %vm907, %v969, %v970
    %v972 = vrot.slane %v970, 2
    %v973 = vrot.slane %v785, 7
    %v974 = vsel %vm907, %v972, %v973
    %v975 = vrot.slane %v973, 2
    %v976 = vrot.slane %v787, 7
    %v977 = vsel %vm907, %v975, %v976
    %v978 = vrot.slane %v976, 2
    %v979 = vrot.slane %v795, 7
    %v980 = vsel %vm907, %v978, %v979
    %v981 = vrot.slane %v803, 7
    %v982 = vrot.slane %v981, 2
    %v983 = vrot.slane %v802, 7
    %v984 = vsel %vm907, %v982, %v983
    %v985 = vrot.slane %v983, 2
    %v986 = vrot.slane %v804, 7
    %v987 = vsel %vm907, %v985, %v986
    %v988 = vrot.slane %v986, 2
    %v989 = vrot.slane %v812, 7
    %v990 = vsel %vm907, %v988, %v989
    %v991 = vrot.slane %v989, 2
    %v992 = vrot.slane %v820, 7
    %v993 = vsel %vm907, %v991, %v992
    %v994 = vrot.slane %v992, 2
    %v995 = vrot.slane %v819, 7
    %v996 = vsel %vm907, %v994, %v995
    %v997 = vrot.slane %v995, 2
    %v998 = vrot.slane %v821, 7
    %v999 = vsel %vm907, %v997, %v998
    %v1000 = vrot.slane %v998, 2
    %v1001 = vrot.slane %v829, 7
    %v1002 = vsel %vm907, %v1000, %v1001
    %v1003 = vrot.slane %v1001, 2
    %v1004 = vrot.slane %v837, 7
    %v1005 = vsel %vm907, %v1003, %v1004
    %v1006 = vrot.slane %v1004, 2
    %v1007 = vrot.slane %v836, 7
    %v1008 = vsel %vm907, %v1006, %v1007
    %v1009 = vrot.slane %v1007, 2
    %v1010 = vrot.slane %v838, 7
    %v1011 = vsel %vm907, %v1009, %v1010
    %v1012 = vrot.slane %v1010, 2
    %v1013 = vrot.slane %v846, 7
    %v1014 = vsel %vm907, %v1012, %v1013
    %v1015 = vrot.slane %v1013, 2
    %v1016 = vrot.slane %v854, 7
    %v1017 = vsel %vm907, %v1015, %v1016
    %v1018 = vrot.slane %v1016, 2
    %v1019 = vrot.slane %v853, 7
    %v1020 = vsel %vm907, %v1018, %v1019
    %v1021 = vrot.slane %v1019, 2
    %v1022 = vrot.slane %v855, 7
    %v1023 = vsel %vm907, %v1021, %v1022
    %v1024 = vrot.slane %v1022, 2
    %v1025 = vrot.slane %v863, 7
    %v1026 = vsel %vm907, %v1024, %v1025
    %v1027 = vrot.slane %v1025, 2
    %v1028 = vrot.slane %v871, 7
    %v1029 = vsel %vm907, %v1027, %v1028
    %v1030 = vrot.slane %v1028, 2
    %v1031 = vrot.slane %v870, 7
    %v1032 = vsel %vm907, %v1030, %v1031
    %v1033 = vrot.slane %v1031, 2
    %v1034 = vrot.slane %v872, 7
    %v1035 = vsel %vm907, %v1033, %v1034
    %v1036 = vrot.slane %v1034, 2
    %v1037 = vrot.slane %v880, 7
    %v1038 = vsel %vm907, %v1036, %v1037
    %v1039 = vrot.slane %v1037, 2
    %v1040 = vrot.slane %v888, 7
    %v1041 = vsel %vm907, %v1039, %v1040
    %v1042 = vrot.slane %v1040, 2
    %v1043 = vrot.slane %v887, 7
    %v1044 = vsel %vm907, %v1042, %v1043
    %v1045 = vrot.slane %v1043, 2
    %v1046 = vrot.slane %v889, 7
    %v1047 = vsel %vm907, %v1045, %v1046
    %v1048 = vrot.slane %v1046, 2
    %v1049 = vrot.slane %v896, 7
    %v1050 = vsel %vm907, %v1048, %v1049
    %v1051 = vrot.slane %v1049, 2
    %v1052 = vrot.slane %v897, 7
    %v1053 = vsel %vm907, %v1051, %v1052
    %s1054 = scalar_lea.vmem %s2, 16
    %v1055 = vld [vmem:[%s1054] sm:$0xff]
    %v1056 = vld [vmem:[%s1054 + $0x8] sm:$0xff]
    %v1057 = vcombine.low %v911, %v914
    %v1058 = vcombine.low %v917, %v920
    %v1060 = vunpack.c.l.s4 1983009808
    %v1061 = vunpack.c.0.s8 %v1060
    %v1062 = vlaneseq
    %v1063 = vshrl.u32 %v1062, 7
    %v1064 = vsub.s32 %v1061, %v1063
    %v1065 = vrot.slane %v1057, %v1064
    %v1067 = vunpack.c.l.s4 1983009808
    %v1068 = vunpack.c.0.s8 %v1067
    %v1069 = vlaneseq
    %v1070 = vshrl.u32 %v1069, 7
    %v1071 = vsub.s32 %v1068, %v1070
    %v1072 = vrot.slane %v1058, %v1071
    %v1073 = vcombine.low %v1065, %v1072
    %v1074 = vcombine.low %v923, %v926
    %v1075 = vcombine.low %v929, %v932
    %v1077 = vunpack.c.l.s4 1983009808
    %v1078 = vunpack.c.0.s8 %v1077
    %v1079 = vlaneseq
    %v1080 = vshrl.u32 %v1079, 7
    %v1081 = vsub.s32 %v1078, %v1080
    %v1082 = vrot.slane %v1074, %v1081
    %v1084 = vunpack.c.l.s4 1983009808
    %v1085 = vunpack.c.0.s8 %v1084
    %v1086 = vlaneseq
    %v1087 = vshrl.u32 %v1086, 7
    %v1088 = vsub.s32 %v1085, %v1087
    %v1089 = vrot.slane %v1075, %v1088
    %v1090 = vcombine.low %v1082, %v1089
    %v1091 = vcombine.low %v935, %v938
    %v1092 = vcombine.low %v941, %v944
    %v1094 = vunpack.c.l.s4 1983009808
    %v1095 = vunpack.c.0.s8 %v1094
    %v1096 = vlaneseq
    %v1097 = vshrl.u32 %v1096, 7
    %v1098 = vsub.s32 %v1095, %v1097
    %v1099 = vrot.slane %v1091, %v1098
    %v1101 = vunpack.c.l.s4 1983009808
    %v1102 = vunpack.c.0.s8 %v1101
    %v1103 = vlaneseq
    %v1104 = vshrl.u32 %v1103, 7
    %v1105 = vsub.s32 %v1102, %v1104
    %v1106 = vrot.slane %v1092, %v1105
    %v1107 = vcombine.low %v1099, %v1106
    %v1108 = vcombine.low %v947, %v950
    %v1109 = vcombine.low %v953, %v956
    %v1111 = vunpack.c.l.s4 1983009808
    %v1112 = vunpack.c.0.s8 %v1111
    %v1113 = vlaneseq
    %v1114 = vshrl.u32 %v1113, 7
    %v1115 = vsub.s32 %v1112, %v1114
    %v1116 = vrot.slane %v1108, %v1115
    %v1118 = vunpack.c.l.s4 1983009808
    %v1119 = vunpack.c.0.s8 %v1118
    %v1120 = vlaneseq
    %v1121 = vshrl.u32 %v1120, 7
    %v1122 = vsub.s32 %v1119, %v1121
    %v1123 = vrot.slane %v1109, %v1122
    %v1124 = vcombine.low %v1116, %v1123
    %v1125 = vcombine.low %v959, %v962
    %v1126 = vcombine.low %v965, %v968
    %v1128 = vunpack.c.l.s4 1983009808
    %v1129 = vunpack.c.0.s8 %v1128
    %v1130 = vlaneseq
    %v1131 = vshrl.u32 %v1130, 7
    %v1132 = vsub.s32 %v1129, %v1131
    %v1133 = vrot.slane %v1125, %v1132
    %v1135 = vunpack.c.l.s4 1983009808
    %v1136 = vunpack.c.0.s8 %v1135
    %v1137 = vlaneseq
    %v1138 = vshrl.u32 %v1137, 7
    %v1139 = vsub.s32 %v1136, %v1138
    %v1140 = vrot.slane %v1126, %v1139
    %v1141 = vcombine.low %v1133, %v1140
    %v1142 = vcombine.low %v971, %v974
    %v1143 = vcombine.low %v977, %v980
    %v1145 = vunpack.c.l.s4 1983009808
    %v1146 = vunpack.c.0.s8 %v1145
    %v1147 = vlaneseq
    %v1148 = vshrl.u32 %v1147, 7
    %v1149 = vsub.s32 %v1146, %v1148
    %v1150 = vrot.slane %v1142, %v1149
    %v1152 = vunpack.c.l.s4 1983009808
    %v1153 = vunpack.c.0.s8 %v1152
    %v1154 = vlaneseq
    %v1155 = vshrl.u32 %v1154, 7
    %v1156 = vsub.s32 %v1153, %v1155
    %v1157 = vrot.slane %v1143, %v1156
    %v1158 = vcombine.low %v1150, %v1157
    %v1159 = vcombine.low %v984, %v987
    %v1160 = vcombine.low %v990, %v993
    %v1162 = vunpack.c.l.s4 1983009808
    %v1163 = vunpack.c.0.s8 %v1162
    %v1164 = vlaneseq
    %v1165 = vshrl.u32 %v1164, 7
    %v1166 = vsub.s32 %v1163, %v1165
    %v1167 = vrot.slane %v1159, %v1166
    %v1169 = vunpack.c.l.s4 1983009808
    %v1170 = vunpack.c.0.s8 %v1169
    %v1171 = vlaneseq
    %v1172 = vshrl.u32 %v1171, 7
    %v1173 = vsub.s32 %v1170, %v1172
    %v1174 = vrot.slane %v1160, %v1173
    %v1175 = vcombine.low %v1167, %v1174
    %v1176 = vcombine.low %v996, %v999
    %v1177 = vcombine.low %v1002, %v1005
    %v1179 = vunpack.c.l.s4 1983009808
    %v1180 = vunpack.c.0.s8 %v1179
    %v1181 = vlaneseq
    %v1182 = vshrl.u32 %v1181, 7
    %v1183 = vsub.s32 %v1180, %v1182
    %v1184 = vrot.slane %v1176, %v1183
    %v1186 = vunpack.c.l.s4 1983009808
    %v1187 = vunpack.c.0.s8 %v1186
    %v1188 = vlaneseq
    %v1189 = vshrl.u32 %v1188, 7
    %v1190 = vsub.s32 %v1187, %v1189
    %v1191 = vrot.slane %v1177, %v1190
    %v1192 = vcombine.low %v1184, %v1191
    %v1193 = vcombine.low %v1008, %v1011
    %v1194 = vcombine.low %v1014, %v1017
    %v1196 = vunpack.c.l.s4 1983009808
    %v1197 = vunpack.c.0.s8 %v1196
    %v1198 = vlaneseq
    %v1199 = vshrl.u32 %v1198, 7
    %v1200 = vsub.s32 %v1197, %v1199
    %v1201 = vrot.slane %v1193, %v1200
    %v1203 = vunpack.c.l.s4 1983009808
    %v1204 = vunpack.c.0.s8 %v1203
    %v1205 = vlaneseq
    %v1206 = vshrl.u32 %v1205, 7
    %v1207 = vsub.s32 %v1204, %v1206
    %v1208 = vrot.slane %v1194, %v1207
    %v1209 = vcombine.low %v1201, %v1208
    %v1210 = vcombine.low %v1020, %v1023
    %v1211 = vcombine.low %v1026, %v1029
    %v1213 = vunpack.c.l.s4 1983009808
    %v1214 = vunpack.c.0.s8 %v1213
    %v1215 = vlaneseq
    %v1216 = vshrl.u32 %v1215, 7
    %v1217 = vsub.s32 %v1214, %v1216
    %v1218 = vrot.slane %v1210, %v1217
    %v1220 = vunpack.c.l.s4 1983009808
    %v1221 = vunpack.c.0.s8 %v1220
    %v1222 = vlaneseq
    %v1223 = vshrl.u32 %v1222, 7
    %v1224 = vsub.s32 %v1221, %v1223
    %v1225 = vrot.slane %v1211, %v1224
    %v1226 = vcombine.low %v1218, %v1225
    %v1227 = vcombine.low %v1032, %v1035
    %v1228 = vcombine.low %v1038, %v1041
    %v1230 = vunpack.c.l.s4 1983009808
    %v1231 = vunpack.c.0.s8 %v1230
    %v1232 = vlaneseq
    %v1233 = vshrl.u32 %v1232, 7
    %v1234 = vsub.s32 %v1231, %v1233
    %v1235 = vrot.slane %v1227, %v1234
    %v1237 = vunpack.c.l.s4 1983009808
    %v1238 = vunpack.c.0.s8 %v1237
    %v1239 = vlaneseq
    %v1240 = vshrl.u32 %v1239, 7
    %v1241 = vsub.s32 %v1238, %v1240
    %v1242 = vrot.slane %v1228, %v1241
    %v1243 = vcombine.low %v1235, %v1242
    %v1244 = vcombine.low %v1044, %v1047
    %v1245 = vcombine.low %v1050, %v1053
    %v1247 = vunpack.c.l.s4 1983009808
    %v1248 = vunpack.c.0.s8 %v1247
    %v1249 = vlaneseq
    %v1250 = vshrl.u32 %v1249, 7
    %v1251 = vsub.s32 %v1248, %v1250
    %v1252 = vrot.slane %v1244, %v1251
    %v1254 = vunpack.c.l.s4 1983009808
    %v1255 = vunpack.c.0.s8 %v1254
    %v1256 = vlaneseq
    %v1257 = vshrl.u32 %v1256, 7
    %v1258 = vsub.s32 %v1255, %v1257
    %v1259 = vrot.slane %v1245, %v1258
    %v1260 = vcombine.low %v1252, %v1259
    %v1261 = vsel %vm503, %v1073, 0
    %v1263 = vsel %vm503, %v1090, 0
    %v1265 = vsel %vm503, %v1107, 0
    %v1267 = vsel %vm503, %v1124, 0
    %v1269 = vsel %vm503, %v1141, 0
    %v1271 = vsel %vm503, %v1158, 0
    %v1273 = vsel %vm503, %v1175, 0
    %v1275 = vsel %vm503, %v1192, 0
    %v1277 = vsel %vm503, %v1209, 0
    %v1279 = vsel %vm503, %v1226, 0
    %v1281 = vsel %vm503, %v1243, 0
    %v1283 = vsel %vm503, %v1260, 0
    %1285 = vmatprep.subr.mxu0 0.0
    %1286 = vmatpush1.msra.mxu0 0.0
    %1287 = vmatprep.subr.mxu0 0.0
    %1288 = vmatpush1.msra.mxu0 0.0
    %1289 = vmatprep.subr.mxu0 0.0
    %1290 = vmatpush1.msra.mxu0 0.0
    %1291 = vmatprep.subr.mxu0 0.0
    %1292 = vmatpush1.msra.mxu0 0.0
    %1293 = vmatprep.subr.mxu0 0.0
    %1294 = vmatpush1.msra.mxu0 0.0
    %1295 = vmatprep.subr.mxu0 0.0
    %1296 = vmatpush1.msra.mxu0 0.0
    %1297 = vmatprep.subr.mxu0 0.0
    %1298 = vmatpush1.msra.mxu0 0.0
    %1299 = vmatprep.subr.mxu0 0.0
    %1300 = vmatpush1.msra.mxu0 0.0
    %1301 = vmatprep.subr.mxu0 0.0
    %1302 = vmatpush1.msra.mxu0 0.0
    %1303 = vmatprep.subr.mxu0 0.0
    %1304 = vmatpush1.msra.mxu0 0.0
    %1305 = vmatprep.subr.mxu0 0.0
    %1306 = vmatpush1.msra.mxu0 0.0
    %1307 = vmatprep.subr.mxu0 0.0
    %1308 = vmatpush1.msra.mxu0 0.0
    %1309 = vmatprep.subr.mxu0 0.0
    %1310 = vmatpush1.msra.mxu0 0.0
    %1311 = vmatprep.subr.mxu0 0.0
    %1312 = vmatpush1.msra.mxu0 0.0
    %1313 = vmatprep.subr.mxu0 0.0
    %1314 = vmatpush1.msra.mxu0 %v1056
    %1315 = vmatprep.subr.mxu0 0.0
    %1316 = vmatpush1.msra.mxu0 %v1055
    %1317 = vmatprep.subr.mxu0 0.0
    %1318 = vmatpush2.msra.mxu0 0.0
    %1319 = vmatprep.subr.mxu0 0.0
    %1320 = vmatpush2.msra.mxu0 0.0
    %1321 = vmatprep.subr.mxu0 0.0
    %1322 = vmatpush2.msra.mxu0 0.0
    %1323 = vmatprep.subr.mxu0 0.0
    %1324 = vmatpush2.msra.mxu0 0.0
    %1325 = vmatprep.subr.mxu0 0.0
    %1326 = vmatpush2.msra.mxu0 0.0
    %1327 = vmatprep.subr.mxu0 0.0
    %1328 = vmatpush2.msra.mxu0 0.0
    %1329 = vmatprep.subr.mxu0 0.0
    %1330 = vmatpush2.msra.mxu0 0.0
    %1331 = vmatprep.subr.mxu0 0.0
    %1332 = vmatpush2.msra.mxu0 0.0
    %1333 = vmatprep.subr.mxu0 0.0
    %1334 = vmatpush2.msra.mxu0 0.0
    %1335 = vmatprep.subr.mxu0 0.0
    %1336 = vmatpush2.msra.mxu0 0.0
    %1337 = vmatprep.subr.mxu0 0.0
    %1338 = vmatpush2.msra.mxu0 0.0
    %1339 = vmatprep.subr.mxu0 0.0
    %1340 = vmatpush2.msra.mxu0 0.0
    %1341 = vmatprep.subr.mxu0 0.0
    %1342 = vmatpush2.msra.mxu0 0.0
    %1343 = vmatprep.subr.mxu0 0.0
    %1344 = vmatpush2.msra.mxu0 0.0
    %1345 = vmatprep.subr.mxu0 0.0
    %1346 = vmatpush2.msra.mxu0 0.0
    %1347 = vmatprep.subr.mxu0 0.0
    %1348 = vmatpush2.msra.mxu0 0.0
    %1349 = vmatprep.mubr.f32.mxu0 0.0
    %1350 = vmatmul.mubr.f32.gmra.mxu0 %v1261
    %v1351 = vpop.f32.mrf.mxu0
    %v1352 = vadd.f32 0.0, %v1351
    %v1353 = vpop.f32.mrf.mxu0
    %1354 = vmatprep.mubr.f32.mxu0 0.0
    %1355 = vmatmul.mubr.f32.gmra.mxu0 %v1263
    %v1356 = vpop.f32.mrf.mxu0
    %v1357 = vadd.f32 0.0, %v1356
    %v1358 = vpop.f32.mrf.mxu0
    %1359 = vmatprep.mubr.f32.mxu0 0.0
    %1360 = vmatmul.mubr.f32.gmra.mxu0 %v1265
    %v1361 = vpop.f32.mrf.mxu0
    %v1362 = vadd.f32 0.0, %v1361
    %v1363 = vpop.f32.mrf.mxu0
    %1364 = vmatprep.mubr.f32.mxu0 0.0
    %1365 = vmatmul.mubr.f32.gmra.mxu0 %v1267
    %v1366 = vpop.f32.mrf.mxu0
    %v1367 = vadd.f32 0.0, %v1366
    %v1368 = vpop.f32.mrf.mxu0
    %1369 = vmatprep.mubr.f32.mxu0 0.0
    %1370 = vmatmul.mubr.f32.gmra.mxu0 %v1269
    %v1371 = vpop.f32.mrf.mxu0
    %v1372 = vadd.f32 0.0, %v1371
    %v1373 = vpop.f32.mrf.mxu0
    %1374 = vmatprep.mubr.f32.mxu0 0.0
    %1375 = vmatmul.mubr.f32.gmra.mxu0 %v1271
    %v1376 = vpop.f32.mrf.mxu0
    %v1377 = vadd.f32 0.0, %v1376
    %v1378 = vpop.f32.mrf.mxu0
    %1379 = vmatprep.mubr.f32.mxu0 0.0
    %1380 = vmatmul.mubr.f32.gmra.mxu0 %v1273
    %v1381 = vpop.f32.mrf.mxu0
    %v1382 = vadd.f32 0.0, %v1381
    %v1383 = vpop.f32.mrf.mxu0
    %1384 = vmatprep.mubr.f32.mxu0 0.0
    %1385 = vmatmul.mubr.f32.gmra.mxu0 %v1275
    %v1386 = vpop.f32.mrf.mxu0
    %v1387 = vadd.f32 0.0, %v1386
    %v1388 = vpop.f32.mrf.mxu0
    %1389 = vmatprep.mubr.f32.mxu0 0.0
    %1390 = vmatmul.mubr.f32.gmra.mxu0 %v1277
    %v1391 = vpop.f32.mrf.mxu0
    %v1392 = vadd.f32 0.0, %v1391
    %v1393 = vpop.f32.mrf.mxu0
    %1394 = vmatprep.mubr.f32.mxu0 0.0
    %1395 = vmatmul.mubr.f32.gmra.mxu0 %v1279
    %v1396 = vpop.f32.mrf.mxu0
    %v1397 = vadd.f32 0.0, %v1396
    %v1398 = vpop.f32.mrf.mxu0
    %1399 = vmatprep.mubr.f32.mxu0 0.0
    %1400 = vmatmul.mubr.f32.gmra.mxu0 %v1281
    %v1401 = vpop.f32.mrf.mxu0
    %v1402 = vadd.f32 0.0, %v1401
    %v1403 = vpop.f32.mrf.mxu0
    %1404 = vmatprep.mubr.f32.mxu0 0.0
    %1405 = vmatmul.mubr.f32.gmra.mxu0 %v1283
    %v1406 = vpop.f32.mrf.mxu0
    %v1407 = vadd.f32 0.0, %v1406
    %v1408 = vpop.f32.mrf.mxu0
    %1409 = vdwg.mxu0
    %v1410 = vcombine.low %v693, %v701
    %v1411 = vcombine.low %v700, %v702
    %v1413 = vunpack.c.l.s4 1983009808
    %v1414 = vunpack.c.0.s8 %v1413
    %v1415 = vlaneseq
    %v1416 = vshrl.u32 %v1415, 7
    %v1417 = vsub.s32 %v1414, %v1416
    %v1418 = vrot.slane %v1410, %v1417
    %v1420 = vunpack.c.l.s4 1983009808
    %v1421 = vunpack.c.0.s8 %v1420
    %v1422 = vlaneseq
    %v1423 = vshrl.u32 %v1422, 7
    %v1424 = vsub.s32 %v1421, %v1423
    %v1425 = vrot.slane %v1411, %v1424
    %v1426 = vcombine.low %v1418, %v1425
    %v1427 = vcombine.low %v710, %v718
    %v1428 = vcombine.low %v717, %v719
    %v1430 = vunpack.c.l.s4 1983009808
    %v1431 = vunpack.c.0.s8 %v1430
    %v1432 = vlaneseq
    %v1433 = vshrl.u32 %v1432, 7
    %v1434 = vsub.s32 %v1431, %v1433
    %v1435 = vrot.slane %v1427, %v1434
    %v1437 = vunpack.c.l.s4 1983009808
    %v1438 = vunpack.c.0.s8 %v1437
    %v1439 = vlaneseq
    %v1440 = vshrl.u32 %v1439, 7
    %v1441 = vsub.s32 %v1438, %v1440
    %v1442 = vrot.slane %v1428, %v1441
    %v1443 = vcombine.low %v1435, %v1442
    %v1444 = vcombine.low %v727, %v735
    %v1445 = vcombine.low %v734, %v736
    %v1447 = vunpack.c.l.s4 1983009808
    %v1448 = vunpack.c.0.s8 %v1447
    %v1449 = vlaneseq
    %v1450 = vshrl.u32 %v1449, 7
    %v1451 = vsub.s32 %v1448, %v1450
    %v1452 = vrot.slane %v1444, %v1451
    %v1454 = vunpack.c.l.s4 1983009808
    %v1455 = vunpack.c.0.s8 %v1454
    %v1456 = vlaneseq
    %v1457 = vshrl.u32 %v1456, 7
    %v1458 = vsub.s32 %v1455, %v1457
    %v1459 = vrot.slane %v1445, %v1458
    %v1460 = vcombine.low %v1452, %v1459
    %v1461 = vcombine.low %v744, %v752
    %v1462 = vcombine.low %v751, %v753
    %v1464 = vunpack.c.l.s4 1983009808
    %v1465 = vunpack.c.0.s8 %v1464
    %v1466 = vlaneseq
    %v1467 = vshrl.u32 %v1466, 7
    %v1468 = vsub.s32 %v1465, %v1467
    %v1469 = vrot.slane %v1461, %v1468
    %v1471 = vunpack.c.l.s4 1983009808
    %v1472 = vunpack.c.0.s8 %v1471
    %v1473 = vlaneseq
    %v1474 = vshrl.u32 %v1473, 7
    %v1475 = vsub.s32 %v1472, %v1474
    %v1476 = vrot.slane %v1462, %v1475
    %v1477 = vcombine.low %v1469, %v1476
    %v1478 = vcombine.low %v761, %v769
    %v1479 = vcombine.low %v768, %v770
    %v1481 = vunpack.c.l.s4 1983009808
    %v1482 = vunpack.c.0.s8 %v1481
    %v1483 = vlaneseq
    %v1484 = vshrl.u32 %v1483, 7
    %v1485 = vsub.s32 %v1482, %v1484
    %v1486 = vrot.slane %v1478, %v1485
    %v1488 = vunpack.c.l.s4 1983009808
    %v1489 = vunpack.c.0.s8 %v1488
    %v1490 = vlaneseq
    %v1491 = vshrl.u32 %v1490, 7
    %v1492 = vsub.s32 %v1489, %v1491
    %v1493 = vrot.slane %v1479, %v1492
    %v1494 = vcombine.low %v1486, %v1493
    %v1495 = vcombine.low %v778, %v786
    %v1496 = vcombine.low %v785, %v787
    %v1498 = vunpack.c.l.s4 1983009808
    %v1499 = vunpack.c.0.s8 %v1498
    %v1500 = vlaneseq
    %v1501 = vshrl.u32 %v1500, 7
    %v1502 = vsub.s32 %v1499, %v1501
    %v1503 = vrot.slane %v1495, %v1502
    %v1505 = vunpack.c.l.s4 1983009808
    %v1506 = vunpack.c.0.s8 %v1505
    %v1507 = vlaneseq
    %v1508 = vshrl.u32 %v1507, 7
    %v1509 = vsub.s32 %v1506, %v1508
    %v1510 = vrot.slane %v1496, %v1509
    %v1511 = vcombine.low %v1503, %v1510
    %v1512 = vcombine.low %v803, %v802
    %v1513 = vcombine.low %v804, %v812
    %v1515 = vunpack.c.l.s4 1983009808
    %v1516 = vunpack.c.0.s8 %v1515
    %v1517 = vlaneseq
    %v1518 = vshrl.u32 %v1517, 7
    %v1519 = vsub.s32 %v1516, %v1518
    %v1520 = vrot.slane %v1512, %v1519
    %v1522 = vunpack.c.l.s4 1983009808
    %v1523 = vunpack.c.0.s8 %v1522
    %v1524 = vlaneseq
    %v1525 = vshrl.u32 %v1524, 7
    %v1526 = vsub.s32 %v1523, %v1525
    %v1527 = vrot.slane %v1513, %v1526
    %v1528 = vcombine.low %v1520, %v1527
    %v1529 = vcombine.low %v820, %v819
    %v1530 = vcombine.low %v821, %v829
    %v1532 = vunpack.c.l.s4 1983009808
    %v1533 = vunpack.c.0.s8 %v1532
    %v1534 = vlaneseq
    %v1535 = vshrl.u32 %v1534, 7
    %v1536 = vsub.s32 %v1533, %v1535
    %v1537 = vrot.slane %v1529, %v1536
    %v1539 = vunpack.c.l.s4 1983009808
    %v1540 = vunpack.c.0.s8 %v1539
    %v1541 = vlaneseq
    %v1542 = vshrl.u32 %v1541, 7
    %v1543 = vsub.s32 %v1540, %v1542
    %v1544 = vrot.slane %v1530, %v1543
    %v1545 = vcombine.low %v1537, %v1544
    %v1546 = vcombine.low %v837, %v836
    %v1547 = vcombine.low %v838, %v846
    %v1549 = vunpack.c.l.s4 1983009808
    %v1550 = vunpack.c.0.s8 %v1549
    %v1551 = vlaneseq
    %v1552 = vshrl.u32 %v1551, 7
    %v1553 = vsub.s32 %v1550, %v1552
    %v1554 = vrot.slane %v1546, %v1553
    %v1556 = vunpack.c.l.s4 1983009808
    %v1557 = vunpack.c.0.s8 %v1556
    %v1558 = vlaneseq
    %v1559 = vshrl.u32 %v1558, 7
    %v1560 = vsub.s32 %v1557, %v1559
    %v1561 = vrot.slane %v1547, %v1560
    %v1562 = vcombine.low %v1554, %v1561
    %v1563 = vcombine.low %v854, %v853
    %v1564 = vcombine.low %v855, %v863
    %v1566 = vunpack.c.l.s4 1983009808
    %v1567 = vunpack.c.0.s8 %v1566
    %v1568 = vlaneseq
    %v1569 = vshrl.u32 %v1568, 7
    %v1570 = vsub.s32 %v1567, %v1569
    %v1571 = vrot.slane %v1563, %v1570
    %v1573 = vunpack.c.l.s4 1983009808
    %v1574 = vunpack.c.0.s8 %v1573
    %v1575 = vlaneseq
    %v1576 = vshrl.u32 %v1575, 7
    %v1577 = vsub.s32 %v1574, %v1576
    %v1578 = vrot.slane %v1564, %v1577
    %v1579 = vcombine.low %v1571, %v1578
    %v1580 = vcombine.low %v871, %v870
    %v1581 = vcombine.low %v872, %v880
    %v1583 = vunpack.c.l.s4 1983009808
    %v1584 = vunpack.c.0.s8 %v1583
    %v1585 = vlaneseq
    %v1586 = vshrl.u32 %v1585, 7
    %v1587 = vsub.s32 %v1584, %v1586
    %v1588 = vrot.slane %v1580, %v1587
    %v1590 = vunpack.c.l.s4 1983009808
    %v1591 = vunpack.c.0.s8 %v1590
    %v1592 = vlaneseq
    %v1593 = vshrl.u32 %v1592, 7
    %v1594 = vsub.s32 %v1591, %v1593
    %v1595 = vrot.slane %v1581, %v1594
    %v1596 = vcombine.low %v1588, %v1595
    %v1597 = vcombine.low %v888, %v887
    %v1598 = vcombine.low %v889, %v896
    %v1600 = vunpack.c.l.s4 1983009808
    %v1601 = vunpack.c.0.s8 %v1600
    %v1602 = vlaneseq
    %v1603 = vshrl.u32 %v1602, 7
    %v1604 = vsub.s32 %v1601, %v1603
    %v1605 = vrot.slane %v1597, %v1604
    %v1607 = vunpack.c.l.s4 1983009808
    %v1608 = vunpack.c.0.s8 %v1607
    %v1609 = vlaneseq
    %v1610 = vshrl.u32 %v1609, 7
    %v1611 = vsub.s32 %v1608, %v1610
    %v1612 = vrot.slane %v1598, %v1611
    %v1613 = vcombine.low %v1605, %v1612
    %v1614 = vsel %vm503, %v1426, 0
    %v1616 = vsel %vm503, %v1443, 0
    %v1618 = vsel %vm503, %v1460, 0
    %v1620 = vsel %vm503, %v1477, 0
    %v1622 = vsel %vm503, %v1494, 0
    %v1624 = vsel %vm503, %v1511, 0
    %v1626 = vsel %vm503, %v1528, 0
    %v1628 = vsel %vm503, %v1545, 0
    %v1630 = vsel %vm503, %v1562, 0
    %v1632 = vsel %vm503, %v1579, 0
    %v1634 = vsel %vm503, %v1596, 0
    %v1636 = vsel %vm503, %v1613, 0
    %1638 = vmatprep.subr.mxu0 0.0
    %1639 = vmatpush1.msra.mxu0 0.0
    %1640 = vmatprep.subr.mxu0 0.0
    %1641 = vmatpush1.msra.mxu0 0.0
    %1642 = vmatprep.subr.mxu0 0.0
    %1643 = vmatpush1.msra.mxu0 0.0
    %1644 = vmatprep.subr.mxu0 0.0
    %1645 = vmatpush1.msra.mxu0 0.0
    %1646 = vmatprep.subr.mxu0 0.0
    %1647 = vmatpush1.msra.mxu0 0.0
    %1648 = vmatprep.subr.mxu0 0.0
    %1649 = vmatpush1.msra.mxu0 0.0
    %1650 = vmatprep.subr.mxu0 0.0
    %1651 = vmatpush1.msra.mxu0 0.0
    %1652 = vmatprep.subr.mxu0 0.0
    %1653 = vmatpush1.msra.mxu0 0.0
    %1654 = vmatprep.subr.mxu0 0.0
    %1655 = vmatpush1.msra.mxu0 0.0
    %1656 = vmatprep.subr.mxu0 0.0
    %1657 = vmatpush1.msra.mxu0 0.0
    %1658 = vmatprep.subr.mxu0 0.0
    %1659 = vmatpush1.msra.mxu0 0.0
    %1660 = vmatprep.subr.mxu0 0.0
    %1661 = vmatpush1.msra.mxu0 0.0
    %1662 = vmatprep.subr.mxu0 0.0
    %1663 = vmatpush1.msra.mxu0 0.0
    %1664 = vmatprep.subr.mxu0 0.0
    %1665 = vmatpush1.msra.mxu0 0.0
    %1666 = vmatprep.subr.mxu0 0.0
    %1667 = vmatpush1.msra.mxu0 %v900
    %1668 = vmatprep.subr.mxu0 0.0
    %1669 = vmatpush1.msra.mxu0 %v899
    %1670 = vmatprep.subr.mxu0 0.0
    %1671 = vmatpush2.msra.mxu0 0.0
    %1672 = vmatprep.subr.mxu0 0.0
    %1673 = vmatpush2.msra.mxu0 0.0
    %1674 = vmatprep.subr.mxu0 0.0
    %1675 = vmatpush2.msra.mxu0 0.0
    %1676 = vmatprep.subr.mxu0 0.0
    %1677 = vmatpush2.msra.mxu0 0.0
    %1678 = vmatprep.subr.mxu0 0.0
    %1679 = vmatpush2.msra.mxu0 0.0
    %1680 = vmatprep.subr.mxu0 0.0
    %1681 = vmatpush2.msra.mxu0 0.0
    %1682 = vmatprep.subr.mxu0 0.0
    %1683 = vmatpush2.msra.mxu0 0.0
    %1684 = vmatprep.subr.mxu0 0.0
    %1685 = vmatpush2.msra.mxu0 0.0
    %1686 = vmatprep.subr.mxu0 0.0
    %1687 = vmatpush2.msra.mxu0 0.0
    %1688 = vmatprep.subr.mxu0 0.0
    %1689 = vmatpush2.msra.mxu0 0.0
    %1690 = vmatprep.subr.mxu0 0.0
    %1691 = vmatpush2.msra.mxu0 0.0
    %1692 = vmatprep.subr.mxu0 0.0
    %1693 = vmatpush2.msra.mxu0 0.0
    %1694 = vmatprep.subr.mxu0 0.0
    %1695 = vmatpush2.msra.mxu0 0.0
    %1696 = vmatprep.subr.mxu0 0.0
    %1697 = vmatpush2.msra.mxu0 0.0
    %1698 = vmatprep.subr.mxu0 0.0
    %1699 = vmatpush2.msra.mxu0 0.0
    %1700 = vmatprep.subr.mxu0 0.0
    %1701 = vmatpush2.msra.mxu0 0.0
    %1702 = vmatprep.mubr.f32.mxu0 0.0
    %1703 = vmatmul.mubr.f32.gmra.mxu0 %v1614
    %v1704 = vpop.f32.mrf.mxu0
    %v1705 = vadd.f32 %v1352, %v1704
    %v1706 = vpop.f32.mrf.mxu0
    %1707 = vmatprep.mubr.f32.mxu0 0.0
    %1708 = vmatmul.mubr.f32.gmra.mxu0 %v1616
    %v1709 = vpop.f32.mrf.mxu0
    %v1710 = vadd.f32 %v1357, %v1709
    %v1711 = vpop.f32.mrf.mxu0
    %1712 = vmatprep.mubr.f32.mxu0 0.0
    %1713 = vmatmul.mubr.f32.gmra.mxu0 %v1618
    %v1714 = vpop.f32.mrf.mxu0
    %v1715 = vadd.f32 %v1362, %v1714
    %v1716 = vpop.f32.mrf.mxu0
    %1717 = vmatprep.mubr.f32.mxu0 0.0
    %1718 = vmatmul.mubr.f32.gmra.mxu0 %v1620
    %v1719 = vpop.f32.mrf.mxu0
    %v1720 = vadd.f32 %v1367, %v1719
    %v1721 = vpop.f32.mrf.mxu0
    %1722 = vmatprep.mubr.f32.mxu0 0.0
    %1723 = vmatmul.mubr.f32.gmra.mxu0 %v1622
    %v1724 = vpop.f32.mrf.mxu0
    %v1725 = vadd.f32 %v1372, %v1724
    %v1726 = vpop.f32.mrf.mxu0
    %1727 = vmatprep.mubr.f32.mxu0 0.0
    %1728 = vmatmul.mubr.f32.gmra.mxu0 %v1624
    %v1729 = vpop.f32.mrf.mxu0
    %v1730 = vadd.f32 %v1377, %v1729
    %v1731 = vpop.f32.mrf.mxu0
    %1732 = vmatprep.mubr.f32.mxu0 0.0
    %1733 = vmatmul.mubr.f32.gmra.mxu0 %v1626
    %v1734 = vpop.f32.mrf.mxu0
    %v1735 = vadd.f32 %v1382, %v1734
    %v1736 = vpop.f32.mrf.mxu0
    %1737 = vmatprep.mubr.f32.mxu0 0.0
    %1738 = vmatmul.mubr.f32.gmra.mxu0 %v1628
    %v1739 = vpop.f32.mrf.mxu0
    %v1740 = vadd.f32 %v1387, %v1739
    %v1741 = vpop.f32.mrf.mxu0
    %1742 = vmatprep.mubr.f32.mxu0 0.0
    %1743 = vmatmul.mubr.f32.gmra.mxu0 %v1630
    %v1744 = vpop.f32.mrf.mxu0
    %v1745 = vadd.f32 %v1392, %v1744
    %v1746 = vpop.f32.mrf.mxu0
    %1747 = vmatprep.mubr.f32.mxu0 0.0
    %1748 = vmatmul.mubr.f32.gmra.mxu0 %v1632
    %v1749 = vpop.f32.mrf.mxu0
    %v1750 = vadd.f32 %v1397, %v1749
    %v1751 = vpop.f32.mrf.mxu0
    %1752 = vmatprep.mubr.f32.mxu0 0.0
    %1753 = vmatmul.mubr.f32.gmra.mxu0 %v1634
    %v1754 = vpop.f32.mrf.mxu0
    %v1755 = vadd.f32 %v1402, %v1754
    %v1756 = vpop.f32.mrf.mxu0
    %1757 = vmatprep.mubr.f32.mxu0 0.0
    %1758 = vmatmul.mubr.f32.gmra.mxu0 %v1636
    %v1759 = vpop.f32.mrf.mxu0
    %v1760 = vadd.f32 %v1407, %v1759
    %v1761 = vpop.f32.mrf.mxu0
    %1762 = vdwg.mxu0
    %s1763 = scalar_lea.vmem %s2, 32
    %v1764 = vld [vmem:[%s1763] sm:$0xff]
    %v1765 = vld [vmem:[%s1763 + $0x8] sm:$0xff]
    %v1766 = vcombine.low %v701, %v700
    %v1767 = vcombine.low %v702, %v710
    %v1769 = vunpack.c.l.s4 1983009808
    %v1770 = vunpack.c.0.s8 %v1769
    %v1771 = vlaneseq
    %v1772 = vshrl.u32 %v1771, 7
    %v1773 = vsub.s32 %v1770, %v1772
    %v1774 = vrot.slane %v1766, %v1773
    %v1776 = vunpack.c.l.s4 1983009808
    %v1777 = vunpack.c.0.s8 %v1776
    %v1778 = vlaneseq
    %v1779 = vshrl.u32 %v1778, 7
    %v1780 = vsub.s32 %v1777, %v1779
    %v1781 = vrot.slane %v1767, %v1780
    %v1782 = vcombine.low %v1774, %v1781
    %v1783 = vcombine.low %v718, %v717
    %v1784 = vcombine.low %v719, %v727
    %v1786 = vunpack.c.l.s4 1983009808
    %v1787 = vunpack.c.0.s8 %v1786
    %v1788 = vlaneseq
    %v1789 = vshrl.u32 %v1788, 7
    %v1790 = vsub.s32 %v1787, %v1789
    %v1791 = vrot.slane %v1783, %v1790
    %v1793 = vunpack.c.l.s4 1983009808
    %v1794 = vunpack.c.0.s8 %v1793
    %v1795 = vlaneseq
    %v1796 = vshrl.u32 %v1795, 7
    %v1797 = vsub.s32 %v1794, %v1796
    %v1798 = vrot.slane %v1784, %v1797
    %v1799 = vcombine.low %v1791, %v1798
    %v1800 = vcombine.low %v735, %v734
    %v1801 = vcombine.low %v736, %v744
    %v1803 = vunpack.c.l.s4 1983009808
    %v1804 = vunpack.c.0.s8 %v1803
    %v1805 = vlaneseq
    %v1806 = vshrl.u32 %v1805, 7
    %v1807 = vsub.s32 %v1804, %v1806
    %v1808 = vrot.slane %v1800, %v1807
    %v1810 = vunpack.c.l.s4 1983009808
    %v1811 = vunpack.c.0.s8 %v1810
    %v1812 = vlaneseq
    %v1813 = vshrl.u32 %v1812, 7
    %v1814 = vsub.s32 %v1811, %v1813
    %v1815 = vrot.slane %v1801, %v1814
    %v1816 = vcombine.low %v1808, %v1815
    %v1817 = vcombine.low %v752, %v751
    %v1818 = vcombine.low %v753, %v761
    %v1820 = vunpack.c.l.s4 1983009808
    %v1821 = vunpack.c.0.s8 %v1820
    %v1822 = vlaneseq
    %v1823 = vshrl.u32 %v1822, 7
    %v1824 = vsub.s32 %v1821, %v1823
    %v1825 = vrot.slane %v1817, %v1824
    %v1827 = vunpack.c.l.s4 1983009808
    %v1828 = vunpack.c.0.s8 %v1827
    %v1829 = vlaneseq
    %v1830 = vshrl.u32 %v1829, 7
    %v1831 = vsub.s32 %v1828, %v1830
    %v1832 = vrot.slane %v1818, %v1831
    %v1833 = vcombine.low %v1825, %v1832
    %v1834 = vcombine.low %v769, %v768
    %v1835 = vcombine.low %v770, %v778
    %v1837 = vunpack.c.l.s4 1983009808
    %v1838 = vunpack.c.0.s8 %v1837
    %v1839 = vlaneseq
    %v1840 = vshrl.u32 %v1839, 7
    %v1841 = vsub.s32 %v1838, %v1840
    %v1842 = vrot.slane %v1834, %v1841
    %v1844 = vunpack.c.l.s4 1983009808
    %v1845 = vunpack.c.0.s8 %v1844
    %v1846 = vlaneseq
    %v1847 = vshrl.u32 %v1846, 7
    %v1848 = vsub.s32 %v1845, %v1847
    %v1849 = vrot.slane %v1835, %v1848
    %v1850 = vcombine.low %v1842, %v1849
    %v1851 = vcombine.low %v786, %v785
    %v1852 = vcombine.low %v787, %v795
    %v1854 = vunpack.c.l.s4 1983009808
    %v1855 = vunpack.c.0.s8 %v1854
    %v1856 = vlaneseq
    %v1857 = vshrl.u32 %v1856, 7
    %v1858 = vsub.s32 %v1855, %v1857
    %v1859 = vrot.slane %v1851, %v1858
    %v1861 = vunpack.c.l.s4 1983009808
    %v1862 = vunpack.c.0.s8 %v1861
    %v1863 = vlaneseq
    %v1864 = vshrl.u32 %v1863, 7
    %v1865 = vsub.s32 %v1862, %v1864
    %v1866 = vrot.slane %v1852, %v1865
    %v1867 = vcombine.low %v1859, %v1866
    %v1868 = vcombine.low %v802, %v804
    %v1869 = vcombine.low %v812, %v820
    %v1871 = vunpack.c.l.s4 1983009808
    %v1872 = vunpack.c.0.s8 %v1871
    %v1873 = vlaneseq
    %v1874 = vshrl.u32 %v1873, 7
    %v1875 = vsub.s32 %v1872, %v1874
    %v1876 = vrot.slane %v1868, %v1875
    %v1878 = vunpack.c.l.s4 1983009808
    %v1879 = vunpack.c.0.s8 %v1878
    %v1880 = vlaneseq
    %v1881 = vshrl.u32 %v1880, 7
    %v1882 = vsub.s32 %v1879, %v1881
    %v1883 = vrot.slane %v1869, %v1882
    %v1884 = vcombine.low %v1876, %v1883
    %v1885 = vcombine.low %v819, %v821
    %v1886 = vcombine.low %v829, %v837
    %v1888 = vunpack.c.l.s4 1983009808
    %v1889 = vunpack.c.0.s8 %v1888
    %v1890 = vlaneseq
    %v1891 = vshrl.u32 %v1890, 7
    %v1892 = vsub.s32 %v1889, %v1891
    %v1893 = vrot.slane %v1885, %v1892
    %v1895 = vunpack.c.l.s4 1983009808
    %v1896 = vunpack.c.0.s8 %v1895
    %v1897 = vlaneseq
    %v1898 = vshrl.u32 %v1897, 7
    %v1899 = vsub.s32 %v1896, %v1898
    %v1900 = vrot.slane %v1886, %v1899
    %v1901 = vcombine.low %v1893, %v1900
    %v1902 = vcombine.low %v836, %v838
    %v1903 = vcombine.low %v846, %v854
    %v1905 = vunpack.c.l.s4 1983009808
    %v1906 = vunpack.c.0.s8 %v1905
    %v1907 = vlaneseq
    %v1908 = vshrl.u32 %v1907, 7
    %v1909 = vsub.s32 %v1906, %v1908
    %v1910 = vrot.slane %v1902, %v1909
    %v1912 = vunpack.c.l.s4 1983009808
    %v1913 = vunpack.c.0.s8 %v1912
    %v1914 = vlaneseq
    %v1915 = vshrl.u32 %v1914, 7
    %v1916 = vsub.s32 %v1913, %v1915
    %v1917 = vrot.slane %v1903, %v1916
    %v1918 = vcombine.low %v1910, %v1917
    %v1919 = vcombine.low %v853, %v855
    %v1920 = vcombine.low %v863, %v871
    %v1922 = vunpack.c.l.s4 1983009808
    %v1923 = vunpack.c.0.s8 %v1922
    %v1924 = vlaneseq
    %v1925 = vshrl.u32 %v1924, 7
    %v1926 = vsub.s32 %v1923, %v1925
    %v1927 = vrot.slane %v1919, %v1926
    %v1929 = vunpack.c.l.s4 1983009808
    %v1930 = vunpack.c.0.s8 %v1929
    %v1931 = vlaneseq
    %v1932 = vshrl.u32 %v1931, 7
    %v1933 = vsub.s32 %v1930, %v1932
    %v1934 = vrot.slane %v1920, %v1933
    %v1935 = vcombine.low %v1927, %v1934
    %v1936 = vcombine.low %v870, %v872
    %v1937 = vcombine.low %v880, %v888
    %v1939 = vunpack.c.l.s4 1983009808
    %v1940 = vunpack.c.0.s8 %v1939
    %v1941 = vlaneseq
    %v1942 = vshrl.u32 %v1941, 7
    %v1943 = vsub.s32 %v1940, %v1942
    %v1944 = vrot.slane %v1936, %v1943
    %v1946 = vunpack.c.l.s4 1983009808
    %v1947 = vunpack.c.0.s8 %v1946
    %v1948 = vlaneseq
    %v1949 = vshrl.u32 %v1948, 7
    %v1950 = vsub.s32 %v1947, %v1949
    %v1951 = vrot.slane %v1937, %v1950
    %v1952 = vcombine.low %v1944, %v1951
    %v1953 = vcombine.low %v887, %v889
    %v1954 = vcombine.low %v896, %v897
    %v1956 = vunpack.c.l.s4 1983009808
    %v1957 = vunpack.c.0.s8 %v1956
    %v1958 = vlaneseq
    %v1959 = vshrl.u32 %v1958, 7
    %v1960 = vsub.s32 %v1957, %v1959
    %v1961 = vrot.slane %v1953, %v1960
    %v1963 = vunpack.c.l.s4 1983009808
    %v1964 = vunpack.c.0.s8 %v1963
    %v1965 = vlaneseq
    %v1966 = vshrl.u32 %v1965, 7
    %v1967 = vsub.s32 %v1964, %v1966
    %v1968 = vrot.slane %v1954, %v1967
    %v1969 = vcombine.low %v1961, %v1968
    %v1970 = vsel %vm503, %v1782, 0
    %v1972 = vsel %vm503, %v1799, 0
    %v1974 = vsel %vm503, %v1816, 0
    %v1976 = vsel %vm503, %v1833, 0
    %v1978 = vsel %vm503, %v1850, 0
    %v1980 = vsel %vm503, %v1867, 0
    %v1982 = vsel %vm503, %v1884, 0
    %v1984 = vsel %vm503, %v1901, 0
    %v1986 = vsel %vm503, %v1918, 0
    %v1988 = vsel %vm503, %v1935, 0
    %v1990 = vsel %vm503, %v1952, 0
    %v1992 = vsel %vm503, %v1969, 0
    %1994 = vmatprep.subr.mxu0 0.0
    %1995 = vmatpush1.msra.mxu0 0.0
    %1996 = vmatprep.subr.mxu0 0.0
    %1997 = vmatpush1.msra.mxu0 0.0
    %1998 = vmatprep.subr.mxu0 0.0
    %1999 = vmatpush1.msra.mxu0 0.0
    %2000 = vmatprep.subr.mxu0 0.0
    %2001 = vmatpush1.msra.mxu0 0.0
    %2002 = vmatprep.subr.mxu0 0.0
    %2003 = vmatpush1.msra.mxu0 0.0
    %2004 = vmatprep.subr.mxu0 0.0
    %2005 = vmatpush1.msra.mxu0 0.0
    %2006 = vmatprep.subr.mxu0 0.0
    %2007 = vmatpush1.msra.mxu0 0.0
    %2008 = vmatprep.subr.mxu0 0.0
    %2009 = vmatpush1.msra.mxu0 0.0
    %2010 = vmatprep.subr.mxu0 0.0
    %2011 = vmatpush1.msra.mxu0 0.0
    %2012 = vmatprep.subr.mxu0 0.0
    %2013 = vmatpush1.msra.mxu0 0.0
    %2014 = vmatprep.subr.mxu0 0.0
    %2015 = vmatpush1.msra.mxu0 0.0
    %2016 = vmatprep.subr.mxu0 0.0
    %2017 = vmatpush1.msra.mxu0 0.0
    %2018 = vmatprep.subr.mxu0 0.0
    %2019 = vmatpush1.msra.mxu0 0.0
    %2020 = vmatprep.subr.mxu0 0.0
    %2021 = vmatpush1.msra.mxu0 0.0
    %2022 = vmatprep.subr.mxu0 0.0
    %2023 = vmatpush1.msra.mxu0 %v1765
    %2024 = vmatprep.subr.mxu0 0.0
    %2025 = vmatpush1.msra.mxu0 %v1764
    %2026 = vmatprep.subr.mxu0 0.0
    %2027 = vmatpush2.msra.mxu0 0.0
    %2028 = vmatprep.subr.mxu0 0.0
    %2029 = vmatpush2.msra.mxu0 0.0
    %2030 = vmatprep.subr.mxu0 0.0
    %2031 = vmatpush2.msra.mxu0 0.0
    %2032 = vmatprep.subr.mxu0 0.0
    %2033 = vmatpush2.msra.mxu0 0.0
    %2034 = vmatprep.subr.mxu0 0.0
    %2035 = vmatpush2.msra.mxu0 0.0
    %2036 = vmatprep.subr.mxu0 0.0
    %2037 = vmatpush2.msra.mxu0 0.0
    %2038 = vmatprep.subr.mxu0 0.0
    %2039 = vmatpush2.msra.mxu0 0.0
    %2040 = vmatprep.subr.mxu0 0.0
    %2041 = vmatpush2.msra.mxu0 0.0
    %2042 = vmatprep.subr.mxu0 0.0
    %2043 = vmatpush2.msra.mxu0 0.0
    %2044 = vmatprep.subr.mxu0 0.0
    %2045 = vmatpush2.msra.mxu0 0.0
    %2046 = vmatprep.subr.mxu0 0.0
    %2047 = vmatpush2.msra.mxu0 0.0
    %2048 = vmatprep.subr.mxu0 0.0
    %2049 = vmatpush2.msra.mxu0 0.0
    %2050 = vmatprep.subr.mxu0 0.0
    %2051 = vmatpush2.msra.mxu0 0.0
    %2052 = vmatprep.subr.mxu0 0.0
    %2053 = vmatpush2.msra.mxu0 0.0
    %2054 = vmatprep.subr.mxu0 0.0
    %2055 = vmatpush2.msra.mxu0 0.0
    %2056 = vmatprep.subr.mxu0 0.0
    %2057 = vmatpush2.msra.mxu0 0.0
    %2058 = vmatprep.mubr.f32.mxu0 0.0
    %2059 = vmatmul.mubr.f32.gmra.mxu0 %v1970
    %v2060 = vpop.f32.mrf.mxu0
    %v2061 = vadd.f32 0.0, %v2060
    %v2062 = vpop.f32.mrf.mxu0
    %2063 = vmatprep.mubr.f32.mxu0 0.0
    %2064 = vmatmul.mubr.f32.gmra.mxu0 %v1972
    %v2065 = vpop.f32.mrf.mxu0
    %v2066 = vadd.f32 0.0, %v2065
    %v2067 = vpop.f32.mrf.mxu0
    %2068 = vmatprep.mubr.f32.mxu0 0.0
    %2069 = vmatmul.mubr.f32.gmra.mxu0 %v1974
    %v2070 = vpop.f32.mrf.mxu0
    %v2071 = vadd.f32 0.0, %v2070
    %v2072 = vpop.f32.mrf.mxu0
    %2073 = vmatprep.mubr.f32.mxu0 0.0
    %2074 = vmatmul.mubr.f32.gmra.mxu0 %v1976
    %v2075 = vpop.f32.mrf.mxu0
    %v2076 = vadd.f32 0.0, %v2075
    %v2077 = vpop.f32.mrf.mxu0
    %2078 = vmatprep.mubr.f32.mxu0 0.0
    %2079 = vmatmul.mubr.f32.gmra.mxu0 %v1978
    %v2080 = vpop.f32.mrf.mxu0
    %v2081 = vadd.f32 0.0, %v2080
    %v2082 = vpop.f32.mrf.mxu0
    %2083 = vmatprep.mubr.f32.mxu0 0.0
    %2084 = vmatmul.mubr.f32.gmra.mxu0 %v1980
    %v2085 = vpop.f32.mrf.mxu0
    %v2086 = vadd.f32 0.0, %v2085
    %v2087 = vpop.f32.mrf.mxu0
    %2088 = vmatprep.mubr.f32.mxu0 0.0
    %2089 = vmatmul.mubr.f32.gmra.mxu0 %v1982
    %v2090 = vpop.f32.mrf.mxu0
    %v2091 = vadd.f32 0.0, %v2090
    %v2092 = vpop.f32.mrf.mxu0
    %2093 = vmatprep.mubr.f32.mxu0 0.0
    %2094 = vmatmul.mubr.f32.gmra.mxu0 %v1984
    %v2095 = vpop.f32.mrf.mxu0
    %v2096 = vadd.f32 0.0, %v2095
    %v2097 = vpop.f32.mrf.mxu0
    %2098 = vmatprep.mubr.f32.mxu0 0.0
    %2099 = vmatmul.mubr.f32.gmra.mxu0 %v1986
    %v2100 = vpop.f32.mrf.mxu0
    %v2101 = vadd.f32 0.0, %v2100
    %v2102 = vpop.f32.mrf.mxu0
    %2103 = vmatprep.mubr.f32.mxu0 0.0
    %2104 = vmatmul.mubr.f32.gmra.mxu0 %v1988
    %v2105 = vpop.f32.mrf.mxu0
    %v2106 = vadd.f32 0.0, %v2105
    %v2107 = vpop.f32.mrf.mxu0
    %2108 = vmatprep.mubr.f32.mxu0 0.0
    %2109 = vmatmul.mubr.f32.gmra.mxu0 %v1990
    %v2110 = vpop.f32.mrf.mxu0
    %v2111 = vadd.f32 0.0, %v2110
    %v2112 = vpop.f32.mrf.mxu0
    %2113 = vmatprep.mubr.f32.mxu0 0.0
    %2114 = vmatmul.mubr.f32.gmra.mxu0 %v1992
    %v2115 = vpop.f32.mrf.mxu0
    %v2116 = vadd.f32 0.0, %v2115
    %v2117 = vpop.f32.mrf.mxu0
    %2118 = vdwg.mxu0
    %v2119 = vadd.f32 %v1705, %v2061
    %v2120 = vadd.f32 %v1710, %v2066
    %v2121 = vadd.f32 %v1715, %v2071
    %v2122 = vadd.f32 %v1720, %v2076
    %v2123 = vadd.f32 %v1725, %v2081
    %v2124 = vadd.f32 %v1730, %v2086
    %v2125 = vadd.f32 %v1735, %v2091
    %v2126 = vadd.f32 %v1740, %v2096
    %v2127 = vadd.f32 %v1745, %v2101
    %v2128 = vadd.f32 %v1750, %v2106
    %v2129 = vadd.f32 %v1755, %v2111
    %v2130 = vadd.f32 %v1760, %v2116
    %v2132 = vlaneseq
    %v2133 = vshrl.u32 %v2132, 7
    %v2134 = vsub.s32 0, %v2133
    %v2135 = vrot.slane %v898, %v2134
    %v2137 = vadd.f32 %v2119, %v2135
    %v2138 = vadd.f32 %v2120, %v2135
    %v2139 = vadd.f32 %v2121, %v2135
    %v2140 = vadd.f32 %v2122, %v2135
    %v2141 = vadd.f32 %v2123, %v2135
    %v2142 = vadd.f32 %v2124, %v2135
    %v2143 = vadd.f32 %v2125, %v2135
    %v2144 = vadd.f32 %v2126, %v2135
    %v2145 = vadd.f32 %v2127, %v2135
    %v2146 = vadd.f32 %v2128, %v2135
    %v2147 = vadd.f32 %v2129, %v2135
    %v2148 = vadd.f32 %v2130, %v2135
    %v2149 = vmax.f32 %v2137, 0.0
    %v2150 = vmax.f32 %v2138, 0.0
    %v2151 = vmax.f32 %v2139, 0.0
    %v2152 = vmax.f32 %v2140, 0.0
    %v2153 = vmax.f32 %v2141, 0.0
    %v2154 = vmax.f32 %v2142, 0.0
    %v2155 = vmax.f32 %v2143, 0.0
    %v2156 = vmax.f32 %v2144, 0.0
    %v2157 = vmax.f32 %v2145, 0.0
    %v2158 = vmax.f32 %v2146, 0.0
    %v2159 = vmax.f32 %v2147, 0.0
    %v2160 = vmax.f32 %v2148, 0.0
    %v2173 = vcombine.high %v2149, %v2149
    %v2175 = vunpack.c.l.s4 1983009808
    %v2176 = vunpack.c.0.s8 %v2175
    %v2177 = vlaneseq
    %v2178 = vshrl.u32 %v2177, 7
    %v2179 = vsub.s32 %v2176, %v2178
    %v2180 = vrot.slane %v2149, %v2179
    %v2182 = vunpack.c.l.s4 1983009808
    %v2183 = vunpack.c.0.s8 %v2182
    %v2184 = vlaneseq
    %v2185 = vshrl.u32 %v2184, 7
    %v2186 = vsub.s32 %v2183, %v2185
    %v2187 = vrot.slane %v2173, %v2186
    %v2188 = vcombine.high %v2180, %v2180
    %v2189 = vcombine.high %v2187, %v2187
    %v2190 = vcombine.high %v2150, %v2150
    %v2192 = vunpack.c.l.s4 1983009808
    %v2193 = vunpack.c.0.s8 %v2192
    %v2194 = vlaneseq
    %v2195 = vshrl.u32 %v2194, 7
    %v2196 = vsub.s32 %v2193, %v2195
    %v2197 = vrot.slane %v2150, %v2196
    %v2199 = vunpack.c.l.s4 1983009808
    %v2200 = vunpack.c.0.s8 %v2199
    %v2201 = vlaneseq
    %v2202 = vshrl.u32 %v2201, 7
    %v2203 = vsub.s32 %v2200, %v2202
    %v2204 = vrot.slane %v2190, %v2203
    %v2205 = vcombine.high %v2197, %v2197
    %v2206 = vcombine.high %v2204, %v2204
    %v2207 = vcombine.high %v2151, %v2151
    %v2209 = vunpack.c.l.s4 1983009808
    %v2210 = vunpack.c.0.s8 %v2209
    %v2211 = vlaneseq
    %v2212 = vshrl.u32 %v2211, 7
    %v2213 = vsub.s32 %v2210, %v2212
    %v2214 = vrot.slane %v2151, %v2213
    %v2216 = vunpack.c.l.s4 1983009808
    %v2217 = vunpack.c.0.s8 %v2216
    %v2218 = vlaneseq
    %v2219 = vshrl.u32 %v2218, 7
    %v2220 = vsub.s32 %v2217, %v2219
    %v2221 = vrot.slane %v2207, %v2220
    %v2222 = vcombine.high %v2214, %v2214
    %v2223 = vcombine.high %v2221, %v2221
    %v2224 = vcombine.high %v2152, %v2152
    %v2226 = vunpack.c.l.s4 1983009808
    %v2227 = vunpack.c.0.s8 %v2226
    %v2228 = vlaneseq
    %v2229 = vshrl.u32 %v2228, 7
    %v2230 = vsub.s32 %v2227, %v2229
    %v2231 = vrot.slane %v2152, %v2230
    %v2233 = vunpack.c.l.s4 1983009808
    %v2234 = vunpack.c.0.s8 %v2233
    %v2235 = vlaneseq
    %v2236 = vshrl.u32 %v2235, 7
    %v2237 = vsub.s32 %v2234, %v2236
    %v2238 = vrot.slane %v2224, %v2237
    %v2239 = vcombine.high %v2231, %v2231
    %v2240 = vcombine.high %v2238, %v2238
    %v2241 = vcombine.high %v2153, %v2153
    %v2243 = vunpack.c.l.s4 1983009808
    %v2244 = vunpack.c.0.s8 %v2243
    %v2245 = vlaneseq
    %v2246 = vshrl.u32 %v2245, 7
    %v2247 = vsub.s32 %v2244, %v2246
    %v2248 = vrot.slane %v2153, %v2247
    %v2250 = vunpack.c.l.s4 1983009808
    %v2251 = vunpack.c.0.s8 %v2250
    %v2252 = vlaneseq
    %v2253 = vshrl.u32 %v2252, 7
    %v2254 = vsub.s32 %v2251, %v2253
    %v2255 = vrot.slane %v2241, %v2254
    %v2256 = vcombine.high %v2248, %v2248
    %v2257 = vcombine.high %v2255, %v2255
    %v2258 = vcombine.high %v2154, %v2154
    %v2260 = vunpack.c.l.s4 1983009808
    %v2261 = vunpack.c.0.s8 %v2260
    %v2262 = vlaneseq
    %v2263 = vshrl.u32 %v2262, 7
    %v2264 = vsub.s32 %v2261, %v2263
    %v2265 = vrot.slane %v2154, %v2264
    %v2267 = vunpack.c.l.s4 1983009808
    %v2268 = vunpack.c.0.s8 %v2267
    %v2269 = vlaneseq
    %v2270 = vshrl.u32 %v2269, 7
    %v2271 = vsub.s32 %v2268, %v2270
    %v2272 = vrot.slane %v2258, %v2271
    %v2273 = vcombine.high %v2265, %v2265
    %v2274 = vcombine.high %v2272, %v2272
    %v2275 = vcombine.high %v2155, %v2155
    %v2277 = vunpack.c.l.s4 1983009808
    %v2278 = vunpack.c.0.s8 %v2277
    %v2279 = vlaneseq
    %v2280 = vshrl.u32 %v2279, 7
    %v2281 = vsub.s32 %v2278, %v2280
    %v2282 = vrot.slane %v2155, %v2281
    %v2284 = vunpack.c.l.s4 1983009808
    %v2285 = vunpack.c.0.s8 %v2284
    %v2286 = vlaneseq
    %v2287 = vshrl.u32 %v2286, 7
    %v2288 = vsub.s32 %v2285, %v2287
    %v2289 = vrot.slane %v2275, %v2288
    %v2290 = vcombine.high %v2282, %v2282
    %v2291 = vcombine.high %v2289, %v2289
    %v2292 = vcombine.high %v2156, %v2156
    %v2294 = vunpack.c.l.s4 1983009808
    %v2295 = vunpack.c.0.s8 %v2294
    %v2296 = vlaneseq
    %v2297 = vshrl.u32 %v2296, 7
    %v2298 = vsub.s32 %v2295, %v2297
    %v2299 = vrot.slane %v2156, %v2298
    %v2301 = vunpack.c.l.s4 1983009808
    %v2302 = vunpack.c.0.s8 %v2301
    %v2303 = vlaneseq
    %v2304 = vshrl.u32 %v2303, 7
    %v2305 = vsub.s32 %v2302, %v2304
    %v2306 = vrot.slane %v2292, %v2305
    %v2307 = vcombine.high %v2299, %v2299
    %v2308 = vcombine.high %v2306, %v2306
    %v2309 = vcombine.high %v2157, %v2157
    %v2311 = vunpack.c.l.s4 1983009808
    %v2312 = vunpack.c.0.s8 %v2311
    %v2313 = vlaneseq
    %v2314 = vshrl.u32 %v2313, 7
    %v2315 = vsub.s32 %v2312, %v2314
    %v2316 = vrot.slane %v2157, %v2315
    %v2318 = vunpack.c.l.s4 1983009808
    %v2319 = vunpack.c.0.s8 %v2318
    %v2320 = vlaneseq
    %v2321 = vshrl.u32 %v2320, 7
    %v2322 = vsub.s32 %v2319, %v2321
    %v2323 = vrot.slane %v2309, %v2322
    %v2324 = vcombine.high %v2316, %v2316
    %v2325 = vcombine.high %v2323, %v2323
    %v2326 = vcombine.high %v2158, %v2158
    %v2328 = vunpack.c.l.s4 1983009808
    %v2329 = vunpack.c.0.s8 %v2328
    %v2330 = vlaneseq
    %v2331 = vshrl.u32 %v2330, 7
    %v2332 = vsub.s32 %v2329, %v2331
    %v2333 = vrot.slane %v2158, %v2332
    %v2335 = vunpack.c.l.s4 1983009808
    %v2336 = vunpack.c.0.s8 %v2335
    %v2337 = vlaneseq
    %v2338 = vshrl.u32 %v2337, 7
    %v2339 = vsub.s32 %v2336, %v2338
    %v2340 = vrot.slane %v2326, %v2339
    %v2341 = vcombine.high %v2333, %v2333
    %v2342 = vcombine.high %v2340, %v2340
    %v2343 = vcombine.high %v2159, %v2159
    %v2345 = vunpack.c.l.s4 1983009808
    %v2346 = vunpack.c.0.s8 %v2345
    %v2347 = vlaneseq
    %v2348 = vshrl.u32 %v2347, 7
    %v2349 = vsub.s32 %v2346, %v2348
    %v2350 = vrot.slane %v2159, %v2349
    %v2352 = vunpack.c.l.s4 1983009808
    %v2353 = vunpack.c.0.s8 %v2352
    %v2354 = vlaneseq
    %v2355 = vshrl.u32 %v2354, 7
    %v2356 = vsub.s32 %v2353, %v2355
    %v2357 = vrot.slane %v2343, %v2356
    %v2358 = vcombine.high %v2350, %v2350
    %v2359 = vcombine.high %v2357, %v2357
    %v2360 = vcombine.high %v2160, %v2160
    %v2362 = vunpack.c.l.s4 1983009808
    %v2363 = vunpack.c.0.s8 %v2362
    %v2364 = vlaneseq
    %v2365 = vshrl.u32 %v2364, 7
    %v2366 = vsub.s32 %v2363, %v2365
    %v2367 = vrot.slane %v2160, %v2366
    %v2369 = vunpack.c.l.s4 1983009808
    %v2370 = vunpack.c.0.s8 %v2369
    %v2371 = vlaneseq
    %v2372 = vshrl.u32 %v2371, 7
    %v2373 = vsub.s32 %v2370, %v2372
    %v2374 = vrot.slane %v2360, %v2373
    %v2375 = vcombine.high %v2367, %v2367
    %v2376 = vcombine.high %v2374, %v2374
    %v2425 = vrot.slane %v2180, 7
    %v2426 = vrot.slane %v2425, 2
    %v2427 = vrot.slane %v2188, 7
    %v2428 = vrot.slane %v2427, 2
    %v2429 = vrot.slane %v2187, 7
    %v2430 = vrot.slane %v2429, 2
    %v2431 = vrot.slane %v2189, 7
    %v2432 = vrot.slane %v2431, 2
    %v2433 = vrot.slane %v2197, 7
    %v2434 = vrot.slane %v2433, 2
    %v2435 = vrot.slane %v2205, 7
    %v2436 = vrot.slane %v2435, 2
    %v2437 = vrot.slane %v2204, 7
    %v2438 = vrot.slane %v2437, 2
    %v2439 = vrot.slane %v2206, 7
    %v2440 = vrot.slane %v2439, 2
    %v2441 = vrot.slane %v2214, 7
    %v2442 = vrot.slane %v2441, 2
    %v2443 = vrot.slane %v2222, 7
    %v2444 = vrot.slane %v2443, 2
    %v2445 = vrot.slane %v2221, 7
    %v2446 = vrot.slane %v2445, 2
    %v2447 = vrot.slane %v2223, 7
    %v2448 = vrot.slane %v2447, 2
    %v2449 = vrot.slane %v2231, 7
    %v2450 = vrot.slane %v2449, 2
    %v2451 = vrot.slane %v2239, 7
    %v2452 = vrot.slane %v2451, 2
    %v2453 = vrot.slane %v2238, 7
    %v2454 = vrot.slane %v2453, 2
    %v2455 = vrot.slane %v2240, 7
    %v2456 = vrot.slane %v2455, 2
    %v2457 = vrot.slane %v2248, 7
    %v2458 = vrot.slane %v2457, 2
    %v2459 = vrot.slane %v2256, 7
    %v2460 = vrot.slane %v2459, 2
    %v2461 = vrot.slane %v2255, 7
    %v2462 = vrot.slane %v2461, 2
    %v2463 = vrot.slane %v2257, 7
    %v2464 = vrot.slane %v2463, 2
    %v2465 = vrot.slane %v2265, 7
    %v2466 = vrot.slane %v2465, 2
    %v2467 = vrot.slane %v2273, 7
    %v2468 = vrot.slane %v2467, 2
    %v2469 = vrot.slane %v2272, 7
    %v2470 = vrot.slane %v2469, 2
    %v2471 = vrot.slane %v2274, 7
    %v2472 = vrot.slane %v2471, 2
    %v2473 = vrot.slane %v2282, 7
    %v2474 = vrot.slane %v2473, 2
    %v2475 = vrot.slane %v2290, 7
    %v2476 = vrot.slane %v2475, 2
    %v2477 = vrot.slane %v2289, 7
    %v2478 = vrot.slane %v2477, 2
    %v2479 = vrot.slane %v2291, 7
    %v2480 = vrot.slane %v2479, 2
    %v2481 = vrot.slane %v2299, 7
    %v2482 = vrot.slane %v2481, 2
    %v2483 = vrot.slane %v2307, 7
    %v2484 = vrot.slane %v2483, 2
    %v2485 = vrot.slane %v2306, 7
    %v2486 = vrot.slane %v2485, 2
    %v2487 = vrot.slane %v2308, 7
    %v2488 = vrot.slane %v2487, 2
    %v2489 = vrot.slane %v2316, 7
    %v2490 = vrot.slane %v2489, 2
    %v2491 = vrot.slane %v2324, 7
    %v2492 = vrot.slane %v2491, 2
    %v2493 = vrot.slane %v2323, 7
    %v2494 = vrot.slane %v2493, 2
    %v2495 = vrot.slane %v2325, 7
    %v2496 = vrot.slane %v2495, 2
    %v2497 = vrot.slane %v2333, 7
    %v2498 = vrot.slane %v2497, 2
    %v2499 = vrot.slane %v2341, 7
    %v2500 = vrot.slane %v2499, 2
    %v2501 = vrot.slane %v2340, 7
    %v2502 = vrot.slane %v2501, 2
    %v2503 = vrot.slane %v2342, 7
    %v2504 = vrot.slane %v2503, 2
    %v2505 = vrot.slane %v2350, 7
    %v2506 = vrot.slane %v2505, 2
    %v2507 = vrot.slane %v2358, 7
    %v2508 = vrot.slane %v2507, 2
    %v2509 = vrot.slane %v2357, 7
    %v2510 = vrot.slane %v2509, 2
    %v2511 = vrot.slane %v2359, 7
    %v2512 = vrot.slane %v2511, 2
    %v2513 = vrot.slane %v2367, 7
    %v2514 = vrot.slane %v2513, 2
    %v2515 = vrot.slane %v2375, 7
    %v2516 = vrot.slane %v2515, 2
    %v2517 = vrot.slane %v2374, 7
    %v2518 = vrot.slane %v2517, 2
    %v2519 = vrot.slane %v2376, 7
    %v2520 = vrot.slane %v2519, 2
    %v2569 = vmax.f32 %v2180, %v2426
    %v2570 = vmax.f32 %v2188, %v2428
    %v2571 = vmax.f32 %v2187, %v2430
    %v2572 = vmax.f32 %v2189, %v2432
    %v2573 = vmax.f32 %v2197, %v2434
    %v2574 = vmax.f32 %v2205, %v2436
    %v2575 = vmax.f32 %v2204, %v2438
    %v2576 = vmax.f32 %v2206, %v2440
    %v2577 = vmax.f32 %v2214, %v2442
    %v2578 = vmax.f32 %v2222, %v2444
    %v2579 = vmax.f32 %v2221, %v2446
    %v2580 = vmax.f32 %v2223, %v2448
    %v2581 = vmax.f32 %v2231, %v2450
    %v2582 = vmax.f32 %v2239, %v2452
    %v2583 = vmax.f32 %v2238, %v2454
    %v2584 = vmax.f32 %v2240, %v2456
    %v2585 = vmax.f32 %v2248, %v2458
    %v2586 = vmax.f32 %v2256, %v2460
    %v2587 = vmax.f32 %v2255, %v2462
    %v2588 = vmax.f32 %v2257, %v2464
    %v2589 = vmax.f32 %v2265, %v2466
    %v2590 = vmax.f32 %v2273, %v2468
    %v2591 = vmax.f32 %v2272, %v2470
    %v2592 = vmax.f32 %v2274, %v2472
    %v2593 = vmax.f32 %v2282, %v2474
    %v2594 = vmax.f32 %v2290, %v2476
    %v2595 = vmax.f32 %v2289, %v2478
    %v2596 = vmax.f32 %v2291, %v2480
    %v2597 = vmax.f32 %v2299, %v2482
    %v2598 = vmax.f32 %v2307, %v2484
    %v2599 = vmax.f32 %v2306, %v2486
    %v2600 = vmax.f32 %v2308, %v2488
    %v2601 = vmax.f32 %v2316, %v2490
    %v2602 = vmax.f32 %v2324, %v2492
    %v2603 = vmax.f32 %v2323, %v2494
    %v2604 = vmax.f32 %v2325, %v2496
    %v2605 = vmax.f32 %v2333, %v2498
    %v2606 = vmax.f32 %v2341, %v2500
    %v2607 = vmax.f32 %v2340, %v2502
    %v2608 = vmax.f32 %v2342, %v2504
    %v2609 = vmax.f32 %v2350, %v2506
    %v2610 = vmax.f32 %v2358, %v2508
    %v2611 = vmax.f32 %v2357, %v2510
    %v2612 = vmax.f32 %v2359, %v2512
    %v2613 = vmax.f32 %v2367, %v2514
    %v2614 = vmax.f32 %v2375, %v2516
    %v2615 = vmax.f32 %v2374, %v2518
    %v2616 = vmax.f32 %v2376, %v2520
    %v2617 = vld [vmem:[%s9 + $0x2] sm:$0x1]
    %v2618 = vld [vmem:[%s3] sm:$0xff]
    %v2619 = vld [vmem:[%s3 + $0x8] sm:$0xff]
    %v2620 = vld [vmem:[%s3 + $0x10] sm:$0xff]
    %v2621 = vld [vmem:[%s3 + $0x18] sm:$0xff]
    %s2622 = scalar_lea.vmem %s3, 32
    %v2623 = vld [vmem:[%s2622] sm:$0xff]
    %v2624 = vld [vmem:[%s2622 + $0x8] sm:$0xff]
    %v2625 = vld [vmem:[%s2622 + $0x10] sm:$0xff]
    %v2626 = vld [vmem:[%s2622 + $0x18] sm:$0xff]
    %v2671 = vlaneseq
    %v2672 = vshrl.u32 %v2671, 7
    %v2673 = vsub.s32 0, %v2672
    %v2674 = vrot.slane %v2570, %v2673
    %v2675 = vlaneseq
    %v2676 = vshrl.u32 %v2675, 7
    %v2677 = vsub.s32 0, %v2676
    %v2678 = vrot.slane %v2571, %v2677
    %v2679 = vlaneseq
    %v2680 = vshrl.u32 %v2679, 7
    %v2681 = vsub.s32 0, %v2680
    %v2682 = vrot.slane %v2572, %v2681
    %v2683 = vlaneseq
    %v2684 = vshrl.u32 %v2683, 7
    %v2685 = vsub.s32 0, %v2684
    %v2686 = vrot.slane %v2573, %v2685
    %v2687 = vlaneseq
    %v2688 = vshrl.u32 %v2687, 7
    %v2689 = vsub.s32 0, %v2688
    %v2690 = vrot.slane %v2574, %v2689
    %v2691 = vlaneseq
    %v2692 = vshrl.u32 %v2691, 7
    %v2693 = vsub.s32 0, %v2692
    %v2694 = vrot.slane %v2575, %v2693
    %v2695 = vlaneseq
    %v2696 = vshrl.u32 %v2695, 7
    %v2697 = vsub.s32 0, %v2696
    %v2698 = vrot.slane %v2576, %v2697
    %v2699 = vlaneseq
    %v2700 = vshrl.u32 %v2699, 7
    %v2701 = vsub.s32 0, %v2700
    %v2702 = vrot.slane %v2577, %v2701
    %v2703 = vlaneseq
    %v2704 = vshrl.u32 %v2703, 7
    %v2705 = vsub.s32 0, %v2704
    %v2706 = vrot.slane %v2578, %v2705
    %v2707 = vlaneseq
    %v2708 = vshrl.u32 %v2707, 7
    %v2709 = vsub.s32 0, %v2708
    %v2710 = vrot.slane %v2579, %v2709
    %v2711 = vlaneseq
    %v2712 = vshrl.u32 %v2711, 7
    %v2713 = vsub.s32 0, %v2712
    %v2714 = vrot.slane %v2580, %v2713
    %v2715 = vlaneseq
    %v2716 = vshrl.u32 %v2715, 7
    %v2717 = vsub.s32 0, %v2716
    %v2718 = vrot.slane %v2581, %v2717
    %v2719 = vlaneseq
    %v2720 = vshrl.u32 %v2719, 7
    %v2721 = vsub.s32 0, %v2720
    %v2722 = vrot.slane %v2582, %v2721
    %v2723 = vlaneseq
    %v2724 = vshrl.u32 %v2723, 7
    %v2725 = vsub.s32 0, %v2724
    %v2726 = vrot.slane %v2583, %v2725
    %v2727 = vlaneseq
    %v2728 = vshrl.u32 %v2727, 7
    %v2729 = vsub.s32 0, %v2728
    %v2730 = vrot.slane %v2584, %v2729
    %v2731 = vlaneseq
    %v2732 = vshrl.u32 %v2731, 7
    %v2733 = vsub.s32 0, %v2732
    %v2734 = vrot.slane %v2585, %v2733
    %v2735 = vlaneseq
    %v2736 = vshrl.u32 %v2735, 7
    %v2737 = vsub.s32 0, %v2736
    %v2738 = vrot.slane %v2586, %v2737
    %v2739 = vlaneseq
    %v2740 = vshrl.u32 %v2739, 7
    %v2741 = vsub.s32 0, %v2740
    %v2742 = vrot.slane %v2587, %v2741
    %v2743 = vlaneseq
    %v2744 = vshrl.u32 %v2743, 7
    %v2745 = vsub.s32 0, %v2744
    %v2746 = vrot.slane %v2588, %v2745
    %v2747 = vlaneseq
    %v2748 = vshrl.u32 %v2747, 7
    %v2749 = vsub.s32 0, %v2748
    %v2750 = vrot.slane %v2589, %v2749
    %v2751 = vlaneseq
    %v2752 = vshrl.u32 %v2751, 7
    %v2753 = vsub.s32 0, %v2752
    %v2754 = vrot.slane %v2590, %v2753
    %v2755 = vlaneseq
    %v2756 = vshrl.u32 %v2755, 7
    %v2757 = vsub.s32 0, %v2756
    %v2758 = vrot.slane %v2591, %v2757
    %v2759 = vlaneseq
    %v2760 = vshrl.u32 %v2759, 7
    %v2761 = vsub.s32 0, %v2760
    %v2762 = vrot.slane %v2594, %v2761
    %v2763 = vlaneseq
    %v2764 = vshrl.u32 %v2763, 7
    %v2765 = vsub.s32 0, %v2764
    %v2766 = vrot.slane %v2595, %v2765
    %v2767 = vlaneseq
    %v2768 = vshrl.u32 %v2767, 7
    %v2769 = vsub.s32 0, %v2768
    %v2770 = vrot.slane %v2596, %v2769
    %v2771 = vlaneseq
    %v2772 = vshrl.u32 %v2771, 7
    %v2773 = vsub.s32 0, %v2772
    %v2774 = vrot.slane %v2597, %v2773
    %v2775 = vlaneseq
    %v2776 = vshrl.u32 %v2775, 7
    %v2777 = vsub.s32 0, %v2776
    %v2778 = vrot.slane %v2598, %v2777
    %v2779 = vlaneseq
    %v2780 = vshrl.u32 %v2779, 7
    %v2781 = vsub.s32 0, %v2780
    %v2782 = vrot.slane %v2599, %v2781
    %v2783 = vlaneseq
    %v2784 = vshrl.u32 %v2783, 7
    %v2785 = vsub.s32 0, %v2784
    %v2786 = vrot.slane %v2600, %v2785
    %v2787 = vlaneseq
    %v2788 = vshrl.u32 %v2787, 7
    %v2789 = vsub.s32 0, %v2788
    %v2790 = vrot.slane %v2601, %v2789
    %v2791 = vlaneseq
    %v2792 = vshrl.u32 %v2791, 7
    %v2793 = vsub.s32 0, %v2792
    %v2794 = vrot.slane %v2602, %v2793
    %v2795 = vlaneseq
    %v2796 = vshrl.u32 %v2795, 7
    %v2797 = vsub.s32 0, %v2796
    %v2798 = vrot.slane %v2603, %v2797
    %v2799 = vlaneseq
    %v2800 = vshrl.u32 %v2799, 7
    %v2801 = vsub.s32 0, %v2800
    %v2802 = vrot.slane %v2604, %v2801
    %v2803 = vlaneseq
    %v2804 = vshrl.u32 %v2803, 7
    %v2805 = vsub.s32 0, %v2804
    %v2806 = vrot.slane %v2605, %v2805
    %v2807 = vlaneseq
    %v2808 = vshrl.u32 %v2807, 7
    %v2809 = vsub.s32 0, %v2808
    %v2810 = vrot.slane %v2606, %v2809
    %v2811 = vlaneseq
    %v2812 = vshrl.u32 %v2811, 7
    %v2813 = vsub.s32 0, %v2812
    %v2814 = vrot.slane %v2607, %v2813
    %v2815 = vlaneseq
    %v2816 = vshrl.u32 %v2815, 7
    %v2817 = vsub.s32 0, %v2816
    %v2818 = vrot.slane %v2608, %v2817
    %v2819 = vlaneseq
    %v2820 = vshrl.u32 %v2819, 7
    %v2821 = vsub.s32 0, %v2820
    %v2822 = vrot.slane %v2609, %v2821
    %v2823 = vlaneseq
    %v2824 = vshrl.u32 %v2823, 7
    %v2825 = vsub.s32 0, %v2824
    %v2826 = vrot.slane %v2610, %v2825
    %v2827 = vlaneseq
    %v2828 = vshrl.u32 %v2827, 7
    %v2829 = vsub.s32 0, %v2828
    %v2830 = vrot.slane %v2611, %v2829
    %v2831 = vlaneseq
    %v2832 = vshrl.u32 %v2831, 7
    %v2833 = vsub.s32 0, %v2832
    %v2834 = vrot.slane %v2612, %v2833
    %v2835 = vlaneseq
    %v2836 = vshrl.u32 %v2835, 7
    %v2837 = vsub.s32 0, %v2836
    %v2838 = vrot.slane %v2613, %v2837
    %v2839 = vlaneseq
    %v2840 = vshrl.u32 %v2839, 7
    %v2841 = vsub.s32 0, %v2840
    %v2842 = vrot.slane %v2614, %v2841
    %v2843 = vlaneseq
    %v2844 = vshrl.u32 %v2843, 7
    %v2845 = vsub.s32 0, %v2844
    %v2846 = vrot.slane %v2615, %v2845
    %vm2847 = vcmask 1041409
    %v2848 = vsel %vm2847, %v2678, %v2674
    %v2849 = vsel %vm902, %v2682, %v2848
    %vm2850 = vcmask 1043459
    %v2851 = vsel %vm2850, %v2686, %v2849
    %v2852 = vsel %vm904, %v2690, %v2851
    %vm2853 = vcmask 1045509
    %v2854 = vsel %vm2853, %v2694, %v2852
    %v2855 = vsel %vm906, %v2698, %v2854
    %vm2856 = vcmask 1047559
    %v2857 = vsel %vm2856, %v2702, %v2855
    %v2858 = vsel %vm2847, %v2710, %v2706
    %v2859 = vsel %vm902, %v2714, %v2858
    %v2860 = vsel %vm2850, %v2718, %v2859
    %v2861 = vsel %vm904, %v2722, %v2860
    %v2862 = vsel %vm2853, %v2726, %v2861
    %v2863 = vsel %vm906, %v2730, %v2862
    %v2864 = vsel %vm2856, %v2734, %v2863
    %v2865 = vsel %vm2847, %v2742, %v2738
    %v2866 = vsel %vm902, %v2746, %v2865
    %v2867 = vsel %vm2850, %v2750, %v2866
    %v2868 = vsel %vm904, %v2754, %v2867
    %v2869 = vsel %vm2853, %v2758, %v2868
    %v2870 = vsel %vm906, %v2762, %v2869
    %v2871 = vsel %vm2856, %v2766, %v2870
    %v2872 = vsel %vm2847, %v2774, %v2770
    %v2873 = vsel %vm902, %v2778, %v2872
    %v2874 = vsel %vm2850, %v2782, %v2873
    %v2875 = vsel %vm904, %v2786, %v2874
    %v2876 = vsel %vm2853, %v2790, %v2875
    %v2877 = vsel %vm906, %v2794, %v2876
    %v2878 = vsel %vm2856, %v2798, %v2877
    %v2879 = vsel %vm2847, %v2806, %v2802
    %v2880 = vsel %vm902, %v2810, %v2879
    %v2881 = vsel %vm2850, %v2814, %v2880
    %v2882 = vsel %vm904, %v2818, %v2881
    %v2883 = vsel %vm2853, %v2822, %v2882
    %v2884 = vsel %vm906, %v2826, %v2883
    %v2885 = vsel %vm2856, %v2830, %v2884
    %v2886 = vsel %vm2847, %v2838, %v2834
    %v2887 = vsel %vm902, %v2842, %v2886
    %v2888 = vsel %vm2850, %v2846, %v2887
    %vm2889 = vcmask 261120
    %v2890 = vsel %vm2889, %v2857, 0
    %v2892 = vsel %vm2889, %v2864, 0
    %v2894 = vsel %vm2889, %v2871, 0
    %v2896 = vsel %vm2889, %v2878, 0
    %v2898 = vsel %vm2889, %v2885, 0
    %v2900 = vsel %vm2889, %v2888, 0
    %2902 = vmatprep.subr.mxu0 0.0
    %2903 = vmatpush1.msra.mxu0 0.0
    %2904 = vmatprep.subr.mxu0 0.0
    %2905 = vmatpush1.msra.mxu0 0.0
    %2906 = vmatprep.subr.mxu0 0.0
    %2907 = vmatpush1.msra.mxu0 0.0
    %2908 = vmatprep.subr.mxu0 0.0
    %2909 = vmatpush1.msra.mxu0 0.0
    %2910 = vmatprep.subr.mxu0 0.0
    %2911 = vmatpush1.msra.mxu0 0.0
    %2912 = vmatprep.subr.mxu0 0.0
    %2913 = vmatpush1.msra.mxu0 0.0
    %2914 = vmatprep.subr.mxu0 0.0
    %2915 = vmatpush1.msra.mxu0 0.0
    %2916 = vmatprep.subr.mxu0 0.0
    %2917 = vmatpush1.msra.mxu0 0.0
    %2918 = vmatprep.subr.mxu0 0.0
    %2919 = vmatpush1.msra.mxu0 0.0
    %2920 = vmatprep.subr.mxu0 0.0
    %2921 = vmatpush1.msra.mxu0 0.0
    %2922 = vmatprep.subr.mxu0 0.0
    %2923 = vmatpush1.msra.mxu0 0.0
    %2924 = vmatprep.subr.mxu0 0.0
    %2925 = vmatpush1.msra.mxu0 0.0
    %2926 = vmatprep.subr.mxu0 0.0
    %2927 = vmatpush1.msra.mxu0 %v2626
    %2928 = vmatprep.subr.mxu0 0.0
    %2929 = vmatpush1.msra.mxu0 %v2625
    %2930 = vmatprep.subr.mxu0 0.0
    %2931 = vmatpush1.msra.mxu0 %v2624
    %2932 = vmatprep.subr.mxu0 0.0
    %2933 = vmatpush1.msra.mxu0 %v2623
    %2934 = vmatprep.subr.mxu0 0.0
    %2935 = vmatpush2.msra.mxu0 0.0
    %2936 = vmatprep.subr.mxu0 0.0
    %2937 = vmatpush2.msra.mxu0 0.0
    %2938 = vmatprep.subr.mxu0 0.0
    %2939 = vmatpush2.msra.mxu0 0.0
    %2940 = vmatprep.subr.mxu0 0.0
    %2941 = vmatpush2.msra.mxu0 0.0
    %2942 = vmatprep.subr.mxu0 0.0
    %2943 = vmatpush2.msra.mxu0 0.0
    %2944 = vmatprep.subr.mxu0 0.0
    %2945 = vmatpush2.msra.mxu0 0.0
    %2946 = vmatprep.subr.mxu0 0.0
    %2947 = vmatpush2.msra.mxu0 0.0
    %2948 = vmatprep.subr.mxu0 0.0
    %2949 = vmatpush2.msra.mxu0 0.0
    %2950 = vmatprep.subr.mxu0 0.0
    %2951 = vmatpush2.msra.mxu0 0.0
    %2952 = vmatprep.subr.mxu0 0.0
    %2953 = vmatpush2.msra.mxu0 0.0
    %2954 = vmatprep.subr.mxu0 0.0
    %2955 = vmatpush2.msra.mxu0 0.0
    %2956 = vmatprep.subr.mxu0 0.0
    %2957 = vmatpush2.msra.mxu0 0.0
    %2958 = vmatprep.subr.mxu0 0.0
    %2959 = vmatpush2.msra.mxu0 0.0
    %2960 = vmatprep.subr.mxu0 0.0
    %2961 = vmatpush2.msra.mxu0 0.0
    %2962 = vmatprep.subr.mxu0 0.0
    %2963 = vmatpush2.msra.mxu0 0.0
    %2964 = vmatprep.subr.mxu0 0.0
    %2965 = vmatpush2.msra.mxu0 0.0
    %2966 = vmatprep.mubr.f32.mxu0 0.0
    %2967 = vmatmul.mubr.f32.gmra.mxu0 %v2890
    %v2968 = vpop.f32.mrf.mxu0
    %v2969 = vadd.f32 0.0, %v2968
    %v2970 = vpop.f32.mrf.mxu0
    %2971 = vmatprep.mubr.f32.mxu0 0.0
    %2972 = vmatmul.mubr.f32.gmra.mxu0 %v2892
    %v2973 = vpop.f32.mrf.mxu0
    %v2974 = vadd.f32 0.0, %v2973
    %v2975 = vpop.f32.mrf.mxu0
    %2976 = vmatprep.mubr.f32.mxu0 0.0
    %2977 = vmatmul.mubr.f32.gmra.mxu0 %v2894
    %v2978 = vpop.f32.mrf.mxu0
    %v2979 = vadd.f32 0.0, %v2978
    %v2980 = vpop.f32.mrf.mxu0
    %2981 = vmatprep.mubr.f32.mxu0 0.0
    %2982 = vmatmul.mubr.f32.gmra.mxu0 %v2896
    %v2983 = vpop.f32.mrf.mxu0
    %v2984 = vadd.f32 0.0, %v2983
    %v2985 = vpop.f32.mrf.mxu0
    %2986 = vmatprep.mubr.f32.mxu0 0.0
    %2987 = vmatmul.mubr.f32.gmra.mxu0 %v2898
    %v2988 = vpop.f32.mrf.mxu0
    %v2989 = vadd.f32 0.0, %v2988
    %v2990 = vpop.f32.mrf.mxu0
    %2991 = vmatprep.mubr.f32.mxu0 0.0
    %2992 = vmatmul.mubr.f32.gmra.mxu0 %v2900
    %v2993 = vpop.f32.mrf.mxu0
    %v2994 = vadd.f32 0.0, %v2993
    %v2995 = vpop.f32.mrf.mxu0
    %2996 = vdwg.mxu0
    %v2999 = vlaneseq
    %v3000 = vshrl.u32 %v2999, 7
    %v3001 = vsub.s32 0, %v3000
    %v3002 = vrot.slane %v2569, %v3001
    %v3003 = vlaneseq
    %v3004 = vshrl.u32 %v3003, 7
    %v3005 = vsub.s32 0, %v3004
    %v3006 = vrot.slane %v2593, %v3005
    %v3007 = vsel %vm2847, %v2674, %v3002
    %v3008 = vsel %vm902, %v2678, %v3007
    %v3009 = vsel %vm2850, %v2682, %v3008
    %v3010 = vsel %vm904, %v2686, %v3009
    %v3011 = vsel %vm2853, %v2690, %v3010
    %v3012 = vsel %vm906, %v2694, %v3011
    %v3013 = vsel %vm2856, %v2698, %v3012
    %v3014 = vsel %vm2847, %v2706, %v2702
    %v3015 = vsel %vm902, %v2710, %v3014
    %v3016 = vsel %vm2850, %v2714, %v3015
    %v3017 = vsel %vm904, %v2718, %v3016
    %v3018 = vsel %vm2853, %v2722, %v3017
    %v3019 = vsel %vm906, %v2726, %v3018
    %v3020 = vsel %vm2856, %v2730, %v3019
    %v3021 = vsel %vm2847, %v2738, %v2734
    %v3022 = vsel %vm902, %v2742, %v3021
    %v3023 = vsel %vm2850, %v2746, %v3022
    %v3024 = vsel %vm904, %v2750, %v3023
    %v3025 = vsel %vm2853, %v2754, %v3024
    %v3026 = vsel %vm906, %v3006, %v3025
    %v3027 = vsel %vm2856, %v2762, %v3026
    %v3028 = vsel %vm2847, %v2770, %v2766
    %v3029 = vsel %vm902, %v2774, %v3028
    %v3030 = vsel %vm2850, %v2778, %v3029
    %v3031 = vsel %vm904, %v2782, %v3030
    %v3032 = vsel %vm2853, %v2786, %v3031
    %v3033 = vsel %vm906, %v2790, %v3032
    %v3034 = vsel %vm2856, %v2794, %v3033
    %v3035 = vsel %vm2847, %v2802, %v2798
    %v3036 = vsel %vm902, %v2806, %v3035
    %v3037 = vsel %vm2850, %v2810, %v3036
    %v3038 = vsel %vm904, %v2814, %v3037
    %v3039 = vsel %vm2853, %v2818, %v3038
    %v3040 = vsel %vm906, %v2822, %v3039
    %v3041 = vsel %vm2856, %v2826, %v3040
    %v3042 = vsel %vm2847, %v2834, %v2830
    %v3043 = vsel %vm902, %v2838, %v3042
    %v3044 = vsel %vm2850, %v2842, %v3043
    %v3045 = vsel %vm2889, %v3013, 0
    %v3047 = vsel %vm2889, %v3020, 0
    %v3049 = vsel %vm2889, %v3027, 0
    %v3051 = vsel %vm2889, %v3034, 0
    %v3053 = vsel %vm2889, %v3041, 0
    %v3055 = vsel %vm2889, %v3044, 0
    %3057 = vmatprep.subr.mxu0 0.0
    %3058 = vmatpush1.msra.mxu0 0.0
    %3059 = vmatprep.subr.mxu0 0.0
    %3060 = vmatpush1.msra.mxu0 0.0
    %3061 = vmatprep.subr.mxu0 0.0
    %3062 = vmatpush1.msra.mxu0 0.0
    %3063 = vmatprep.subr.mxu0 0.0
    %3064 = vmatpush1.msra.mxu0 0.0
    %3065 = vmatprep.subr.mxu0 0.0
    %3066 = vmatpush1.msra.mxu0 0.0
    %3067 = vmatprep.subr.mxu0 0.0
    %3068 = vmatpush1.msra.mxu0 0.0
    %3069 = vmatprep.subr.mxu0 0.0
    %3070 = vmatpush1.msra.mxu0 0.0
    %3071 = vmatprep.subr.mxu0 0.0
    %3072 = vmatpush1.msra.mxu0 0.0
    %3073 = vmatprep.subr.mxu0 0.0
    %3074 = vmatpush1.msra.mxu0 0.0
    %3075 = vmatprep.subr.mxu0 0.0
    %3076 = vmatpush1.msra.mxu0 0.0
    %3077 = vmatprep.subr.mxu0 0.0
    %3078 = vmatpush1.msra.mxu0 0.0
    %3079 = vmatprep.subr.mxu0 0.0
    %3080 = vmatpush1.msra.mxu0 0.0
    %3081 = vmatprep.subr.mxu0 0.0
    %3082 = vmatpush1.msra.mxu0 %v2621
    %3083 = vmatprep.subr.mxu0 0.0
    %3084 = vmatpush1.msra.mxu0 %v2620
    %3085 = vmatprep.subr.mxu0 0.0
    %3086 = vmatpush1.msra.mxu0 %v2619
    %3087 = vmatprep.subr.mxu0 0.0
    %3088 = vmatpush1.msra.mxu0 %v2618
    %3089 = vmatprep.subr.mxu0 0.0
    %3090 = vmatpush2.msra.mxu0 0.0
    %3091 = vmatprep.subr.mxu0 0.0
    %3092 = vmatpush2.msra.mxu0 0.0
    %3093 = vmatprep.subr.mxu0 0.0
    %3094 = vmatpush2.msra.mxu0 0.0
    %3095 = vmatprep.subr.mxu0 0.0
    %3096 = vmatpush2.msra.mxu0 0.0
    %3097 = vmatprep.subr.mxu0 0.0
    %3098 = vmatpush2.msra.mxu0 0.0
    %3099 = vmatprep.subr.mxu0 0.0
    %3100 = vmatpush2.msra.mxu0 0.0
    %3101 = vmatprep.subr.mxu0 0.0
    %3102 = vmatpush2.msra.mxu0 0.0
    %3103 = vmatprep.subr.mxu0 0.0
    %3104 = vmatpush2.msra.mxu0 0.0
    %3105 = vmatprep.subr.mxu0 0.0
    %3106 = vmatpush2.msra.mxu0 0.0
    %3107 = vmatprep.subr.mxu0 0.0
    %3108 = vmatpush2.msra.mxu0 0.0
    %3109 = vmatprep.subr.mxu0 0.0
    %3110 = vmatpush2.msra.mxu0 0.0
    %3111 = vmatprep.subr.mxu0 0.0
    %3112 = vmatpush2.msra.mxu0 0.0
    %3113 = vmatprep.subr.mxu0 0.0
    %3114 = vmatpush2.msra.mxu0 0.0
    %3115 = vmatprep.subr.mxu0 0.0
    %3116 = vmatpush2.msra.mxu0 0.0
    %3117 = vmatprep.subr.mxu0 0.0
    %3118 = vmatpush2.msra.mxu0 0.0
    %3119 = vmatprep.subr.mxu0 0.0
    %3120 = vmatpush2.msra.mxu0 0.0
    %3121 = vmatprep.mubr.f32.mxu0 0.0
    %3122 = vmatmul.mubr.f32.gmra.mxu0 %v3045
    %v3123 = vpop.f32.mrf.mxu0
    %v3124 = vadd.f32 %v2969, %v3123
    %v3125 = vpop.f32.mrf.mxu0
    %3126 = vmatprep.mubr.f32.mxu0 0.0
    %3127 = vmatmul.mubr.f32.gmra.mxu0 %v3047
    %v3128 = vpop.f32.mrf.mxu0
    %v3129 = vadd.f32 %v2974, %v3128
    %v3130 = vpop.f32.mrf.mxu0
    %3131 = vmatprep.mubr.f32.mxu0 0.0
    %3132 = vmatmul.mubr.f32.gmra.mxu0 %v3049
    %v3133 = vpop.f32.mrf.mxu0
    %v3134 = vadd.f32 %v2979, %v3133
    %v3135 = vpop.f32.mrf.mxu0
    %3136 = vmatprep.mubr.f32.mxu0 0.0
    %3137 = vmatmul.mubr.f32.gmra.mxu0 %v3051
    %v3138 = vpop.f32.mrf.mxu0
    %v3139 = vadd.f32 %v2984, %v3138
    %v3140 = vpop.f32.mrf.mxu0
    %3141 = vmatprep.mubr.f32.mxu0 0.0
    %3142 = vmatmul.mubr.f32.gmra.mxu0 %v3053
    %v3143 = vpop.f32.mrf.mxu0
    %v3144 = vadd.f32 %v2989, %v3143
    %v3145 = vpop.f32.mrf.mxu0
    %3146 = vmatprep.mubr.f32.mxu0 0.0
    %3147 = vmatmul.mubr.f32.gmra.mxu0 %v3055
    %v3148 = vpop.f32.mrf.mxu0
    %v3149 = vadd.f32 %v2994, %v3148
    %v3150 = vpop.f32.mrf.mxu0
    %3151 = vdwg.mxu0
    %s3152 = scalar_lea.vmem %s3, 64
    %v3153 = vld [vmem:[%s3152] sm:$0xff]
    %v3154 = vld [vmem:[%s3152 + $0x8] sm:$0xff]
    %v3155 = vld [vmem:[%s3152 + $0x10] sm:$0xff]
    %v3156 = vld [vmem:[%s3152 + $0x18] sm:$0xff]
    %v3159 = vlaneseq
    %v3160 = vshrl.u32 %v3159, 7
    %v3161 = vsub.s32 0, %v3160
    %v3162 = vrot.slane %v2592, %v3161
    %v3163 = vlaneseq
    %v3164 = vshrl.u32 %v3163, 7
    %v3165 = vsub.s32 0, %v3164
    %v3166 = vrot.slane %v2616, %v3165
    %v3167 = vsel %vm2847, %v2682, %v2678
    %v3168 = vsel %vm902, %v2686, %v3167
    %v3169 = vsel %vm2850, %v2690, %v3168
    %v3170 = vsel %vm904, %v2694, %v3169
    %v3171 = vsel %vm2853, %v2698, %v3170
    %v3172 = vsel %vm906, %v2702, %v3171
    %v3173 = vsel %vm2856, %v2706, %v3172
    %v3174 = vsel %vm2847, %v2714, %v2710
    %v3175 = vsel %vm902, %v2718, %v3174
    %v3176 = vsel %vm2850, %v2722, %v3175
    %v3177 = vsel %vm904, %v2726, %v3176
    %v3178 = vsel %vm2853, %v2730, %v3177
    %v3179 = vsel %vm906, %v2734, %v3178
    %v3180 = vsel %vm2856, %v2738, %v3179
    %v3181 = vsel %vm2847, %v2746, %v2742
    %v3182 = vsel %vm902, %v2750, %v3181
    %v3183 = vsel %vm2850, %v2754, %v3182
    %v3184 = vsel %vm904, %v2758, %v3183
    %v3185 = vsel %vm2853, %v3162, %v3184
    %v3186 = vsel %vm906, %v2766, %v3185
    %v3187 = vsel %vm2856, %v2770, %v3186
    %v3188 = vsel %vm2847, %v2778, %v2774
    %v3189 = vsel %vm902, %v2782, %v3188
    %v3190 = vsel %vm2850, %v2786, %v3189
    %v3191 = vsel %vm904, %v2790, %v3190
    %v3192 = vsel %vm2853, %v2794, %v3191
    %v3193 = vsel %vm906, %v2798, %v3192
    %v3194 = vsel %vm2856, %v2802, %v3193
    %v3195 = vsel %vm2847, %v2810, %v2806
    %v3196 = vsel %vm902, %v2814, %v3195
    %v3197 = vsel %vm2850, %v2818, %v3196
    %v3198 = vsel %vm904, %v2822, %v3197
    %v3199 = vsel %vm2853, %v2826, %v3198
    %v3200 = vsel %vm906, %v2830, %v3199
    %v3201 = vsel %vm2856, %v2834, %v3200
    %v3202 = vsel %vm2847, %v2842, %v2838
    %v3203 = vsel %vm902, %v2846, %v3202
    %v3204 = vsel %vm2850, %v3166, %v3203
    %v3205 = vsel %vm2889, %v3173, 0
    %v3207 = vsel %vm2889, %v3180, 0
    %v3209 = vsel %vm2889, %v3187, 0
    %v3211 = vsel %vm2889, %v3194, 0
    %v3213 = vsel %vm2889, %v3201, 0
    %v3215 = vsel %vm2889, %v3204, 0
    %3217 = vmatprep.subr.mxu0 0.0
    %3218 = vmatpush1.msra.mxu0 0.0
    %3219 = vmatprep.subr.mxu0 0.0
    %3220 = vmatpush1.msra.mxu0 0.0
    %3221 = vmatprep.subr.mxu0 0.0
    %3222 = vmatpush1.msra.mxu0 0.0
    %3223 = vmatprep.subr.mxu0 0.0
    %3224 = vmatpush1.msra.mxu0 0.0
    %3225 = vmatprep.subr.mxu0 0.0
    %3226 = vmatpush1.msra.mxu0 0.0
    %3227 = vmatprep.subr.mxu0 0.0
    %3228 = vmatpush1.msra.mxu0 0.0
    %3229 = vmatprep.subr.mxu0 0.0
    %3230 = vmatpush1.msra.mxu0 0.0
    %3231 = vmatprep.subr.mxu0 0.0
    %3232 = vmatpush1.msra.mxu0 0.0
    %3233 = vmatprep.subr.mxu0 0.0
    %3234 = vmatpush1.msra.mxu0 0.0
    %3235 = vmatprep.subr.mxu0 0.0
    %3236 = vmatpush1.msra.mxu0 0.0
    %3237 = vmatprep.subr.mxu0 0.0
    %3238 = vmatpush1.msra.mxu0 0.0
    %3239 = vmatprep.subr.mxu0 0.0
    %3240 = vmatpush1.msra.mxu0 0.0
    %3241 = vmatprep.subr.mxu0 0.0
    %3242 = vmatpush1.msra.mxu0 %v3156
    %3243 = vmatprep.subr.mxu0 0.0
    %3244 = vmatpush1.msra.mxu0 %v3155
    %3245 = vmatprep.subr.mxu0 0.0
    %3246 = vmatpush1.msra.mxu0 %v3154
    %3247 = vmatprep.subr.mxu0 0.0
    %3248 = vmatpush1.msra.mxu0 %v3153
    %3249 = vmatprep.subr.mxu0 0.0
    %3250 = vmatpush2.msra.mxu0 0.0
    %3251 = vmatprep.subr.mxu0 0.0
    %3252 = vmatpush2.msra.mxu0 0.0
    %3253 = vmatprep.subr.mxu0 0.0
    %3254 = vmatpush2.msra.mxu0 0.0
    %3255 = vmatprep.subr.mxu0 0.0
    %3256 = vmatpush2.msra.mxu0 0.0
    %3257 = vmatprep.subr.mxu0 0.0
    %3258 = vmatpush2.msra.mxu0 0.0
    %3259 = vmatprep.subr.mxu0 0.0
    %3260 = vmatpush2.msra.mxu0 0.0
    %3261 = vmatprep.subr.mxu0 0.0
    %3262 = vmatpush2.msra.mxu0 0.0
    %3263 = vmatprep.subr.mxu0 0.0
    %3264 = vmatpush2.msra.mxu0 0.0
    %3265 = vmatprep.subr.mxu0 0.0
    %3266 = vmatpush2.msra.mxu0 0.0
    %3267 = vmatprep.subr.mxu0 0.0
    %3268 = vmatpush2.msra.mxu0 0.0
    %3269 = vmatprep.subr.mxu0 0.0
    %3270 = vmatpush2.msra.mxu0 0.0
    %3271 = vmatprep.subr.mxu0 0.0
    %3272 = vmatpush2.msra.mxu0 0.0
    %3273 = vmatprep.subr.mxu0 0.0
    %3274 = vmatpush2.msra.mxu0 0.0
    %3275 = vmatprep.subr.mxu0 0.0
    %3276 = vmatpush2.msra.mxu0 0.0
    %3277 = vmatprep.subr.mxu0 0.0
    %3278 = vmatpush2.msra.mxu0 0.0
    %3279 = vmatprep.subr.mxu0 0.0
    %3280 = vmatpush2.msra.mxu0 0.0
    %3281 = vmatprep.mubr.f32.mxu0 0.0
    %3282 = vmatmul.mubr.f32.gmra.mxu0 %v3205
    %v3283 = vpop.f32.mrf.mxu0
    %v3284 = vadd.f32 0.0, %v3283
    %v3285 = vpop.f32.mrf.mxu0
    %3286 = vmatprep.mubr.f32.mxu0 0.0
    %3287 = vmatmul.mubr.f32.gmra.mxu0 %v3207
    %v3288 = vpop.f32.mrf.mxu0
    %v3289 = vadd.f32 0.0, %v3288
    %v3290 = vpop.f32.mrf.mxu0
    %3291 = vmatprep.mubr.f32.mxu0 0.0
    %3292 = vmatmul.mubr.f32.gmra.mxu0 %v3209
    %v3293 = vpop.f32.mrf.mxu0
    %v3294 = vadd.f32 0.0, %v3293
    %v3295 = vpop.f32.mrf.mxu0
    %3296 = vmatprep.mubr.f32.mxu0 0.0
    %3297 = vmatmul.mubr.f32.gmra.mxu0 %v3211
    %v3298 = vpop.f32.mrf.mxu0
    %v3299 = vadd.f32 0.0, %v3298
    %v3300 = vpop.f32.mrf.mxu0
    %3301 = vmatprep.mubr.f32.mxu0 0.0
    %3302 = vmatmul.mubr.f32.gmra.mxu0 %v3213
    %v3303 = vpop.f32.mrf.mxu0
    %v3304 = vadd.f32 0.0, %v3303
    %v3305 = vpop.f32.mrf.mxu0
    %3306 = vmatprep.mubr.f32.mxu0 0.0
    %3307 = vmatmul.mubr.f32.gmra.mxu0 %v3215
    %v3308 = vpop.f32.mrf.mxu0
    %v3309 = vadd.f32 0.0, %v3308
    %v3310 = vpop.f32.mrf.mxu0
    %3311 = vdwg.mxu0
    %v3312 = vadd.f32 %v3124, %v3284
    %v3313 = vadd.f32 %v3129, %v3289
    %v3314 = vadd.f32 %v3134, %v3294
    %v3315 = vadd.f32 %v3139, %v3299
    %v3316 = vadd.f32 %v3144, %v3304
    %v3317 = vadd.f32 %v3149, %v3309
    %v3319 = vlaneseq
    %v3320 = vshrl.u32 %v3319, 7
    %v3321 = vsub.s32 0, %v3320
    %v3322 = vrot.slane %v2617, %v3321
    %v3324 = vadd.f32 %v3312, %v3322
    %v3325 = vadd.f32 %v3313, %v3322
    %v3326 = vadd.f32 %v3314, %v3322
    %v3327 = vadd.f32 %v3315, %v3322
    %v3328 = vadd.f32 %v3316, %v3322
    %v3329 = vadd.f32 %v3317, %v3322
    %v3330 = vmax.f32 %v3324, 0.0
    %v3331 = vmax.f32 %v3325, 0.0
    %v3332 = vmax.f32 %v3326, 0.0
    %v3333 = vmax.f32 %v3327, 0.0
    %v3334 = vmax.f32 %v3328, 0.0
    %v3335 = vmax.f32 %v3329, 0.0
    %v3342 = vcombine.high %v3330, %v3330
    %v3344 = vunpack.c.l.s4 1983009808
    %v3345 = vunpack.c.0.s8 %v3344
    %v3346 = vlaneseq
    %v3347 = vshrl.u32 %v3346, 7
    %v3348 = vsub.s32 %v3345, %v3347
    %v3349 = vrot.slane %v3330, %v3348
    %v3351 = vunpack.c.l.s4 1983009808
    %v3352 = vunpack.c.0.s8 %v3351
    %v3353 = vlaneseq
    %v3354 = vshrl.u32 %v3353, 7
    %v3355 = vsub.s32 %v3352, %v3354
    %v3356 = vrot.slane %v3342, %v3355
    %v3357 = vcombine.high %v3349, %v3349
    %v3358 = vcombine.high %v3356, %v3356
    %v3359 = vcombine.high %v3331, %v3331
    %v3361 = vunpack.c.l.s4 1983009808
    %v3362 = vunpack.c.0.s8 %v3361
    %v3363 = vlaneseq
    %v3364 = vshrl.u32 %v3363, 7
    %v3365 = vsub.s32 %v3362, %v3364
    %v3366 = vrot.slane %v3331, %v3365
    %v3368 = vunpack.c.l.s4 1983009808
    %v3369 = vunpack.c.0.s8 %v3368
    %v3370 = vlaneseq
    %v3371 = vshrl.u32 %v3370, 7
    %v3372 = vsub.s32 %v3369, %v3371
    %v3373 = vrot.slane %v3359, %v3372
    %v3374 = vcombine.high %v3366, %v3366
    %v3375 = vcombine.high %v3373, %v3373
    %v3376 = vcombine.high %v3332, %v3332
    %v3378 = vunpack.c.l.s4 1983009808
    %v3379 = vunpack.c.0.s8 %v3378
    %v3380 = vlaneseq
    %v3381 = vshrl.u32 %v3380, 7
    %v3382 = vsub.s32 %v3379, %v3381
    %v3383 = vrot.slane %v3332, %v3382
    %v3385 = vunpack.c.l.s4 1983009808
    %v3386 = vunpack.c.0.s8 %v3385
    %v3387 = vlaneseq
    %v3388 = vshrl.u32 %v3387, 7
    %v3389 = vsub.s32 %v3386, %v3388
    %v3390 = vrot.slane %v3376, %v3389
    %v3391 = vcombine.high %v3383, %v3383
    %v3392 = vcombine.high %v3390, %v3390
    %v3393 = vcombine.high %v3333, %v3333
    %v3395 = vunpack.c.l.s4 1983009808
    %v3396 = vunpack.c.0.s8 %v3395
    %v3397 = vlaneseq
    %v3398 = vshrl.u32 %v3397, 7
    %v3399 = vsub.s32 %v3396, %v3398
    %v3400 = vrot.slane %v3333, %v3399
    %v3402 = vunpack.c.l.s4 1983009808
    %v3403 = vunpack.c.0.s8 %v3402
    %v3404 = vlaneseq
    %v3405 = vshrl.u32 %v3404, 7
    %v3406 = vsub.s32 %v3403, %v3405
    %v3407 = vrot.slane %v3393, %v3406
    %v3408 = vcombine.high %v3400, %v3400
    %v3409 = vcombine.high %v3407, %v3407
    %v3410 = vcombine.high %v3334, %v3334
    %v3412 = vunpack.c.l.s4 1983009808
    %v3413 = vunpack.c.0.s8 %v3412
    %v3414 = vlaneseq
    %v3415 = vshrl.u32 %v3414, 7
    %v3416 = vsub.s32 %v3413, %v3415
    %v3417 = vrot.slane %v3334, %v3416
    %v3419 = vunpack.c.l.s4 1983009808
    %v3420 = vunpack.c.0.s8 %v3419
    %v3421 = vlaneseq
    %v3422 = vshrl.u32 %v3421, 7
    %v3423 = vsub.s32 %v3420, %v3422
    %v3424 = vrot.slane %v3410, %v3423
    %v3425 = vcombine.high %v3417, %v3417
    %v3426 = vcombine.high %v3424, %v3424
    %v3428 = vunpack.c.l.s4 1983009808
    %v3429 = vunpack.c.0.s8 %v3428
    %v3430 = vlaneseq
    %v3431 = vshrl.u32 %v3430, 7
    %v3432 = vsub.s32 %v3429, %v3431
    %v3433 = vrot.slane %v3335, %v3432
    %v3434 = vcombine.high %v3433, %v3433
    %v3435 = vld [vmem:[%s9 + $0x3] sm:$0x1]
    %v3436 = vld [vmem:[%s4] sm:$0xff]
    %v3437 = vld [vmem:[%s4 + $0x8] sm:$0xff]
    %v3438 = vld [vmem:[%s4 + $0x10] sm:$0xff]
    %v3439 = vld [vmem:[%s4 + $0x18] sm:$0xff]
    %v3440 = vld [vmem:[%s4 + $0x20] sm:$0xff]
    %v3441 = vld [vmem:[%s4 + $0x28] sm:$0xff]
    %v3442 = vld [vmem:[%s4 + $0x30] sm:$0xff]
    %v3443 = vld [vmem:[%s4 + $0x38] sm:$0xff]
    %v3444 = vrot.slane %v3349, 7
    %v3445 = vrot.slane %v3444, 2
    %v3446 = vrot.slane %v3357, 7
    %v3447 = vsel %vm907, %v3445, %v3446
    %v3448 = vrot.slane %v3446, 2
    %v3449 = vrot.slane %v3356, 7
    %v3450 = vsel %vm907, %v3448, %v3449
    %v3451 = vrot.slane %v3449, 2
    %v3452 = vrot.slane %v3358, 7
    %v3453 = vsel %vm907, %v3451, %v3452
    %v3454 = vrot.slane %v3452, 2
    %v3455 = vrot.slane %v3366, 7
    %v3456 = vsel %vm907, %v3454, %v3455
    %v3457 = vrot.slane %v3455, 2
    %v3458 = vrot.slane %v3374, 7
    %v3459 = vsel %vm907, %v3457, %v3458
    %v3460 = vrot.slane %v3458, 2
    %v3461 = vrot.slane %v3373, 7
    %v3462 = vsel %vm907, %v3460, %v3461
    %v3463 = vrot.slane %v3461, 2
    %v3464 = vrot.slane %v3375, 7
    %v3465 = vsel %vm907, %v3463, %v3464
    %v3466 = vrot.slane %v3464, 2
    %v3467 = vrot.slane %v3383, 7
    %v3468 = vsel %vm907, %v3466, %v3467
    %v3469 = vrot.slane %v3467, 2
    %v3470 = vrot.slane %v3391, 7
    %v3471 = vsel %vm907, %v3469, %v3470
    %v3472 = vrot.slane %v3470, 2
    %v3473 = vrot.slane %v3390, 7
    %v3474 = vsel %vm907, %v3472, %v3473
    %v3475 = vrot.slane %v3392, 7
    %v3476 = vrot.slane %v3475, 2
    %v3477 = vrot.slane %v3400, 7
    %v3478 = vsel %vm907, %v3476, %v3477
    %v3479 = vrot.slane %v3477, 2
    %v3480 = vrot.slane %v3408, 7
    %v3481 = vsel %vm907, %v3479, %v3480
    %v3482 = vrot.slane %v3480, 2
    %v3483 = vrot.slane %v3407, 7
    %v3484 = vsel %vm907, %v3482, %v3483
    %v3485 = vrot.slane %v3483, 2
    %v3486 = vrot.slane %v3409, 7
    %v3487 = vsel %vm907, %v3485, %v3486
    %v3488 = vrot.slane %v3486, 2
    %v3489 = vrot.slane %v3417, 7
    %v3490 = vsel %vm907, %v3488, %v3489
    %v3491 = vrot.slane %v3489, 2
    %v3492 = vrot.slane %v3425, 7
    %v3493 = vsel %vm907, %v3491, %v3492
    %v3494 = vrot.slane %v3492, 2
    %v3495 = vrot.slane %v3424, 7
    %v3496 = vsel %vm907, %v3494, %v3495
    %v3497 = vrot.slane %v3495, 2
    %v3498 = vrot.slane %v3426, 7
    %v3499 = vsel %vm907, %v3497, %v3498
    %v3500 = vrot.slane %v3498, 2
    %v3501 = vrot.slane %v3433, 7
    %v3502 = vsel %vm907, %v3500, %v3501
    %v3503 = vrot.slane %v3501, 2
    %v3504 = vrot.slane %v3434, 7
    %v3505 = vsel %vm907, %v3503, %v3504
    %s3506 = scalar_lea.vmem %s4, 64
    %v3507 = vld [vmem:[%s3506] sm:$0xff]
    %v3508 = vld [vmem:[%s3506 + $0x8] sm:$0xff]
    %v3509 = vld [vmem:[%s3506 + $0x10] sm:$0xff]
    %v3510 = vld [vmem:[%s3506 + $0x18] sm:$0xff]
    %v3511 = vld [vmem:[%s3506 + $0x20] sm:$0xff]
    %v3512 = vld [vmem:[%s3506 + $0x28] sm:$0xff]
    %v3513 = vld [vmem:[%s3506 + $0x30] sm:$0xff]
    %v3514 = vld [vmem:[%s3506 + $0x38] sm:$0xff]
    %v3515 = vcombine.low %v3447, %v3450
    %v3516 = vcombine.low %v3453, %v3456
    %v3518 = vunpack.c.l.s4 1983009808
    %v3519 = vunpack.c.0.s8 %v3518
    %v3520 = vlaneseq
    %v3521 = vshrl.u32 %v3520, 7
    %v3522 = vsub.s32 %v3519, %v3521
    %v3523 = vrot.slane %v3515, %v3522
    %v3525 = vunpack.c.l.s4 1983009808
    %v3526 = vunpack.c.0.s8 %v3525
    %v3527 = vlaneseq
    %v3528 = vshrl.u32 %v3527, 7
    %v3529 = vsub.s32 %v3526, %v3528
    %v3530 = vrot.slane %v3516, %v3529
    %v3531 = vcombine.low %v3523, %v3530
    %v3532 = vcombine.low %v3459, %v3462
    %v3533 = vcombine.low %v3465, %v3468
    %v3535 = vunpack.c.l.s4 1983009808
    %v3536 = vunpack.c.0.s8 %v3535
    %v3537 = vlaneseq
    %v3538 = vshrl.u32 %v3537, 7
    %v3539 = vsub.s32 %v3536, %v3538
    %v3540 = vrot.slane %v3532, %v3539
    %v3542 = vunpack.c.l.s4 1983009808
    %v3543 = vunpack.c.0.s8 %v3542
    %v3544 = vlaneseq
    %v3545 = vshrl.u32 %v3544, 7
    %v3546 = vsub.s32 %v3543, %v3545
    %v3547 = vrot.slane %v3533, %v3546
    %v3548 = vcombine.low %v3540, %v3547
    %v3549 = vcombine.low %v3471, %v3474
    %v3550 = vcombine.low %v3478, %v3481
    %v3552 = vunpack.c.l.s4 1983009808
    %v3553 = vunpack.c.0.s8 %v3552
    %v3554 = vlaneseq
    %v3555 = vshrl.u32 %v3554, 7
    %v3556 = vsub.s32 %v3553, %v3555
    %v3557 = vrot.slane %v3549, %v3556
    %v3559 = vunpack.c.l.s4 1983009808
    %v3560 = vunpack.c.0.s8 %v3559
    %v3561 = vlaneseq
    %v3562 = vshrl.u32 %v3561, 7
    %v3563 = vsub.s32 %v3560, %v3562
    %v3564 = vrot.slane %v3550, %v3563
    %v3565 = vcombine.low %v3557, %v3564
    %v3566 = vcombine.low %v3484, %v3487
    %v3567 = vcombine.low %v3490, %v3493
    %v3569 = vunpack.c.l.s4 1983009808
    %v3570 = vunpack.c.0.s8 %v3569
    %v3571 = vlaneseq
    %v3572 = vshrl.u32 %v3571, 7
    %v3573 = vsub.s32 %v3570, %v3572
    %v3574 = vrot.slane %v3566, %v3573
    %v3576 = vunpack.c.l.s4 1983009808
    %v3577 = vunpack.c.0.s8 %v3576
    %v3578 = vlaneseq
    %v3579 = vshrl.u32 %v3578, 7
    %v3580 = vsub.s32 %v3577, %v3579
    %v3581 = vrot.slane %v3567, %v3580
    %v3582 = vcombine.low %v3574, %v3581
    %v3583 = vcombine.low %v3496, %v3499
    %v3584 = vcombine.low %v3502, %v3505
    %v3586 = vunpack.c.l.s4 1983009808
    %v3587 = vunpack.c.0.s8 %v3586
    %v3588 = vlaneseq
    %v3589 = vshrl.u32 %v3588, 7
    %v3590 = vsub.s32 %v3587, %v3589
    %v3591 = vrot.slane %v3583, %v3590
    %v3593 = vunpack.c.l.s4 1983009808
    %v3594 = vunpack.c.0.s8 %v3593
    %v3595 = vlaneseq
    %v3596 = vshrl.u32 %v3595, 7
    %v3597 = vsub.s32 %v3594, %v3596
    %v3598 = vrot.slane %v3584, %v3597
    %v3599 = vcombine.low %v3591, %v3598
    %vm3600 = vcmask 523264
    %v3601 = vsel %vm3600, %v3531, 0
    %v3603 = vsel %vm3600, %v3548, 0
    %v3605 = vsel %vm3600, %v3565, 0
    %v3607 = vsel %vm3600, %v3582, 0
    %v3609 = vsel %vm3600, %v3599, 0
    %3611 = vmatprep.subr.mxu0 0.0
    %3612 = vmatpush1.msra.mxu0 0.0
    %3613 = vmatprep.subr.mxu0 0.0
    %3614 = vmatpush1.msra.mxu0 0.0
    %3615 = vmatprep.subr.mxu0 0.0
    %3616 = vmatpush1.msra.mxu0 0.0
    %3617 = vmatprep.subr.mxu0 0.0
    %3618 = vmatpush1.msra.mxu0 0.0
    %3619 = vmatprep.subr.mxu0 0.0
    %3620 = vmatpush1.msra.mxu0 0.0
    %3621 = vmatprep.subr.mxu0 0.0
    %3622 = vmatpush1.msra.mxu0 0.0
    %3623 = vmatprep.subr.mxu0 0.0
    %3624 = vmatpush1.msra.mxu0 0.0
    %3625 = vmatprep.subr.mxu0 0.0
    %3626 = vmatpush1.msra.mxu0 0.0
    %3627 = vmatprep.subr.mxu0 0.0
    %3628 = vmatpush1.msra.mxu0 %v3514
    %3629 = vmatprep.subr.mxu0 0.0
    %3630 = vmatpush1.msra.mxu0 %v3513
    %3631 = vmatprep.subr.mxu0 0.0
    %3632 = vmatpush1.msra.mxu0 %v3512
    %3633 = vmatprep.subr.mxu0 0.0
    %3634 = vmatpush1.msra.mxu0 %v3511
    %3635 = vmatprep.subr.mxu0 0.0
    %3636 = vmatpush1.msra.mxu0 %v3510
    %3637 = vmatprep.subr.mxu0 0.0
    %3638 = vmatpush1.msra.mxu0 %v3509
    %3639 = vmatprep.subr.mxu0 0.0
    %3640 = vmatpush1.msra.mxu0 %v3508
    %3641 = vmatprep.subr.mxu0 0.0
    %3642 = vmatpush1.msra.mxu0 %v3507
    %3643 = vmatprep.subr.mxu0 0.0
    %3644 = vmatpush2.msra.mxu0 0.0
    %3645 = vmatprep.subr.mxu0 0.0
    %3646 = vmatpush2.msra.mxu0 0.0
    %3647 = vmatprep.subr.mxu0 0.0
    %3648 = vmatpush2.msra.mxu0 0.0
    %3649 = vmatprep.subr.mxu0 0.0
    %3650 = vmatpush2.msra.mxu0 0.0
    %3651 = vmatprep.subr.mxu0 0.0
    %3652 = vmatpush2.msra.mxu0 0.0
    %3653 = vmatprep.subr.mxu0 0.0
    %3654 = vmatpush2.msra.mxu0 0.0
    %3655 = vmatprep.subr.mxu0 0.0
    %3656 = vmatpush2.msra.mxu0 0.0
    %3657 = vmatprep.subr.mxu0 0.0
    %3658 = vmatpush2.msra.mxu0 0.0
    %3659 = vmatprep.subr.mxu0 0.0
    %3660 = vmatpush2.msra.mxu0 0.0
    %3661 = vmatprep.subr.mxu0 0.0
    %3662 = vmatpush2.msra.mxu0 0.0
    %3663 = vmatprep.subr.mxu0 0.0
    %3664 = vmatpush2.msra.mxu0 0.0
    %3665 = vmatprep.subr.mxu0 0.0
    %3666 = vmatpush2.msra.mxu0 0.0
    %3667 = vmatprep.subr.mxu0 0.0
    %3668 = vmatpush2.msra.mxu0 0.0
    %3669 = vmatprep.subr.mxu0 0.0
    %3670 = vmatpush2.msra.mxu0 0.0
    %3671 = vmatprep.subr.mxu0 0.0
    %3672 = vmatpush2.msra.mxu0 0.0
    %3673 = vmatprep.subr.mxu0 0.0
    %3674 = vmatpush2.msra.mxu0 0.0
    %3675 = vmatprep.mubr.f32.mxu0 0.0
    %3676 = vmatmul.mubr.f32.gmra.mxu0 %v3601
    %v3677 = vpop.f32.mrf.mxu0
    %v3678 = vadd.f32 0.0, %v3677
    %v3679 = vpop.f32.mrf.mxu0
    %3680 = vmatprep.mubr.f32.mxu0 0.0
    %3681 = vmatmul.mubr.f32.gmra.mxu0 %v3603
    %v3682 = vpop.f32.mrf.mxu0
    %v3683 = vadd.f32 0.0, %v3682
    %v3684 = vpop.f32.mrf.mxu0
    %3685 = vmatprep.mubr.f32.mxu0 0.0
    %3686 = vmatmul.mubr.f32.gmra.mxu0 %v3605
    %v3687 = vpop.f32.mrf.mxu0
    %v3688 = vadd.f32 0.0, %v3687
    %v3689 = vpop.f32.mrf.mxu0
    %3690 = vmatprep.mubr.f32.mxu0 0.0
    %3691 = vmatmul.mubr.f32.gmra.mxu0 %v3607
    %v3692 = vpop.f32.mrf.mxu0
    %v3693 = vadd.f32 0.0, %v3692
    %v3694 = vpop.f32.mrf.mxu0
    %3695 = vmatprep.mubr.f32.mxu0 0.0
    %3696 = vmatmul.mubr.f32.gmra.mxu0 %v3609
    %v3697 = vpop.f32.mrf.mxu0
    %v3698 = vadd.f32 0.0, %v3697
    %v3699 = vpop.f32.mrf.mxu0
    %3700 = vdwg.mxu0
    %v3701 = vcombine.low %v3349, %v3357
    %v3702 = vcombine.low %v3356, %v3358
    %v3704 = vunpack.c.l.s4 1983009808
    %v3705 = vunpack.c.0.s8 %v3704
    %v3706 = vlaneseq
    %v3707 = vshrl.u32 %v3706, 7
    %v3708 = vsub.s32 %v3705, %v3707
    %v3709 = vrot.slane %v3701, %v3708
    %v3711 = vunpack.c.l.s4 1983009808
    %v3712 = vunpack.c.0.s8 %v3711
    %v3713 = vlaneseq
    %v3714 = vshrl.u32 %v3713, 7
    %v3715 = vsub.s32 %v3712, %v3714
    %v3716 = vrot.slane %v3702, %v3715
    %v3717 = vcombine.low %v3709, %v3716
    %v3718 = vcombine.low %v3366, %v3374
    %v3719 = vcombine.low %v3373, %v3375
    %v3721 = vunpack.c.l.s4 1983009808
    %v3722 = vunpack.c.0.s8 %v3721
    %v3723 = vlaneseq
    %v3724 = vshrl.u32 %v3723, 7
    %v3725 = vsub.s32 %v3722, %v3724
    %v3726 = vrot.slane %v3718, %v3725
    %v3728 = vunpack.c.l.s4 1983009808
    %v3729 = vunpack.c.0.s8 %v3728
    %v3730 = vlaneseq
    %v3731 = vshrl.u32 %v3730, 7
    %v3732 = vsub.s32 %v3729, %v3731
    %v3733 = vrot.slane %v3719, %v3732
    %v3734 = vcombine.low %v3726, %v3733
    %v3735 = vcombine.low %v3383, %v3391
    %v3736 = vcombine.low %v3392, %v3400
    %v3738 = vunpack.c.l.s4 1983009808
    %v3739 = vunpack.c.0.s8 %v3738
    %v3740 = vlaneseq
    %v3741 = vshrl.u32 %v3740, 7
    %v3742 = vsub.s32 %v3739, %v3741
    %v3743 = vrot.slane %v3735, %v3742
    %v3745 = vunpack.c.l.s4 1983009808
    %v3746 = vunpack.c.0.s8 %v3745
    %v3747 = vlaneseq
    %v3748 = vshrl.u32 %v3747, 7
    %v3749 = vsub.s32 %v3746, %v3748
    %v3750 = vrot.slane %v3736, %v3749
    %v3751 = vcombine.low %v3743, %v3750
    %v3752 = vcombine.low %v3408, %v3407
    %v3753 = vcombine.low %v3409, %v3417
    %v3755 = vunpack.c.l.s4 1983009808
    %v3756 = vunpack.c.0.s8 %v3755
    %v3757 = vlaneseq
    %v3758 = vshrl.u32 %v3757, 7
    %v3759 = vsub.s32 %v3756, %v3758
    %v3760 = vrot.slane %v3752, %v3759
    %v3762 = vunpack.c.l.s4 1983009808
    %v3763 = vunpack.c.0.s8 %v3762
    %v3764 = vlaneseq
    %v3765 = vshrl.u32 %v3764, 7
    %v3766 = vsub.s32 %v3763, %v3765
    %v3767 = vrot.slane %v3753, %v3766
    %v3768 = vcombine.low %v3760, %v3767
    %v3769 = vcombine.low %v3425, %v3424
    %v3770 = vcombine.low %v3426, %v3433
    %v3772 = vunpack.c.l.s4 1983009808
    %v3773 = vunpack.c.0.s8 %v3772
    %v3774 = vlaneseq
    %v3775 = vshrl.u32 %v3774, 7
    %v3776 = vsub.s32 %v3773, %v3775
    %v3777 = vrot.slane %v3769, %v3776
    %v3779 = vunpack.c.l.s4 1983009808
    %v3780 = vunpack.c.0.s8 %v3779
    %v3781 = vlaneseq
    %v3782 = vshrl.u32 %v3781, 7
    %v3783 = vsub.s32 %v3780, %v3782
    %v3784 = vrot.slane %v3770, %v3783
    %v3785 = vcombine.low %v3777, %v3784
    %v3786 = vsel %vm3600, %v3717, 0
    %v3788 = vsel %vm3600, %v3734, 0
    %v3790 = vsel %vm3600, %v3751, 0
    %v3792 = vsel %vm3600, %v3768, 0
    %v3794 = vsel %vm3600, %v3785, 0
    %3796 = vmatprep.subr.mxu0 0.0
    %3797 = vmatpush1.msra.mxu0 0.0
    %3798 = vmatprep.subr.mxu0 0.0
    %3799 = vmatpush1.msra.mxu0 0.0
    %3800 = vmatprep.subr.mxu0 0.0
    %3801 = vmatpush1.msra.mxu0 0.0
    %3802 = vmatprep.subr.mxu0 0.0
    %3803 = vmatpush1.msra.mxu0 0.0
    %3804 = vmatprep.subr.mxu0 0.0
    %3805 = vmatpush1.msra.mxu0 0.0
    %3806 = vmatprep.subr.mxu0 0.0
    %3807 = vmatpush1.msra.mxu0 0.0
    %3808 = vmatprep.subr.mxu0 0.0
    %3809 = vmatpush1.msra.mxu0 0.0
    %3810 = vmatprep.subr.mxu0 0.0
    %3811 = vmatpush1.msra.mxu0 0.0
    %3812 = vmatprep.subr.mxu0 0.0
    %3813 = vmatpush1.msra.mxu0 %v3443
    %3814 = vmatprep.subr.mxu0 0.0
    %3815 = vmatpush1.msra.mxu0 %v3442
    %3816 = vmatprep.subr.mxu0 0.0
    %3817 = vmatpush1.msra.mxu0 %v3441
    %3818 = vmatprep.subr.mxu0 0.0
    %3819 = vmatpush1.msra.mxu0 %v3440
    %3820 = vmatprep.subr.mxu0 0.0
    %3821 = vmatpush1.msra.mxu0 %v3439
    %3822 = vmatprep.subr.mxu0 0.0
    %3823 = vmatpush1.msra.mxu0 %v3438
    %3824 = vmatprep.subr.mxu0 0.0
    %3825 = vmatpush1.msra.mxu0 %v3437
    %3826 = vmatprep.subr.mxu0 0.0
    %3827 = vmatpush1.msra.mxu0 %v3436
    %3828 = vmatprep.subr.mxu0 0.0
    %3829 = vmatpush2.msra.mxu0 0.0
    %3830 = vmatprep.subr.mxu0 0.0
    %3831 = vmatpush2.msra.mxu0 0.0
    %3832 = vmatprep.subr.mxu0 0.0
    %3833 = vmatpush2.msra.mxu0 0.0
    %3834 = vmatprep.subr.mxu0 0.0
    %3835 = vmatpush2.msra.mxu0 0.0
    %3836 = vmatprep.subr.mxu0 0.0
    %3837 = vmatpush2.msra.mxu0 0.0
    %3838 = vmatprep.subr.mxu0 0.0
    %3839 = vmatpush2.msra.mxu0 0.0
    %3840 = vmatprep.subr.mxu0 0.0
    %3841 = vmatpush2.msra.mxu0 0.0
    %3842 = vmatprep.subr.mxu0 0.0
    %3843 = vmatpush2.msra.mxu0 0.0
    %3844 = vmatprep.subr.mxu0 0.0
    %3845 = vmatpush2.msra.mxu0 0.0
    %3846 = vmatprep.subr.mxu0 0.0
    %3847 = vmatpush2.msra.mxu0 0.0
    %3848 = vmatprep.subr.mxu0 0.0
    %3849 = vmatpush2.msra.mxu0 0.0
    %3850 = vmatprep.subr.mxu0 0.0
    %3851 = vmatpush2.msra.mxu0 0.0
    %3852 = vmatprep.subr.mxu0 0.0
    %3853 = vmatpush2.msra.mxu0 0.0
    %3854 = vmatprep.subr.mxu0 0.0
    %3855 = vmatpush2.msra.mxu0 0.0
    %3856 = vmatprep.subr.mxu0 0.0
    %3857 = vmatpush2.msra.mxu0 0.0
    %3858 = vmatprep.subr.mxu0 0.0
    %3859 = vmatpush2.msra.mxu0 0.0
    %3860 = vmatprep.mubr.f32.mxu0 0.0
    %3861 = vmatmul.mubr.f32.gmra.mxu0 %v3786
    %v3862 = vpop.f32.mrf.mxu0
    %v3863 = vadd.f32 %v3678, %v3862
    %v3864 = vpop.f32.mrf.mxu0
    %3865 = vmatprep.mubr.f32.mxu0 0.0
    %3866 = vmatmul.mubr.f32.gmra.mxu0 %v3788
    %v3867 = vpop.f32.mrf.mxu0
    %v3868 = vadd.f32 %v3683, %v3867
    %v3869 = vpop.f32.mrf.mxu0
    %3870 = vmatprep.mubr.f32.mxu0 0.0
    %3871 = vmatmul.mubr.f32.gmra.mxu0 %v3790
    %v3872 = vpop.f32.mrf.mxu0
    %v3873 = vadd.f32 %v3688, %v3872
    %v3874 = vpop.f32.mrf.mxu0
    %3875 = vmatprep.mubr.f32.mxu0 0.0
    %3876 = vmatmul.mubr.f32.gmra.mxu0 %v3792
    %v3877 = vpop.f32.mrf.mxu0
    %v3878 = vadd.f32 %v3693, %v3877
    %v3879 = vpop.f32.mrf.mxu0
    %3880 = vmatprep.mubr.f32.mxu0 0.0
    %3881 = vmatmul.mubr.f32.gmra.mxu0 %v3794
    %v3882 = vpop.f32.mrf.mxu0
    %v3883 = vadd.f32 %v3698, %v3882
    %v3884 = vpop.f32.mrf.mxu0
    %3885 = vdwg.mxu0
    %s3886 = scalar_lea.vmem %s4, 128
    %v3887 = vld [vmem:[%s3886] sm:$0xff]
    %v3888 = vld [vmem:[%s3886 + $0x8] sm:$0xff]
    %v3889 = vld [vmem:[%s3886 + $0x10] sm:$0xff]
    %v3890 = vld [vmem:[%s3886 + $0x18] sm:$0xff]
    %v3891 = vld [vmem:[%s3886 + $0x20] sm:$0xff]
    %v3892 = vld [vmem:[%s3886 + $0x28] sm:$0xff]
    %v3893 = vld [vmem:[%s3886 + $0x30] sm:$0xff]
    %v3894 = vld [vmem:[%s3886 + $0x38] sm:$0xff]
    %v3895 = vcombine.low %v3357, %v3356
    %v3896 = vcombine.low %v3358, %v3366
    %v3898 = vunpack.c.l.s4 1983009808
    %v3899 = vunpack.c.0.s8 %v3898
    %v3900 = vlaneseq
    %v3901 = vshrl.u32 %v3900, 7
    %v3902 = vsub.s32 %v3899, %v3901
    %v3903 = vrot.slane %v3895, %v3902
    %v3905 = vunpack.c.l.s4 1983009808
    %v3906 = vunpack.c.0.s8 %v3905
    %v3907 = vlaneseq
    %v3908 = vshrl.u32 %v3907, 7
    %v3909 = vsub.s32 %v3906, %v3908
    %v3910 = vrot.slane %v3896, %v3909
    %v3911 = vcombine.low %v3903, %v3910
    %v3912 = vcombine.low %v3374, %v3373
    %v3913 = vcombine.low %v3375, %v3383
    %v3915 = vunpack.c.l.s4 1983009808
    %v3916 = vunpack.c.0.s8 %v3915
    %v3917 = vlaneseq
    %v3918 = vshrl.u32 %v3917, 7
    %v3919 = vsub.s32 %v3916, %v3918
    %v3920 = vrot.slane %v3912, %v3919
    %v3922 = vunpack.c.l.s4 1983009808
    %v3923 = vunpack.c.0.s8 %v3922
    %v3924 = vlaneseq
    %v3925 = vshrl.u32 %v3924, 7
    %v3926 = vsub.s32 %v3923, %v3925
    %v3927 = vrot.slane %v3913, %v3926
    %v3928 = vcombine.low %v3920, %v3927
    %v3929 = vcombine.low %v3391, %v3390
    %v3930 = vcombine.low %v3400, %v3408
    %v3932 = vunpack.c.l.s4 1983009808
    %v3933 = vunpack.c.0.s8 %v3932
    %v3934 = vlaneseq
    %v3935 = vshrl.u32 %v3934, 7
    %v3936 = vsub.s32 %v3933, %v3935
    %v3937 = vrot.slane %v3929, %v3936
    %v3939 = vunpack.c.l.s4 1983009808
    %v3940 = vunpack.c.0.s8 %v3939
    %v3941 = vlaneseq
    %v3942 = vshrl.u32 %v3941, 7
    %v3943 = vsub.s32 %v3940, %v3942
    %v3944 = vrot.slane %v3930, %v3943
    %v3945 = vcombine.low %v3937, %v3944
    %v3946 = vcombine.low %v3407, %v3409
    %v3947 = vcombine.low %v3417, %v3425
    %v3949 = vunpack.c.l.s4 1983009808
    %v3950 = vunpack.c.0.s8 %v3949
    %v3951 = vlaneseq
    %v3952 = vshrl.u32 %v3951, 7
    %v3953 = vsub.s32 %v3950, %v3952
    %v3954 = vrot.slane %v3946, %v3953
    %v3956 = vunpack.c.l.s4 1983009808
    %v3957 = vunpack.c.0.s8 %v3956
    %v3958 = vlaneseq
    %v3959 = vshrl.u32 %v3958, 7
    %v3960 = vsub.s32 %v3957, %v3959
    %v3961 = vrot.slane %v3947, %v3960
    %v3962 = vcombine.low %v3954, %v3961
    %v3963 = vcombine.low %v3424, %v3426
    %v3964 = vcombine.low %v3433, %v3434
    %v3966 = vunpack.c.l.s4 1983009808
    %v3967 = vunpack.c.0.s8 %v3966
    %v3968 = vlaneseq
    %v3969 = vshrl.u32 %v3968, 7
    %v3970 = vsub.s32 %v3967, %v3969
    %v3971 = vrot.slane %v3963, %v3970
    %v3973 = vunpack.c.l.s4 1983009808
    %v3974 = vunpack.c.0.s8 %v3973
    %v3975 = vlaneseq
    %v3976 = vshrl.u32 %v3975, 7
    %v3977 = vsub.s32 %v3974, %v3976
    %v3978 = vrot.slane %v3964, %v3977
    %v3979 = vcombine.low %v3971, %v3978
    %v3980 = vsel %vm3600, %v3911, 0
    %v3982 = vsel %vm3600, %v3928, 0
    %v3984 = vsel %vm3600, %v3945, 0
    %v3986 = vsel %vm3600, %v3962, 0
    %v3988 = vsel %vm3600, %v3979, 0
    %3990 = vmatprep.subr.mxu0 0.0
    %3991 = vmatpush1.msra.mxu0 0.0
    %3992 = vmatprep.subr.mxu0 0.0
    %3993 = vmatpush1.msra.mxu0 0.0
    %3994 = vmatprep.subr.mxu0 0.0
    %3995 = vmatpush1.msra.mxu0 0.0
    %3996 = vmatprep.subr.mxu0 0.0
    %3997 = vmatpush1.msra.mxu0 0.0
    %3998 = vmatprep.subr.mxu0 0.0
    %3999 = vmatpush1.msra.mxu0 0.0
    %4000 = vmatprep.subr.mxu0 0.0
    %4001 = vmatpush1.msra.mxu0 0.0
    %4002 = vmatprep.subr.mxu0 0.0
    %4003 = vmatpush1.msra.mxu0 0.0
    %4004 = vmatprep.subr.mxu0 0.0
    %4005 = vmatpush1.msra.mxu0 0.0
    %4006 = vmatprep.subr.mxu0 0.0
    %4007 = vmatpush1.msra.mxu0 %v3894
    %4008 = vmatprep.subr.mxu0 0.0
    %4009 = vmatpush1.msra.mxu0 %v3893
    %4010 = vmatprep.subr.mxu0 0.0
    %4011 = vmatpush1.msra.mxu0 %v3892
    %4012 = vmatprep.subr.mxu0 0.0
    %4013 = vmatpush1.msra.mxu0 %v3891
    %4014 = vmatprep.subr.mxu0 0.0
    %4015 = vmatpush1.msra.mxu0 %v3890
    %4016 = vmatprep.subr.mxu0 0.0
    %4017 = vmatpush1.msra.mxu0 %v3889
    %4018 = vmatprep.subr.mxu0 0.0
    %4019 = vmatpush1.msra.mxu0 %v3888
    %4020 = vmatprep.subr.mxu0 0.0
    %4021 = vmatpush1.msra.mxu0 %v3887
    %4022 = vmatprep.subr.mxu0 0.0
    %4023 = vmatpush2.msra.mxu0 0.0
    %4024 = vmatprep.subr.mxu0 0.0
    %4025 = vmatpush2.msra.mxu0 0.0
    %4026 = vmatprep.subr.mxu0 0.0
    %4027 = vmatpush2.msra.mxu0 0.0
    %4028 = vmatprep.subr.mxu0 0.0
    %4029 = vmatpush2.msra.mxu0 0.0
    %4030 = vmatprep.subr.mxu0 0.0
    %4031 = vmatpush2.msra.mxu0 0.0
    %4032 = vmatprep.subr.mxu0 0.0
    %4033 = vmatpush2.msra.mxu0 0.0
    %4034 = vmatprep.subr.mxu0 0.0
    %4035 = vmatpush2.msra.mxu0 0.0
    %4036 = vmatprep.subr.mxu0 0.0
    %4037 = vmatpush2.msra.mxu0 0.0
    %4038 = vmatprep.subr.mxu0 0.0
    %4039 = vmatpush2.msra.mxu0 0.0
    %4040 = vmatprep.subr.mxu0 0.0
    %4041 = vmatpush2.msra.mxu0 0.0
    %4042 = vmatprep.subr.mxu0 0.0
    %4043 = vmatpush2.msra.mxu0 0.0
    %4044 = vmatprep.subr.mxu0 0.0
    %4045 = vmatpush2.msra.mxu0 0.0
    %4046 = vmatprep.subr.mxu0 0.0
    %4047 = vmatpush2.msra.mxu0 0.0
    %4048 = vmatprep.subr.mxu0 0.0
    %4049 = vmatpush2.msra.mxu0 0.0
    %4050 = vmatprep.subr.mxu0 0.0
    %4051 = vmatpush2.msra.mxu0 0.0
    %4052 = vmatprep.subr.mxu0 0.0
    %4053 = vmatpush2.msra.mxu0 0.0
    %4054 = vmatprep.mubr.f32.mxu0 0.0
    %4055 = vmatmul.mubr.f32.gmra.mxu0 %v3980
    %v4056 = vpop.f32.mrf.mxu0
    %v4057 = vadd.f32 0.0, %v4056
    %v4058 = vpop.f32.mrf.mxu0
    %4059 = vmatprep.mubr.f32.mxu0 0.0
    %4060 = vmatmul.mubr.f32.gmra.mxu0 %v3982
    %v4061 = vpop.f32.mrf.mxu0
    %v4062 = vadd.f32 0.0, %v4061
    %v4063 = vpop.f32.mrf.mxu0
    %4064 = vmatprep.mubr.f32.mxu0 0.0
    %4065 = vmatmul.mubr.f32.gmra.mxu0 %v3984
    %v4066 = vpop.f32.mrf.mxu0
    %v4067 = vadd.f32 0.0, %v4066
    %v4068 = vpop.f32.mrf.mxu0
    %4069 = vmatprep.mubr.f32.mxu0 0.0
    %4070 = vmatmul.mubr.f32.gmra.mxu0 %v3986
    %v4071 = vpop.f32.mrf.mxu0
    %v4072 = vadd.f32 0.0, %v4071
    %v4073 = vpop.f32.mrf.mxu0
    %4074 = vmatprep.mubr.f32.mxu0 0.0
    %4075 = vmatmul.mubr.f32.gmra.mxu0 %v3988
    %v4076 = vpop.f32.mrf.mxu0
    %v4077 = vadd.f32 0.0, %v4076
    %v4078 = vpop.f32.mrf.mxu0
    %4079 = vdwg.mxu0
    %v4080 = vadd.f32 %v3863, %v4057
    %v4081 = vadd.f32 %v3868, %v4062
    %v4082 = vadd.f32 %v3873, %v4067
    %v4083 = vadd.f32 %v3878, %v4072
    %v4084 = vadd.f32 %v3883, %v4077
    %v4086 = vlaneseq
    %v4087 = vshrl.u32 %v4086, 7
    %v4088 = vsub.s32 0, %v4087
    %v4089 = vrot.slane %v3435, %v4088
    %v4091 = vadd.f32 %v4080, %v4089
    %v4092 = vadd.f32 %v4081, %v4089
    %v4093 = vadd.f32 %v4082, %v4089
    %v4094 = vadd.f32 %v4083, %v4089
    %v4095 = vadd.f32 %v4084, %v4089
    %v4096 = vmax.f32 %v4091, 0.0
    %v4097 = vmax.f32 %v4092, 0.0
    %v4098 = vmax.f32 %v4093, 0.0
    %v4099 = vmax.f32 %v4094, 0.0
    %v4100 = vmax.f32 %v4095, 0.0
    %v4106 = vcombine.high %v4096, %v4096
    %v4107 = vcombine.high %v4097, %v4097
    %v4108 = vcombine.high %v4098, %v4098
    %v4109 = vcombine.high %v4099, %v4099
    %v4110 = vcombine.high %v4100, %v4100
    %v4111 = vcombine.low %v4096, %v4106
    %v4112 = vcombine.low %v4108, %v4099
    %vm4115 = vcmask 1044480
    %v4116 = vsel %vm4115, %v4111, -inf
    %v4117 = vrot.slane %v4116, 4
    %v4118 = vmax.f32 %v4116, %v4117
    %v4119 = vrot.slane %v4118, 2
    %v4120 = vmax.f32 %v4118, %v4119
    %v4121 = vrot.slane %v4120, 1
    %v4122 = vmax.f32 %v4120, %v4121
    %v4123 = vsel %vm4115, %v4112, -inf
    %v4124 = vrot.slane %v4123, 4
    %v4125 = vmax.f32 %v4123, %v4124
    %v4126 = vrot.slane %v4125, 2
    %v4127 = vmax.f32 %v4125, %v4126
    %v4128 = vrot.slane %v4127, 1
    %v4129 = vmax.f32 %v4127, %v4128
    %v4130 = vcombine.low %v4106, %v4097
    %v4131 = vcombine.low %v4099, %v4109
    %vm4134 = vcmask 1045505
    %v4135 = vsel %vm4134, %v4130, -inf
    %v4136 = vrot.slane %v4135, 4
    %v4137 = vmax.f32 %v4135, %v4136
    %v4138 = vrot.slane %v4137, 2
    %v4139 = vmax.f32 %v4137, %v4138
    %v4140 = vrot.slane %v4139, 1
    %v4141 = vmax.f32 %v4139, %v4140
    %v4142 = vsel %vm4134, %v4131, -inf
    %v4143 = vrot.slane %v4142, 4
    %v4144 = vmax.f32 %v4142, %v4143
    %v4145 = vrot.slane %v4144, 2
    %v4146 = vmax.f32 %v4144, %v4145
    %v4147 = vrot.slane %v4146, 1
    %v4148 = vmax.f32 %v4146, %v4147
    %v4149 = vcombine.low %v4097, %v4107
    %v4150 = vcombine.low %v4109, %v4100
    %vm4153 = vcmask 1046530
    %v4154 = vsel %vm4153, %v4149, -inf
    %v4155 = vrot.slane %v4154, 4
    %v4156 = vmax.f32 %v4154, %v4155
    %v4157 = vrot.slane %v4156, 2
    %v4158 = vmax.f32 %v4156, %v4157
    %v4159 = vrot.slane %v4158, 1
    %v4160 = vmax.f32 %v4158, %v4159
    %v4161 = vsel %vm4153, %v4150, -inf
    %v4162 = vrot.slane %v4161, 4
    %v4163 = vmax.f32 %v4161, %v4162
    %v4164 = vrot.slane %v4163, 2
    %v4165 = vmax.f32 %v4163, %v4164
    %v4166 = vrot.slane %v4165, 1
    %v4167 = vmax.f32 %v4165, %v4166
    %v4168 = vcombine.low %v4107, %v4098
    %v4169 = vcombine.low %v4100, %v4110
    %vm4172 = vcmask 1047555
    %v4173 = vsel %vm4172, %v4168, -inf
    %v4174 = vrot.slane %v4173, 4
    %v4175 = vmax.f32 %v4173, %v4174
    %v4176 = vrot.slane %v4175, 2
    %v4177 = vmax.f32 %v4175, %v4176
    %v4178 = vrot.slane %v4177, 1
    %v4179 = vmax.f32 %v4177, %v4178
    %v4180 = vsel %vm4172, %v4169, -inf
    %v4181 = vrot.slane %v4180, 4
    %v4182 = vmax.f32 %v4180, %v4181
    %v4183 = vrot.slane %v4182, 2
    %v4184 = vmax.f32 %v4182, %v4183
    %v4185 = vrot.slane %v4184, 1
    %v4186 = vmax.f32 %v4184, %v4185
    %v4187 = vsel %vm901, %v4122, %v4141
    %v4188 = vsel %vm901, %v4129, %v4148
    %vm4189 = vcmask 1041408
    %v4190 = vsel %vm4189, %v4187, %v4160
    %v4191 = vsel %vm4189, %v4188, %v4167
    %vm4192 = vcmask 1042432
    %v4193 = vsel %vm4192, %v4190, %v4179
    %v4194 = vsel %vm4192, %v4191, %v4186
    %v4195 = vld [vmem:[%s5] sm:$0xff]
    %v4196 = vld [vmem:[%s5 + $0x8] sm:$0xff]
    %v4197 = vld [vmem:[%s5 + $0x10] sm:$0xff]
    %v4198 = vld [vmem:[%s5 + $0x18] sm:$0xff]
    %v4199 = vld [vmem:[%s5 + $0x20] sm:$0xff]
    %v4200 = vld [vmem:[%s5 + $0x28] sm:$0xff]
    %v4201 = vld [vmem:[%s5 + $0x30] sm:$0xff]
    %v4202 = vld [vmem:[%s5 + $0x38] sm:$0xff]
    %v4203 = vld [vmem:[%s5 + $0x40] sm:$0xff]
    %v4204 = vld [vmem:[%s5 + $0x48] sm:$0xff]
    %v4205 = vld [vmem:[%s5 + $0x50] sm:$0xff]
    %v4206 = vld [vmem:[%s5 + $0x58] sm:$0xff]
    %v4207 = vld [vmem:[%s5 + $0x60] sm:$0xff]
    %v4208 = vld [vmem:[%s5 + $0x68] sm:$0xff]
    %v4209 = vld [vmem:[%s5 + $0x70] sm:$0xff]
    %v4210 = vld [vmem:[%s5 + $0x78] sm:$0xff]
    %v4211 = vld [vmem:[%s5 + $0x80] sm:$0xff]
    %v4212 = vld [vmem:[%s5 + $0x88] sm:$0xff]
    %v4213 = vld [vmem:[%s5 + $0x90] sm:$0xff]
    %v4214 = vld [vmem:[%s5 + $0x98] sm:$0xff]
    %v4215 = vld [vmem:[%s5 + $0xa0] sm:$0xff]
    %v4216 = vld [vmem:[%s5 + $0xa8] sm:$0xff]
    %v4217 = vld [vmem:[%s5 + $0xb0] sm:$0xff]
    %v4218 = vld [vmem:[%s5 + $0xb8] sm:$0xff]
    %v4219 = vld [vmem:[%s5 + $0xc0] sm:$0xff]
    %v4220 = vld [vmem:[%s5 + $0xc8] sm:$0xff]
    %v4221 = vld [vmem:[%s5 + $0xd0] sm:$0xff]
    %v4222 = vld [vmem:[%s5 + $0xd8] sm:$0xff]
    %v4223 = vld [vmem:[%s5 + $0xe0] sm:$0xff]
    %v4224 = vld [vmem:[%s5 + $0xe8] sm:$0xff]
    %v4225 = vld [vmem:[%s5 + $0xf0] sm:$0xff]
    %v4226 = vld [vmem:[%s5 + $0xf8] sm:$0xff]
    %v4227 = vld [vmem:[%s5 + $0x100] sm:$0xff]
    %v4228 = vld [vmem:[%s5 + $0x108] sm:$0xff]
    %v4229 = vld [vmem:[%s5 + $0x110] sm:$0xff]
    %v4230 = vld [vmem:[%s5 + $0x118] sm:$0xff]
    %v4231 = vld [vmem:[%s5 + $0x120] sm:$0xff]
    %v4232 = vld [vmem:[%s5 + $0x128] sm:$0xff]
    %v4233 = vld [vmem:[%s5 + $0x130] sm:$0xff]
    %v4234 = vld [vmem:[%s5 + $0x138] sm:$0xff]
    %v4235 = vld [vmem:[%s5 + $0x140] sm:$0xff]
    %v4236 = vld [vmem:[%s5 + $0x148] sm:$0xff]
    %v4237 = vld [vmem:[%s5 + $0x150] sm:$0xff]
    %v4238 = vld [vmem:[%s5 + $0x158] sm:$0xff]
    %v4239 = vld [vmem:[%s5 + $0x160] sm:$0xff]
    %v4240 = vld [vmem:[%s5 + $0x168] sm:$0xff]
    %v4241 = vld [vmem:[%s5 + $0x170] sm:$0xff]
    %v4242 = vld [vmem:[%s5 + $0x178] sm:$0xff]
    %v4243 = vld [vmem:[%s9 + $0x4] sm:$0x7]
    %v4245 = vlaneseq
    %v4246 = vshrl.u32 %v4245, 7
    %v4247 = vsub.s32 0, %v4246
    %v4248 = vrot.slane %v4243, %v4247
    %v4249 = vlaneseq
    %v4250 = vshrl.u32 %v4249, 7
    %v4251 = vsub.s32 1, %v4250
    %v4252 = vrot.slane %v4243, %v4251
    %v4253 = vlaneseq
    %v4254 = vshrl.u32 %v4253, 7
    %v4255 = vsub.s32 2, %v4254
    %v4256 = vrot.slane %v4243, %v4255
    %v4262 = vcombine.low %v4193, %v4194
    %4264 = vmatprep.subr.mxu0 %v4241
    %4265 = vmatpush1.msra.mxu0 %v4240
    %4266 = vmatprep.subr.mxu0 %v4238
    %4267 = vmatpush1.msra.mxu0 %v4237
    %4268 = vmatprep.subr.mxu0 %v4235
    %4269 = vmatpush1.msra.mxu0 %v4234
    %4270 = vmatprep.subr.mxu0 %v4232
    %4271 = vmatpush1.msra.mxu0 %v4231
    %4272 = vmatprep.subr.mxu0 %v4229
    %4273 = vmatpush1.msra.mxu0 %v4228
    %4274 = vmatprep.subr.mxu0 %v4226
    %4275 = vmatpush1.msra.mxu0 %v4225
    %4276 = vmatprep.subr.mxu0 %v4223
    %4277 = vmatpush1.msra.mxu0 %v4222
    %4278 = vmatprep.subr.mxu0 %v4220
    %4279 = vmatpush1.msra.mxu0 %v4219
    %4280 = vmatprep.subr.mxu0 %v4217
    %4281 = vmatpush1.msra.mxu0 %v4216
    %4282 = vmatprep.subr.mxu0 %v4214
    %4283 = vmatpush1.msra.mxu0 %v4213
    %4284 = vmatprep.subr.mxu0 %v4211
    %4285 = vmatpush1.msra.mxu0 %v4210
    %4286 = vmatprep.subr.mxu0 %v4208
    %4287 = vmatpush1.msra.mxu0 %v4207
    %4288 = vmatprep.subr.mxu0 %v4205
    %4289 = vmatpush1.msra.mxu0 %v4204
    %4290 = vmatprep.subr.mxu0 %v4202
    %4291 = vmatpush1.msra.mxu0 %v4201
    %4292 = vmatprep.subr.mxu0 %v4199
    %4293 = vmatpush1.msra.mxu0 %v4198
    %4294 = vmatprep.subr.mxu0 %v4196
    %4295 = vmatpush1.msra.mxu0 %v4195
    %4296 = vmatprep.subr.mxu0 0.0
    %4297 = vmatpush2.msra.mxu0 0.0
    %4298 = vmatprep.subr.mxu0 0.0
    %4299 = vmatpush2.msra.mxu0 0.0
    %4300 = vmatprep.subr.mxu0 0.0
    %4301 = vmatpush2.msra.mxu0 0.0
    %4302 = vmatprep.subr.mxu0 0.0
    %4303 = vmatpush2.msra.mxu0 0.0
    %4304 = vmatprep.subr.mxu0 0.0
    %4305 = vmatpush2.msra.mxu0 0.0
    %4306 = vmatprep.subr.mxu0 0.0
    %4307 = vmatpush2.msra.mxu0 0.0
    %4308 = vmatprep.subr.mxu0 0.0
    %4309 = vmatpush2.msra.mxu0 0.0
    %4310 = vmatprep.subr.mxu0 0.0
    %4311 = vmatpush2.msra.mxu0 0.0
    %4312 = vmatprep.subr.mxu0 0.0
    %4313 = vmatpush2.msra.mxu0 0.0
    %4314 = vmatprep.subr.mxu0 0.0
    %4315 = vmatpush2.msra.mxu0 0.0
    %4316 = vmatprep.subr.mxu0 0.0
    %4317 = vmatpush2.msra.mxu0 0.0
    %4318 = vmatprep.subr.mxu0 0.0
    %4319 = vmatpush2.msra.mxu0 0.0
    %4320 = vmatprep.subr.mxu0 0.0
    %4321 = vmatpush2.msra.mxu0 0.0
    %4322 = vmatprep.subr.mxu0 0.0
    %4323 = vmatpush2.msra.mxu0 0.0
    %4324 = vmatprep.subr.mxu0 0.0
    %4325 = vmatpush2.msra.mxu0 0.0
    %4326 = vmatprep.subr.mxu0 0.0
    %4327 = vmatpush2.msra.mxu0 0.0
    %4328 = vmatprep.mubr.f32.mxu0 0.0
    %4329 = vmatmul.mubr.f32.gmra.mxu0 %v4262
    %v4330 = vpop.f32.mrf.mxu0
    %v4331 = vadd.f32 %v4248, %v4330
    %v4332 = vpop.f32.mrf.mxu0
    %v4333 = vadd.f32 %v4252, %v4332
    %4334 = vdwg.mxu0
    %4335 = vmatprep.subr.mxu0 0.0
    %4336 = vmatpush1.msra.mxu0 %v4242
    %4337 = vmatprep.subr.mxu0 0.0
    %4338 = vmatpush1.msra.mxu0 %v4239
    %4339 = vmatprep.subr.mxu0 0.0
    %4340 = vmatpush1.msra.mxu0 %v4236
    %4341 = vmatprep.subr.mxu0 0.0
    %4342 = vmatpush1.msra.mxu0 %v4233
    %4343 = vmatprep.subr.mxu0 0.0
    %4344 = vmatpush1.msra.mxu0 %v4230
    %4345 = vmatprep.subr.mxu0 0.0
    %4346 = vmatpush1.msra.mxu0 %v4227
    %4347 = vmatprep.subr.mxu0 0.0
    %4348 = vmatpush1.msra.mxu0 %v4224
    %4349 = vmatprep.subr.mxu0 0.0
    %4350 = vmatpush1.msra.mxu0 %v4221
    %4351 = vmatprep.subr.mxu0 0.0
    %4352 = vmatpush1.msra.mxu0 %v4218
    %4353 = vmatprep.subr.mxu0 0.0
    %4354 = vmatpush1.msra.mxu0 %v4215
    %4355 = vmatprep.subr.mxu0 0.0
    %4356 = vmatpush1.msra.mxu0 %v4212
    %4357 = vmatprep.subr.mxu0 0.0
    %4358 = vmatpush1.msra.mxu0 %v4209
    %4359 = vmatprep.subr.mxu0 0.0
    %4360 = vmatpush1.msra.mxu0 %v4206
    %4361 = vmatprep.subr.mxu0 0.0
    %4362 = vmatpush1.msra.mxu0 %v4203
    %4363 = vmatprep.subr.mxu0 0.0
    %4364 = vmatpush1.msra.mxu0 %v4200
    %4365 = vmatprep.subr.mxu0 0.0
    %4366 = vmatpush1.msra.mxu0 %v4197
    %4367 = vmatprep.subr.mxu0 0.0
    %4368 = vmatpush2.msra.mxu0 0.0
    %4369 = vmatprep.subr.mxu0 0.0
    %4370 = vmatpush2.msra.mxu0 0.0
    %4371 = vmatprep.subr.mxu0 0.0
    %4372 = vmatpush2.msra.mxu0 0.0
    %4373 = vmatprep.subr.mxu0 0.0
    %4374 = vmatpush2.msra.mxu0 0.0
    %4375 = vmatprep.subr.mxu0 0.0
    %4376 = vmatpush2.msra.mxu0 0.0
    %4377 = vmatprep.subr.mxu0 0.0
    %4378 = vmatpush2.msra.mxu0 0.0
    %4379 = vmatprep.subr.mxu0 0.0
    %4380 = vmatpush2.msra.mxu0 0.0
    %4381 = vmatprep.subr.mxu0 0.0
    %4382 = vmatpush2.msra.mxu0 0.0
    %4383 = vmatprep.subr.mxu0 0.0
    %4384 = vmatpush2.msra.mxu0 0.0
    %4385 = vmatprep.subr.mxu0 0.0
    %4386 = vmatpush2.msra.mxu0 0.0
    %4387 = vmatprep.subr.mxu0 0.0
    %4388 = vmatpush2.msra.mxu0 0.0
    %4389 = vmatprep.subr.mxu0 0.0
    %4390 = vmatpush2.msra.mxu0 0.0
    %4391 = vmatprep.subr.mxu0 0.0
    %4392 = vmatpush2.msra.mxu0 0.0
    %4393 = vmatprep.subr.mxu0 0.0
    %4394 = vmatpush2.msra.mxu0 0.0
    %4395 = vmatprep.subr.mxu0 0.0
    %4396 = vmatpush2.msra.mxu0 0.0
    %4397 = vmatprep.subr.mxu0 0.0
    %4398 = vmatpush2.msra.mxu0 0.0
    %4399 = vmatprep.mubr.f32.mxu0 0.0
    %4400 = vmatmul.mubr.f32.gmra.mxu0 %v4262
    %v4401 = vpop.f32.mrf.mxu0
    %v4402 = vadd.f32 %v4256, %v4401
    %v4403 = vpop.f32.mrf.mxu0
    %4404 = vdwg.mxu0
    %v4406 = vcombine.high %v4331, %v4331
    %v4408 = vunpack.c.l.s4 1966171168
    %v4409 = vunpack.c.0.s8 %v4408
    %v4410 = vlaneseq
    %v4411 = vshrl.u32 %v4410, 7
    %v4412 = vsub.s32 %v4409, %v4411
    %v4413 = vrot.slane %v4331, %v4412
    %v4415 = vunpack.c.l.s4 1966171168
    %v4416 = vunpack.c.0.s8 %v4415
    %v4417 = vlaneseq
    %v4418 = vshrl.u32 %v4417, 7
    %v4419 = vsub.s32 %v4416, %v4418
    %v4420 = vrot.slane %v4406, %v4419
    %v4421 = vcombine.high %v4413, %v4413
    %v4422 = vcombine.high %v4420, %v4420
    %v4424 = vunpack.c.l.s4 1966171168
    %v4425 = vunpack.c.0.s8 %v4424
    %v4426 = vlaneseq
    %v4427 = vshrl.u32 %v4426, 7
    %v4428 = vsub.s32 %v4425, %v4427
    %v4429 = vrot.slane %v4413, %v4428
    %v4431 = vunpack.c.l.s4 1966171168
    %v4432 = vunpack.c.0.s8 %v4431
    %v4433 = vlaneseq
    %v4434 = vshrl.u32 %v4433, 7
    %v4435 = vsub.s32 %v4432, %v4434
    %v4436 = vrot.slane %v4420, %v4435
    %v4438 = vunpack.c.l.s4 1966171168
    %v4439 = vunpack.c.0.s8 %v4438
    %v4440 = vlaneseq
    %v4441 = vshrl.u32 %v4440, 7
    %v4442 = vsub.s32 %v4439, %v4441
    %v4443 = vrot.slane %v4421, %v4442
    %v4445 = vunpack.c.l.s4 1966171168
    %v4446 = vunpack.c.0.s8 %v4445
    %v4447 = vlaneseq
    %v4448 = vshrl.u32 %v4447, 7
    %v4449 = vsub.s32 %v4446, %v4448
    %v4450 = vrot.slane %v4422, %v4449
    %v4451 = vcombine.high %v4429, %v4429
    %v4452 = vcombine.high %v4436, %v4436
    %v4453 = vcombine.high %v4443, %v4443
    %v4454 = vcombine.high %v4450, %v4450
    %v4456 = vcombine.high %v4333, %v4333
    %v4458 = vlaneseq
    %v4459 = vshrl.u32 %v4458, 7
    %v4460 = vsub.s32 0, %v4459
    %v4461 = vrot.slane %v4429, %v4460
    %v4462 = vlaneseq
    %v4463 = vshrl.u32 %v4462, 7
    %v4464 = vsub.s32 0, %v4463
    %v4465 = vrot.slane %v4443, %v4464
    %v4466 = vlaneseq
    %v4467 = vshrl.u32 %v4466, 7
    %v4468 = vsub.s32 0, %v4467
    %v4469 = vrot.slane %v4451, %v4468
    %v4470 = vlaneseq
    %v4471 = vshrl.u32 %v4470, 7
    %v4472 = vsub.s32 0, %v4471
    %v4473 = vrot.slane %v4453, %v4472
    %v4474 = vlaneseq
    %v4475 = vshrl.u32 %v4474, 7
    %v4476 = vsub.s32 0, %v4475
    %v4477 = vrot.slane %v4436, %v4476
    %v4478 = vlaneseq
    %v4479 = vshrl.u32 %v4478, 7
    %v4480 = vsub.s32 0, %v4479
    %v4481 = vrot.slane %v4450, %v4480
    %v4482 = vlaneseq
    %v4483 = vshrl.u32 %v4482, 7
    %v4484 = vsub.s32 0, %v4483
    %v4485 = vrot.slane %v4452, %v4484
    %v4486 = vlaneseq
    %v4487 = vshrl.u32 %v4486, 7
    %v4488 = vsub.s32 0, %v4487
    %v4489 = vrot.slane %v4454, %v4488
    %v4498 = vmul.f32 %v4461, %v4333
    %v4499 = vmul.f32 %v4465, %v4333
    %v4500 = vmul.f32 %v4469, %v4333
    %v4501 = vmul.f32 %v4473, %v4333
    %v4502 = vmul.f32 %v4477, %v4456
    %v4503 = vmul.f32 %v4481, %v4456
    %v4504 = vmul.f32 %v4485, %v4456
    %v4505 = vmul.f32 %v4489, %v4456
    %v4506 = vld [vmem:[%s7] sm:$0xff]
    %v4507 = vld [vmem:[%s7 + $0x8] sm:$0xff]
    %v4508 = vld [vmem:[%s7 + $0x10] sm:$0xff]
    %v4509 = vld [vmem:[%s7 + $0x18] sm:$0xff]
    %v4510 = vld [vmem:[%s7 + $0x20] sm:$0xff]
    %v4511 = vld [vmem:[%s7 + $0x28] sm:$0xff]
    %v4512 = vld [vmem:[%s7 + $0x30] sm:$0xff]
    %v4513 = vld [vmem:[%s7 + $0x38] sm:$0xff]
    %v4514 = vld [vmem:[%s7 + $0x40] sm:$0xff]
    %v4515 = vld [vmem:[%s7 + $0x48] sm:$0xff]
    %v4516 = vld [vmem:[%s7 + $0x50] sm:$0xff]
    %v4517 = vld [vmem:[%s7 + $0x58] sm:$0xff]
    %v4518 = vld [vmem:[%s7 + $0x60] sm:$0xff]
    %v4519 = vld [vmem:[%s7 + $0x68] sm:$0xff]
    %v4520 = vld [vmem:[%s7 + $0x70] sm:$0xff]
    %v4521 = vld [vmem:[%s7 + $0x78] sm:$0xff]
    %v4530 = vcombine.low %v4498, %v4499
    %v4531 = vcombine.low %v4500, %v4501
    %v4532 = vcombine.low %v4502, %v4503
    %v4533 = vcombine.low %v4504, %v4505
    %4538 = vmatprep.subr.mxu0 0.0
    %4539 = vmatpush1.msra.mxu0 %v4521
    %4540 = vmatprep.subr.mxu0 0.0
    %4541 = vmatpush1.msra.mxu0 %v4520
    %4542 = vmatprep.subr.mxu0 0.0
    %4543 = vmatpush1.msra.mxu0 %v4519
    %4544 = vmatprep.subr.mxu0 0.0
    %4545 = vmatpush1.msra.mxu0 %v4518
    %4546 = vmatprep.subr.mxu0 0.0
    %4547 = vmatpush1.msra.mxu0 %v4517
    %4548 = vmatprep.subr.mxu0 0.0
    %4549 = vmatpush1.msra.mxu0 %v4516
    %4550 = vmatprep.subr.mxu0 0.0
    %4551 = vmatpush1.msra.mxu0 %v4515
    %4552 = vmatprep.subr.mxu0 0.0
    %4553 = vmatpush1.msra.mxu0 %v4514
    %4554 = vmatprep.subr.mxu0 0.0
    %4555 = vmatpush1.msra.mxu0 %v4513
    %4556 = vmatprep.subr.mxu0 0.0
    %4557 = vmatpush1.msra.mxu0 %v4512
    %4558 = vmatprep.subr.mxu0 0.0
    %4559 = vmatpush1.msra.mxu0 %v4511
    %4560 = vmatprep.subr.mxu0 0.0
    %4561 = vmatpush1.msra.mxu0 %v4510
    %4562 = vmatprep.subr.mxu0 0.0
    %4563 = vmatpush1.msra.mxu0 %v4509
    %4564 = vmatprep.subr.mxu0 0.0
    %4565 = vmatpush1.msra.mxu0 %v4508
    %4566 = vmatprep.subr.mxu0 0.0
    %4567 = vmatpush1.msra.mxu0 %v4507
    %4568 = vmatprep.subr.mxu0 0.0
    %4569 = vmatpush1.msra.mxu0 %v4506
    %4570 = vmatprep.subr.mxu0 0.0
    %4571 = vmatpush2.msra.mxu0 0.0
    %4572 = vmatprep.subr.mxu0 0.0
    %4573 = vmatpush2.msra.mxu0 0.0
    %4574 = vmatprep.subr.mxu0 0.0
    %4575 = vmatpush2.msra.mxu0 0.0
    %4576 = vmatprep.subr.mxu0 0.0
    %4577 = vmatpush2.msra.mxu0 0.0
    %4578 = vmatprep.subr.mxu0 0.0
    %4579 = vmatpush2.msra.mxu0 0.0
    %4580 = vmatprep.subr.mxu0 0.0
    %4581 = vmatpush2.msra.mxu0 0.0
    %4582 = vmatprep.subr.mxu0 0.0
    %4583 = vmatpush2.msra.mxu0 0.0
    %4584 = vmatprep.subr.mxu0 0.0
    %4585 = vmatpush2.msra.mxu0 0.0
    %4586 = vmatprep.subr.mxu0 0.0
    %4587 = vmatpush2.msra.mxu0 0.0
    %4588 = vmatprep.subr.mxu0 0.0
    %4589 = vmatpush2.msra.mxu0 0.0
    %4590 = vmatprep.subr.mxu0 0.0
    %4591 = vmatpush2.msra.mxu0 0.0
    %4592 = vmatprep.subr.mxu0 0.0
    %4593 = vmatpush2.msra.mxu0 0.0
    %4594 = vmatprep.subr.mxu0 0.0
    %4595 = vmatpush2.msra.mxu0 0.0
    %4596 = vmatprep.subr.mxu0 0.0
    %4597 = vmatpush2.msra.mxu0 0.0
    %4598 = vmatprep.subr.mxu0 0.0
    %4599 = vmatpush2.msra.mxu0 0.0
    %4600 = vmatprep.subr.mxu0 0.0
    %4601 = vmatpush2.msra.mxu0 0.0
    %4602 = vmatprep.mubr.f32.mxu0 0.0
    %4603 = vmatmul.mubr.f32.gmra.mxu0 %v4530
    %v4604 = vpop.f32.mrf.mxu0
    %v4605 = vadd.f32 0.0, %v4604
    %v4606 = vpop.f32.mrf.mxu0
    %4607 = vmatprep.mubr.f32.mxu0 0.0
    %4608 = vmatmul.mubr.f32.gmra.mxu0 %v4531
    %v4609 = vpop.f32.mrf.mxu0
    %v4610 = vadd.f32 0.0, %v4609
    %v4611 = vpop.f32.mrf.mxu0
    %4612 = vmatprep.mubr.f32.mxu0 0.0
    %4613 = vmatmul.mubr.f32.gmra.mxu0 %v4532
    %v4614 = vpop.f32.mrf.mxu0
    %v4615 = vadd.f32 0.0, %v4614
    %v4616 = vpop.f32.mrf.mxu0
    %4617 = vmatprep.mubr.f32.mxu0 0.0
    %4618 = vmatmul.mubr.f32.gmra.mxu0 %v4533
    %v4619 = vpop.f32.mrf.mxu0
    %v4620 = vadd.f32 0.0, %v4619
    %v4621 = vpop.f32.mrf.mxu0
    %4622 = vdwg.mxu0
    %v4627 = vcombine.high %v4605, %v4605
    %v4628 = vcombine.high %v4610, %v4610
    %v4629 = vcombine.high %v4615, %v4615
    %v4630 = vcombine.high %v4620, %v4620
    %vm4635 = vcmask 60416
    %v4636 = vsel %vm4635, %v4605, -inf
    %v4637 = vrot.slane %v4636, 4
    %v4638 = vmax.f32 %v4636, %v4637
    %v4639 = vrot.slane %v4638, 2
    %v4640 = vmax.f32 %v4638, %v4639
    %v4641 = vrot.slane %v4640, 1
    %v4642 = vmax.f32 %v4640, %v4641
    %v4643 = vsel %vm4635, %v4627, -inf
    %v4644 = vrot.slane %v4643, 4
    %v4645 = vmax.f32 %v4643, %v4644
    %v4646 = vrot.slane %v4645, 2
    %v4647 = vmax.f32 %v4645, %v4646
    %v4648 = vrot.slane %v4647, 1
    %v4649 = vmax.f32 %v4647, %v4648
    %v4650 = vsel %vm4635, %v4610, -inf
    %v4651 = vrot.slane %v4650, 4
    %v4652 = vmax.f32 %v4650, %v4651
    %v4653 = vrot.slane %v4652, 2
    %v4654 = vmax.f32 %v4652, %v4653
    %v4655 = vrot.slane %v4654, 1
    %v4656 = vmax.f32 %v4654, %v4655
    %v4657 = vsel %vm4635, %v4628, -inf
    %v4658 = vrot.slane %v4657, 4
    %v4659 = vmax.f32 %v4657, %v4658
    %v4660 = vrot.slane %v4659, 2
    %v4661 = vmax.f32 %v4659, %v4660
    %v4662 = vrot.slane %v4661, 1
    %v4663 = vmax.f32 %v4661, %v4662
    %v4664 = vsel %vm4635, %v4615, -inf
    %v4665 = vrot.slane %v4664, 4
    %v4666 = vmax.f32 %v4664, %v4665
    %v4667 = vrot.slane %v4666, 2
    %v4668 = vmax.f32 %v4666, %v4667
    %v4669 = vrot.slane %v4668, 1
    %v4670 = vmax.f32 %v4668, %v4669
    %v4671 = vsel %vm4635, %v4629, -inf
    %v4672 = vrot.slane %v4671, 4
    %v4673 = vmax.f32 %v4671, %v4672
    %v4674 = vrot.slane %v4673, 2
    %v4675 = vmax.f32 %v4673, %v4674
    %v4676 = vrot.slane %v4675, 1
    %v4677 = vmax.f32 %v4675, %v4676
    %v4678 = vsel %vm4635, %v4620, -inf
    %v4679 = vrot.slane %v4678, 4
    %v4680 = vmax.f32 %v4678, %v4679
    %v4681 = vrot.slane %v4680, 2
    %v4682 = vmax.f32 %v4680, %v4681
    %v4683 = vrot.slane %v4682, 1
    %v4684 = vmax.f32 %v4682, %v4683
    %v4685 = vsel %vm4635, %v4630, -inf
    %v4686 = vrot.slane %v4685, 4
    %v4687 = vmax.f32 %v4685, %v4686
    %v4688 = vrot.slane %v4687, 2
    %v4689 = vmax.f32 %v4687, %v4688
    %v4690 = vrot.slane %v4689, 1
    %v4691 = vmax.f32 %v4689, %v4690
    %v4692 = vsub.f32 %v4605, %v4642
    %v4693 = vsub.f32 %v4627, %v4649
    %v4694 = vsub.f32 %v4610, %v4656
    %v4695 = vsub.f32 %v4628, %v4663
    %v4696 = vsub.f32 %v4615, %v4670
    %v4697 = vsub.f32 %v4629, %v4677
    %v4698 = vsub.f32 %v4620, %v4684
    %v4699 = vsub.f32 %v4630, %v4691
    %v4700 = vmul.f32 %v4692, 1.442695
    %v4701 = vpow.pop %v4700
    %v4702 = vmul.f32 %v4693, 1.442695
    %v4703 = vpow.pop %v4702
    %v4704 = vmul.f32 %v4694, 1.442695
    %v4705 = vpow.pop %v4704
    %v4706 = vmul.f32 %v4695, 1.442695
    %v4707 = vpow.pop %v4706
    %v4708 = vmul.f32 %v4696, 1.442695
    %v4709 = vpow.pop %v4708
    %v4710 = vmul.f32 %v4697, 1.442695
    %v4711 = vpow.pop %v4710
    %v4712 = vmul.f32 %v4698, 1.442695
    %v4713 = vpow.pop %v4712
    %v4714 = vmul.f32 %v4699, 1.442695
    %v4715 = vpow.pop %v4714
    %v4716 = vsel %vm4635, %v4701, 0.0
    %v4717 = vrot.slane %v4716, 4
    %v4718 = vadd.f32 %v4716, %v4717
    %v4719 = vrot.slane %v4718, 2
    %v4720 = vadd.f32 %v4718, %v4719
    %v4721 = vrot.slane %v4720, 1
    %v4722 = vadd.f32 %v4720, %v4721
    %v4723 = vsel %vm4635, %v4703, 0.0
    %v4724 = vrot.slane %v4723, 4
    %v4725 = vadd.f32 %v4723, %v4724
    %v4726 = vrot.slane %v4725, 2
    %v4727 = vadd.f32 %v4725, %v4726
    %v4728 = vrot.slane %v4727, 1
    %v4729 = vadd.f32 %v4727, %v4728
    %v4730 = vsel %vm4635, %v4705, 0.0
    %v4731 = vrot.slane %v4730, 4
    %v4732 = vadd.f32 %v4730, %v4731
    %v4733 = vrot.slane %v4732, 2
    %v4734 = vadd.f32 %v4732, %v4733
    %v4735 = vrot.slane %v4734, 1
    %v4736 = vadd.f32 %v4734, %v4735
    %v4737 = vsel %vm4635, %v4707, 0.0
    %v4738 = vrot.slane %v4737, 4
    %v4739 = vadd.f32 %v4737, %v4738
    %v4740 = vrot.slane %v4739, 2
    %v4741 = vadd.f32 %v4739, %v4740
    %v4742 = vrot.slane %v4741, 1
    %v4743 = vadd.f32 %v4741, %v4742
    %v4744 = vsel %vm4635, %v4709, 0.0
    %v4745 = vrot.slane %v4744, 4
    %v4746 = vadd.f32 %v4744, %v4745
    %v4747 = vrot.slane %v4746, 2
    %v4748 = vadd.f32 %v4746, %v4747
    %v4749 = vrot.slane %v4748, 1
    %v4750 = vadd.f32 %v4748, %v4749
    %v4751 = vsel %vm4635, %v4711, 0.0
    %v4752 = vrot.slane %v4751, 4
    %v4753 = vadd.f32 %v4751, %v4752
    %v4754 = vrot.slane %v4753, 2
    %v4755 = vadd.f32 %v4753, %v4754
    %v4756 = vrot.slane %v4755, 1
    %v4757 = vadd.f32 %v4755, %v4756
    %v4758 = vsel %vm4635, %v4713, 0.0
    %v4759 = vrot.slane %v4758, 4
    %v4760 = vadd.f32 %v4758, %v4759
    %v4761 = vrot.slane %v4760, 2
    %v4762 = vadd.f32 %v4760, %v4761
    %v4763 = vrot.slane %v4762, 1
    %v4764 = vadd.f32 %v4762, %v4763
    %v4765 = vsel %vm4635, %v4715, 0.0
    %v4766 = vrot.slane %v4765, 4
    %v4767 = vadd.f32 %v4765, %v4766
    %v4768 = vrot.slane %v4767, 2
    %v4769 = vadd.f32 %v4767, %v4768
    %v4770 = vrot.slane %v4769, 1
    %v4771 = vadd.f32 %v4769, %v4770
    %v4772 = vrcp.pop %v4722
    %v4773 = vmul.f32 %v4701, %v4772
    %v4774 = vrcp.pop %v4729
    %v4775 = vmul.f32 %v4703, %v4774
    %v4776 = vrcp.pop %v4736
    %v4777 = vmul.f32 %v4705, %v4776
    %v4778 = vrcp.pop %v4743
    %v4779 = vmul.f32 %v4707, %v4778
    %v4780 = vrcp.pop %v4750
    %v4781 = vmul.f32 %v4709, %v4780
    %v4782 = vrcp.pop %v4757
    %v4783 = vmul.f32 %v4711, %v4782
    %v4784 = vrcp.pop %v4764
    %v4785 = vmul.f32 %v4713, %v4784
    %v4786 = vrcp.pop %v4771
    %v4787 = vmul.f32 %v4715, %v4786
    %v4788 = vld [vmem:[%s8] sm:$0xff]
    %v4797 = vcombine.low %v4773, %v4775
    %v4798 = vcombine.low %v4777, %v4779
    %v4799 = vcombine.low %v4781, %v4783
    %v4800 = vcombine.low %v4785, %v4787
    %vm4801 = vcmask 64512
    %v4802 = vsel %vm4801, %v4797, 0
    %v4804 = vsel %vm4801, %v4798, 0
    %v4806 = vsel %vm4801, %v4799, 0
    %v4808 = vsel %vm4801, %v4800, 0
    %4810 = vmatprep.subr.mxu0 0.0
    %4811 = vmatpush1.msra.mxu0 0.0
    %4812 = vmatprep.subr.mxu0 0.0
    %4813 = vmatpush1.msra.mxu0 0.0
    %4814 = vmatprep.subr.mxu0 0.0
    %4815 = vmatpush1.msra.mxu0 0.0
    %4816 = vmatprep.subr.mxu0 0.0
    %4817 = vmatpush1.msra.mxu0 0.0
    %4818 = vmatprep.subr.mxu0 0.0
    %4819 = vmatpush1.msra.mxu0 0.0
    %4820 = vmatprep.subr.mxu0 0.0
    %4821 = vmatpush1.msra.mxu0 0.0
    %4822 = vmatprep.subr.mxu0 0.0
    %4823 = vmatpush1.msra.mxu0 0.0
    %4824 = vmatprep.subr.mxu0 0.0
    %4825 = vmatpush1.msra.mxu0 0.0
    %4826 = vmatprep.subr.mxu0 0.0
    %4827 = vmatpush1.msra.mxu0 0.0
    %4828 = vmatprep.subr.mxu0 0.0
    %4829 = vmatpush1.msra.mxu0 0.0
    %4830 = vmatprep.subr.mxu0 0.0
    %4831 = vmatpush1.msra.mxu0 0.0
    %4832 = vmatprep.subr.mxu0 0.0
    %4833 = vmatpush1.msra.mxu0 0.0
    %4834 = vmatprep.subr.mxu0 0.0
    %4835 = vmatpush1.msra.mxu0 0.0
    %4836 = vmatprep.subr.mxu0 0.0
    %4837 = vmatpush1.msra.mxu0 0.0
    %4838 = vmatprep.subr.mxu0 0.0
    %4839 = vmatpush1.msra.mxu0 0.0
    %4840 = vmatprep.subr.mxu0 0.0
    %4841 = vmatpush1.msra.mxu0 %v4788
    %4842 = vmatprep.subr.mxu0 0.0
    %4843 = vmatpush2.msra.mxu0 0.0
    %4844 = vmatprep.subr.mxu0 0.0
    %4845 = vmatpush2.msra.mxu0 0.0
    %4846 = vmatprep.subr.mxu0 0.0
    %4847 = vmatpush2.msra.mxu0 0.0
    %4848 = vmatprep.subr.mxu0 0.0
    %4849 = vmatpush2.msra.mxu0 0.0
    %4850 = vmatprep.subr.mxu0 0.0
    %4851 = vmatpush2.msra.mxu0 0.0
    %4852 = vmatprep.subr.mxu0 0.0
    %4853 = vmatpush2.msra.mxu0 0.0
    %4854 = vmatprep.subr.mxu0 0.0
    %4855 = vmatpush2.msra.mxu0 0.0
    %4856 = vmatprep.subr.mxu0 0.0
    %4857 = vmatpush2.msra.mxu0 0.0
    %4858 = vmatprep.subr.mxu0 0.0
    %4859 = vmatpush2.msra.mxu0 0.0
    %4860 = vmatprep.subr.mxu0 0.0
    %4861 = vmatpush2.msra.mxu0 0.0
    %4862 = vmatprep.subr.mxu0 0.0
    %4863 = vmatpush2.msra.mxu0 0.0
    %4864 = vmatprep.subr.mxu0 0.0
    %4865 = vmatpush2.msra.mxu0 0.0
    %4866 = vmatprep.subr.mxu0 0.0
    %4867 = vmatpush2.msra.mxu0 0.0
    %4868 = vmatprep.subr.mxu0 0.0
    %4869 = vmatpush2.msra.mxu0 0.0
    %4870 = vmatprep.subr.mxu0 0.0
    %4871 = vmatpush2.msra.mxu0 0.0
    %4872 = vmatprep.subr.mxu0 0.0
    %4873 = vmatpush2.msra.mxu0 0.0
    %4874 = vmatprep.mubr.f32.mxu0 0.0
    %4875 = vmatmul.mubr.f32.gmra.mxu0 %v4802
    %v4876 = vpop.f32.mrf.mxu0
    %v4877 = vadd.f32 0.0, %v4876
    %v4878 = vpop.f32.mrf.mxu0
    %4879 = vmatprep.mubr.f32.mxu0 0.0
    %4880 = vmatmul.mubr.f32.gmra.mxu0 %v4804
    %v4881 = vpop.f32.mrf.mxu0
    %v4882 = vadd.f32 0.0, %v4881
    %v4883 = vpop.f32.mrf.mxu0
    %4884 = vmatprep.mubr.f32.mxu0 0.0
    %4885 = vmatmul.mubr.f32.gmra.mxu0 %v4806
    %v4886 = vpop.f32.mrf.mxu0
    %v4887 = vadd.f32 0.0, %v4886
    %v4888 = vpop.f32.mrf.mxu0
    %4889 = vmatprep.mubr.f32.mxu0 0.0
    %4890 = vmatmul.mubr.f32.gmra.mxu0 %v4808
    %v4891 = vpop.f32.mrf.mxu0
    %v4892 = vadd.f32 0.0, %v4891
    %v4893 = vpop.f32.mrf.mxu0
    %4894 = vdwg.mxu0
    %v4899 = vcombine.high %v4877, %v4877
    %v4900 = vcombine.high %v4882, %v4882
    %v4901 = vcombine.high %v4887, %v4887
    %v4902 = vcombine.high %v4892, %v4892
    %v4908 = vcombine.high %v4402, %v4402
    %v4910 = vmul.f32 %v4877, %v4402
    %v4911 = vmul.f32 %v4899, %v4402
    %v4912 = vmul.f32 %v4882, %v4402
    %v4913 = vmul.f32 %v4900, %v4402
    %v4914 = vmul.f32 %v4887, %v4908
    %v4915 = vmul.f32 %v4901, %v4908
    %v4916 = vmul.f32 %v4892, %v4908
    %v4917 = vmul.f32 %v4902, %v4908
    %vm4918 = vcmask 1043456
    %v4919 = vsel %vm4918, %v4910, 0.0
    %v4920 = vrot.slane %v4919, 4
    %v4921 = vadd.f32 %v4919, %v4920
    %v4922 = vrot.slane %v4921, 2
    %v4923 = vadd.f32 %v4921, %v4922
    %v4924 = vrot.slane %v4923, 1
    %v4925 = vadd.f32 %v4923, %v4924
    %v4926 = vsel %vm4918, %v4911, 0.0
    %v4927 = vrot.slane %v4926, 4
    %v4928 = vadd.f32 %v4926, %v4927
    %v4929 = vrot.slane %v4928, 2
    %v4930 = vadd.f32 %v4928, %v4929
    %v4931 = vrot.slane %v4930, 1
    %v4932 = vadd.f32 %v4930, %v4931
    %v4933 = vsel %vm4918, %v4912, 0.0
    %v4934 = vrot.slane %v4933, 4
    %v4935 = vadd.f32 %v4933, %v4934
    %v4936 = vrot.slane %v4935, 2
    %v4937 = vadd.f32 %v4935, %v4936
    %v4938 = vrot.slane %v4937, 1
    %v4939 = vadd.f32 %v4937, %v4938
    %v4940 = vsel %vm4918, %v4913, 0.0
    %v4941 = vrot.slane %v4940, 4
    %v4942 = vadd.f32 %v4940, %v4941
    %v4943 = vrot.slane %v4942, 2
    %v4944 = vadd.f32 %v4942, %v4943
    %v4945 = vrot.slane %v4944, 1
    %v4946 = vadd.f32 %v4944, %v4945
    %v4947 = vsel %vm4918, %v4914, 0.0
    %v4948 = vrot.slane %v4947, 4
    %v4949 = vadd.f32 %v4947, %v4948
    %v4950 = vrot.slane %v4949, 2
    %v4951 = vadd.f32 %v4949, %v4950
    %v4952 = vrot.slane %v4951, 1
    %v4953 = vadd.f32 %v4951, %v4952
    %v4954 = vsel %vm4918, %v4915, 0.0
    %v4955 = vrot.slane %v4954, 4
    %v4956 = vadd.f32 %v4954, %v4955
    %v4957 = vrot.slane %v4956, 2
    %v4958 = vadd.f32 %v4956, %v4957
    %v4959 = vrot.slane %v4958, 1
    %v4960 = vadd.f32 %v4958, %v4959
    %v4961 = vsel %vm4918, %v4916, 0.0
    %v4962 = vrot.slane %v4961, 4
    %v4963 = vadd.f32 %v4961, %v4962
    %v4964 = vrot.slane %v4963, 2
    %v4965 = vadd.f32 %v4963, %v4964
    %v4966 = vrot.slane %v4965, 1
    %v4967 = vadd.f32 %v4965, %v4966
    %v4968 = vsel %vm4918, %v4917, 0.0
    %v4969 = vrot.slane %v4968, 4
    %v4970 = vadd.f32 %v4968, %v4969
    %v4971 = vrot.slane %v4970, 2
    %v4972 = vadd.f32 %v4970, %v4971
    %v4973 = vrot.slane %v4972, 1
    %v4974 = vadd.f32 %v4972, %v4973
    %v4983 = vsel %vm2847, %v4932, %v4925
    %v4984 = vsel %vm902, %v4939, %v4983
    %v4985 = vsel %vm2850, %v4946, %v4984
    %v4986 = vsel %vm2847, %v4960, %v4953
    %v4987 = vsel %vm902, %v4967, %v4986
    %v4988 = vsel %vm2850, %v4974, %v4987
    %v4991 = vunpack.c.l.s4 1983009808
    %v4992 = vunpack.c.0.s8 %v4991
    %v4993 = vlaneseq
    %v4994 = vshrl.u32 %v4993, 7
    %v4995 = vsub.s32 %v4992, %v4994
    %v4996 = vrot.slane %v4985, %v4995
    %v4999 = vunpack.c.l.s4 1983009808
    %v5000 = vunpack.c.0.s8 %v4999
    %v5001 = vlaneseq
    %v5002 = vshrl.u32 %v5001, 7
    %v5003 = vsub.s32 %v5000, %v5002
    %v5004 = vrot.slane %v4988, %v5003
    %v5005 = vcombine.low %v4996, %v5004
    %v5006 = vcombine.high %v4996, %v5004
    %v5008 = vunpack.c.l.s4 1934713408
    %v5009 = vunpack.c.0.s8 %v5008
    %v5010 = vlaneseq
    %v5011 = vshrl.u32 %v5010, 7
    %v5012 = vsub.s32 %v5009, %v5011
    %v5013 = vrot.slane %v5005, %v5012
    %v5015 = vunpack.c.l.s4 1934713408
    %v5016 = vunpack.c.0.s8 %v5015
    %v5017 = vlaneseq
    %v5018 = vshrl.u32 %v5017, 7
    %v5019 = vsub.s32 %v5016, %v5018
    %v5020 = vrot.slane %v5006, %v5019
    %v5021 = vcombine.high %v5013, 0.0
    %v5022 = vcombine.high %v5020, 0.0
    %v5023 = vld [vmem:[%s6] sm:$0xff]
    %v5024 = vld [vmem:[%s6 + $0x8] sm:$0xff]
    %v5025 = vld [vmem:[%s6 + $0x10] sm:$0xff]
    %v5026 = vld [vmem:[%s6 + $0x18] sm:$0xff]
    %v5027 = vld [vmem:[%s6 + $0x20] sm:$0xff]
    %v5028 = vld [vmem:[%s6 + $0x28] sm:$0xff]
    %v5029 = vld [vmem:[%s6 + $0x30] sm:$0xff]
    %v5030 = vld [vmem:[%s6 + $0x38] sm:$0xff]
    %v5031 = vld [vmem:[%s6 + $0x40] sm:$0xff]
    %v5032 = vld [vmem:[%s6 + $0x48] sm:$0xff]
    %v5033 = vld [vmem:[%s6 + $0x50] sm:$0xff]
    %v5034 = vld [vmem:[%s6 + $0x58] sm:$0xff]
    %v5035 = vld [vmem:[%s6 + $0x60] sm:$0xff]
    %v5036 = vld [vmem:[%s6 + $0x68] sm:$0xff]
    %v5037 = vld [vmem:[%s6 + $0x70] sm:$0xff]
    %v5038 = vld [vmem:[%s6 + $0x78] sm:$0xff]
    %v5039 = vld [vmem:[%s6 + $0x80] sm:$0xff]
    %v5040 = vld [vmem:[%s6 + $0x88] sm:$0xff]
    %v5041 = vld [vmem:[%s6 + $0x90] sm:$0xff]
    %v5042 = vld [vmem:[%s6 + $0x98] sm:$0xff]
    %v5043 = vld [vmem:[%s6 + $0xa0] sm:$0xff]
    %v5044 = vld [vmem:[%s6 + $0xa8] sm:$0xff]
    %v5045 = vld [vmem:[%s6 + $0xb0] sm:$0xff]
    %v5046 = vld [vmem:[%s6 + $0xb8] sm:$0xff]
    %v5047 = vld [vmem:[%s6 + $0xc0] sm:$0xff]
    %v5048 = vld [vmem:[%s6 + $0xc8] sm:$0xff]
    %v5049 = vld [vmem:[%s6 + $0xd0] sm:$0xff]
    %v5050 = vld [vmem:[%s6 + $0xd8] sm:$0xff]
    %v5051 = vld [vmem:[%s6 + $0xe0] sm:$0xff]
    %v5052 = vld [vmem:[%s6 + $0xe8] sm:$0xff]
    %v5053 = vld [vmem:[%s6 + $0xf0] sm:$0xff]
    %v5054 = vld [vmem:[%s6 + $0xf8] sm:$0xff]
    %v5055 = vld [vmem:[%s6 + $0x100] sm:$0xff]
    %v5056 = vld [vmem:[%s6 + $0x108] sm:$0xff]
    %v5057 = vld [vmem:[%s6 + $0x110] sm:$0xff]
    %v5058 = vld [vmem:[%s6 + $0x118] sm:$0xff]
    %v5059 = vld [vmem:[%s6 + $0x120] sm:$0xff]
    %v5060 = vld [vmem:[%s6 + $0x128] sm:$0xff]
    %v5061 = vld [vmem:[%s6 + $0x130] sm:$0xff]
    %v5062 = vld [vmem:[%s6 + $0x138] sm:$0xff]
    %v5063 = vld [vmem:[%s6 + $0x140] sm:$0xff]
    %v5064 = vld [vmem:[%s6 + $0x148] sm:$0xff]
    %v5065 = vld [vmem:[%s6 + $0x150] sm:$0xff]
    %v5066 = vld [vmem:[%s6 + $0x158] sm:$0xff]
    %v5067 = vld [vmem:[%s6 + $0x160] sm:$0xff]
    %v5068 = vld [vmem:[%s6 + $0x168] sm:$0xff]
    %v5069 = vld [vmem:[%s6 + $0x170] sm:$0xff]
    %v5070 = vld [vmem:[%s6 + $0x178] sm:$0xff]
    %v5071 = vld [vmem:[%s6 + $0x180] sm:$0xff]
    %v5072 = vld [vmem:[%s6 + $0x188] sm:$0xff]
    %v5073 = vld [vmem:[%s6 + $0x190] sm:$0xff]
    %v5074 = vld [vmem:[%s6 + $0x198] sm:$0xff]
    %v5075 = vld [vmem:[%s6 + $0x1a0] sm:$0xff]
    %v5076 = vld [vmem:[%s6 + $0x1a8] sm:$0xff]
    %v5077 = vld [vmem:[%s6 + $0x1b0] sm:$0xff]
    %v5078 = vld [vmem:[%s6 + $0x1b8] sm:$0xff]
    %v5079 = vld [vmem:[%s6 + $0x1c0] sm:$0xff]
    %v5080 = vld [vmem:[%s6 + $0x1c8] sm:$0xff]
    %v5081 = vld [vmem:[%s6 + $0x1d0] sm:$0xff]
    %v5082 = vld [vmem:[%s6 + $0x1d8] sm:$0xff]
    %v5083 = vld [vmem:[%s6 + $0x1e0] sm:$0xff]
    %v5084 = vld [vmem:[%s6 + $0x1e8] sm:$0xff]
    %v5085 = vld [vmem:[%s6 + $0x1f0] sm:$0xff]
    %v5086 = vld [vmem:[%s6 + $0x1f8] sm:$0xff]
    %v5087 = vld [vmem:[%s6 + $0x200] sm:$0xff]
    %v5088 = vld [vmem:[%s6 + $0x208] sm:$0xff]
    %v5089 = vld [vmem:[%s6 + $0x210] sm:$0xff]
    %v5090 = vld [vmem:[%s6 + $0x218] sm:$0xff]
    %v5091 = vld [vmem:[%s6 + $0x220] sm:$0xff]
    %v5092 = vld [vmem:[%s6 + $0x228] sm:$0xff]
    %v5093 = vld [vmem:[%s6 + $0x230] sm:$0xff]
    %v5094 = vld [vmem:[%s6 + $0x238] sm:$0xff]
    %v5095 = vld [vmem:[%s6 + $0x240] sm:$0xff]
    %v5096 = vld [vmem:[%s6 + $0x248] sm:$0xff]
    %v5097 = vld [vmem:[%s6 + $0x250] sm:$0xff]
    %v5098 = vld [vmem:[%s6 + $0x258] sm:$0xff]
    %v5099 = vld [vmem:[%s6 + $0x260] sm:$0xff]
    %v5100 = vld [vmem:[%s6 + $0x268] sm:$0xff]
    %v5101 = vld [vmem:[%s6 + $0x270] sm:$0xff]
    %v5102 = vld [vmem:[%s6 + $0x278] sm:$0xff]
    %v5103 = vld [vmem:[%s6 + $0x280] sm:$0xff]
    %v5104 = vld [vmem:[%s6 + $0x288] sm:$0xff]
    %v5105 = vld [vmem:[%s6 + $0x290] sm:$0xff]
    %v5106 = vld [vmem:[%s6 + $0x298] sm:$0xff]
    %v5107 = vld [vmem:[%s6 + $0x2a0] sm:$0xff]
    %v5108 = vld [vmem:[%s6 + $0x2a8] sm:$0xff]
    %v5109 = vld [vmem:[%s6 + $0x2b0] sm:$0xff]
    %v5110 = vld [vmem:[%s6 + $0x2b8] sm:$0xff]
    %v5111 = vld [vmem:[%s6 + $0x2c0] sm:$0xff]
    %v5112 = vld [vmem:[%s6 + $0x2c8] sm:$0xff]
    %v5113 = vld [vmem:[%s6 + $0x2d0] sm:$0xff]
    %v5114 = vld [vmem:[%s6 + $0x2d8] sm:$0xff]
    %v5115 = vld [vmem:[%s6 + $0x2e0] sm:$0xff]
    %v5116 = vld [vmem:[%s6 + $0x2e8] sm:$0xff]
    %v5117 = vld [vmem:[%s6 + $0x2f0] sm:$0xff]
    %v5118 = vld [vmem:[%s6 + $0x2f8] sm:$0xff]
    %v5119 = vld [vmem:[%s6 + $0x300] sm:$0xff]
    %v5120 = vld [vmem:[%s6 + $0x308] sm:$0xff]
    %v5121 = vld [vmem:[%s6 + $0x310] sm:$0xff]
    %v5122 = vld [vmem:[%s6 + $0x318] sm:$0xff]
    %v5123 = vld [vmem:[%s6 + $0x320] sm:$0xff]
    %v5124 = vld [vmem:[%s6 + $0x328] sm:$0xff]
    %v5125 = vld [vmem:[%s6 + $0x330] sm:$0xff]
    %v5126 = vld [vmem:[%s6 + $0x338] sm:$0xff]
    %v5127 = vld [vmem:[%s6 + $0x340] sm:$0xff]
    %v5128 = vld [vmem:[%s6 + $0x348] sm:$0xff]
    %v5129 = vld [vmem:[%s6 + $0x350] sm:$0xff]
    %v5130 = vld [vmem:[%s6 + $0x358] sm:$0xff]
    %v5131 = vld [vmem:[%s6 + $0x360] sm:$0xff]
    %v5132 = vld [vmem:[%s6 + $0x368] sm:$0xff]
    %v5133 = vld [vmem:[%s6 + $0x370] sm:$0xff]
    %v5134 = vld [vmem:[%s6 + $0x378] sm:$0xff]
    %v5135 = vld [vmem:[%s6 + $0x380] sm:$0xff]
    %v5136 = vld [vmem:[%s6 + $0x388] sm:$0xff]
    %v5137 = vld [vmem:[%s6 + $0x390] sm:$0xff]
    %v5138 = vld [vmem:[%s6 + $0x398] sm:$0xff]
    %v5139 = vld [vmem:[%s6 + $0x3a0] sm:$0xff]
    %v5140 = vld [vmem:[%s6 + $0x3a8] sm:$0xff]
    %v5141 = vld [vmem:[%s6 + $0x3b0] sm:$0xff]
    %v5142 = vld [vmem:[%s6 + $0x3b8] sm:$0xff]
    %v5143 = vld [vmem:[%s6 + $0x3c0] sm:$0xff]
    %v5144 = vld [vmem:[%s6 + $0x3c8] sm:$0xff]
    %v5145 = vld [vmem:[%s6 + $0x3d0] sm:$0xff]
    %v5146 = vld [vmem:[%s6 + $0x3d8] sm:$0xff]
    %v5147 = vld [vmem:[%s6 + $0x3e0] sm:$0xff]
    %v5148 = vld [vmem:[%s6 + $0x3e8] sm:$0xff]
    %v5149 = vld [vmem:[%s6 + $0x3f0] sm:$0xff]
    %v5150 = vld [vmem:[%s6 + $0x3f8] sm:$0xff]
    %v5151 = vld [vmem:[%s9 + $0x7] sm:$0x3]
    %v5153 = vlaneseq
    %v5154 = vshrl.u32 %v5153, 7
    %v5155 = vsub.s32 0, %v5154
    %v5156 = vrot.slane %v5151, %v5155
    %v5157 = vlaneseq
    %v5158 = vshrl.u32 %v5157, 7
    %v5159 = vsub.s32 1, %v5158
    %v5160 = vrot.slane %v5151, %v5159
    %5163 = vmatprep.subr.mxu0 %v5054
    %5164 = vmatpush1.msra.mxu0 %v5053
    %5165 = vmatprep.subr.mxu0 %v5052
    %5166 = vmatpush1.msra.mxu0 %v5051
    %5167 = vmatprep.subr.mxu0 %v5050
    %5168 = vmatpush1.msra.mxu0 %v5049
    %5169 = vmatprep.subr.mxu0 %v5048
    %5170 = vmatpush1.msra.mxu0 %v5047
    %5171 = vmatprep.subr.mxu0 %v5046
    %5172 = vmatpush1.msra.mxu0 %v5045
    %5173 = vmatprep.subr.mxu0 %v5044
    %5174 = vmatpush1.msra.mxu0 %v5043
    %5175 = vmatprep.subr.mxu0 %v5042
    %5176 = vmatpush1.msra.mxu0 %v5041
    %5177 = vmatprep.subr.mxu0 %v5040
    %5178 = vmatpush1.msra.mxu0 %v5039
    %5179 = vmatprep.subr.mxu0 %v5038
    %5180 = vmatpush1.msra.mxu0 %v5037
    %5181 = vmatprep.subr.mxu0 %v5036
    %5182 = vmatpush1.msra.mxu0 %v5035
    %5183 = vmatprep.subr.mxu0 %v5034
    %5184 = vmatpush1.msra.mxu0 %v5033
    %5185 = vmatprep.subr.mxu0 %v5032
    %5186 = vmatpush1.msra.mxu0 %v5031
    %5187 = vmatprep.subr.mxu0 %v5030
    %5188 = vmatpush1.msra.mxu0 %v5029
    %5189 = vmatprep.subr.mxu0 %v5028
    %5190 = vmatpush1.msra.mxu0 %v5027
    %5191 = vmatprep.subr.mxu0 %v5026
    %5192 = vmatpush1.msra.mxu0 %v5025
    %5193 = vmatprep.subr.mxu0 %v5024
    %5194 = vmatpush1.msra.mxu0 %v5023
    %5195 = vmatprep.subr.mxu0 %v5086
    %5196 = vmatpush2.msra.mxu0 %v5085
    %5197 = vmatprep.subr.mxu0 %v5084
    %5198 = vmatpush2.msra.mxu0 %v5083
    %5199 = vmatprep.subr.mxu0 %v5082
    %5200 = vmatpush2.msra.mxu0 %v5081
    %5201 = vmatprep.subr.mxu0 %v5080
    %5202 = vmatpush2.msra.mxu0 %v5079
    %5203 = vmatprep.subr.mxu0 %v5078
    %5204 = vmatpush2.msra.mxu0 %v5077
    %5205 = vmatprep.subr.mxu0 %v5076
    %5206 = vmatpush2.msra.mxu0 %v5075
    %5207 = vmatprep.subr.mxu0 %v5074
    %5208 = vmatpush2.msra.mxu0 %v5073
    %5209 = vmatprep.subr.mxu0 %v5072
    %5210 = vmatpush2.msra.mxu0 %v5071
    %5211 = vmatprep.subr.mxu0 %v5070
    %5212 = vmatpush2.msra.mxu0 %v5069
    %5213 = vmatprep.subr.mxu0 %v5068
    %5214 = vmatpush2.msra.mxu0 %v5067
    %5215 = vmatprep.subr.mxu0 %v5066
    %5216 = vmatpush2.msra.mxu0 %v5065
    %5217 = vmatprep.subr.mxu0 %v5064
    %5218 = vmatpush2.msra.mxu0 %v5063
    %5219 = vmatprep.subr.mxu0 %v5062
    %5220 = vmatpush2.msra.mxu0 %v5061
    %5221 = vmatprep.subr.mxu0 %v5060
    %5222 = vmatpush2.msra.mxu0 %v5059
    %5223 = vmatprep.subr.mxu0 %v5058
    %5224 = vmatpush2.msra.mxu0 %v5057
    %5225 = vmatprep.subr.mxu0 %v5056
    %5226 = vmatpush2.msra.mxu0 %v5055
    %5227 = vmatprep.mubr.f32.mxu0 %v5021
    %5228 = vmatmul.mubr.f32.gmra.mxu0 %v5013
    %v5229 = vpop.f32.mrf.mxu0
    %v5230 = vadd.f32 %v5156, %v5229
    %v5231 = vpop.f32.mrf.mxu0
    %v5232 = vadd.f32 %v5160, %v5231
    %5233 = vdwg.mxu0
    %5234 = vmatprep.subr.mxu0 %v5118
    %5235 = vmatpush1.msra.mxu0 %v5117
    %5236 = vmatprep.subr.mxu0 %v5116
    %5237 = vmatpush1.msra.mxu0 %v5115
    %5238 = vmatprep.subr.mxu0 %v5114
    %5239 = vmatpush1.msra.mxu0 %v5113
    %5240 = vmatprep.subr.mxu0 %v5112
    %5241 = vmatpush1.msra.mxu0 %v5111
    %5242 = vmatprep.subr.mxu0 %v5110
    %5243 = vmatpush1.msra.mxu0 %v5109
    %5244 = vmatprep.subr.mxu0 %v5108
    %5245 = vmatpush1.msra.mxu0 %v5107
    %5246 = vmatprep.subr.mxu0 %v5106
    %5247 = vmatpush1.msra.mxu0 %v5105
    %5248 = vmatprep.subr.mxu0 %v5104
    %5249 = vmatpush1.msra.mxu0 %v5103
    %5250 = vmatprep.subr.mxu0 %v5102
    %5251 = vmatpush1.msra.mxu0 %v5101
    %5252 = vmatprep.subr.mxu0 %v5100
    %5253 = vmatpush1.msra.mxu0 %v5099
    %5254 = vmatprep.subr.mxu0 %v5098
    %5255 = vmatpush1.msra.mxu0 %v5097
    %5256 = vmatprep.subr.mxu0 %v5096
    %5257 = vmatpush1.msra.mxu0 %v5095
    %5258 = vmatprep.subr.mxu0 %v5094
    %5259 = vmatpush1.msra.mxu0 %v5093
    %5260 = vmatprep.subr.mxu0 %v5092
    %5261 = vmatpush1.msra.mxu0 %v5091
    %5262 = vmatprep.subr.mxu0 %v5090
    %5263 = vmatpush1.msra.mxu0 %v5089
    %5264 = vmatprep.subr.mxu0 %v5088
    %5265 = vmatpush1.msra.mxu0 %v5087
    %5266 = vmatprep.subr.mxu0 %v5150
    %5267 = vmatpush2.msra.mxu0 %v5149
    %5268 = vmatprep.subr.mxu0 %v5148
    %5269 = vmatpush2.msra.mxu0 %v5147
    %5270 = vmatprep.subr.mxu0 %v5146
    %5271 = vmatpush2.msra.mxu0 %v5145
    %5272 = vmatprep.subr.mxu0 %v5144
    %5273 = vmatpush2.msra.mxu0 %v5143
    %5274 = vmatprep.subr.mxu0 %v5142
    %5275 = vmatpush2.msra.mxu0 %v5141
    %5276 = vmatprep.subr.mxu0 %v5140
    %5277 = vmatpush2.msra.mxu0 %v5139
    %5278 = vmatprep.subr.mxu0 %v5138
    %5279 = vmatpush2.msra.mxu0 %v5137
    %5280 = vmatprep.subr.mxu0 %v5136
    %5281 = vmatpush2.msra.mxu0 %v5135
    %5282 = vmatprep.subr.mxu0 %v5134
    %5283 = vmatpush2.msra.mxu0 %v5133
    %5284 = vmatprep.subr.mxu0 %v5132
    %5285 = vmatpush2.msra.mxu0 %v5131
    %5286 = vmatprep.subr.mxu0 %v5130
    %5287 = vmatpush2.msra.mxu0 %v5129
    %5288 = vmatprep.subr.mxu0 %v5128
    %5289 = vmatpush2.msra.mxu0 %v5127
    %5290 = vmatprep.subr.mxu0 %v5126
    %5291 = vmatpush2.msra.mxu0 %v5125
    %5292 = vmatprep.subr.mxu0 %v5124
    %5293 = vmatpush2.msra.mxu0 %v5123
    %5294 = vmatprep.subr.mxu0 %v5122
    %5295 = vmatpush2.msra.mxu0 %v5121
    %5296 = vmatprep.subr.mxu0 %v5120
    %5297 = vmatpush2.msra.mxu0 %v5119
    %5298 = vmatprep.mubr.f32.mxu0 %v5022
    %5299 = vmatmul.mubr.f32.gmra.mxu0 %v5020
    %v5300 = vpop.f32.mrf.mxu0
    %v5301 = vadd.f32 %v5230, %v5300
    %v5302 = vpop.f32.mrf.mxu0
    %v5303 = vadd.f32 %v5232, %v5302
    %5304 = vdwg.mxu0
    %v5305 = vmax.f32 %v5301, 0.0
    %v5306 = vmax.f32 %v5303, 0.0
    %v5309 = vcombine.low %v5305, %v5306
    %v5311 = vunpack.c.l.s4 1983009808
    %v5312 = vunpack.c.0.s8 %v5311
    %v5313 = vlaneseq
    %v5314 = vshrl.u32 %v5313, 7
    %v5315 = vsub.s32 %v5312, %v5314
    %v5316 = vrot.slane %v5309, %v5315
    %5318 = vst [vmem:[#allocation2] sm:$0xf] %v5316
    // Predicated region
    $region42: #{_lambda_.1} parent=1 // pred_check
      _
    $region43: #{_lambda_.1} parent=1 // pred_check_branch
      %5320 = sbr.rel (0) target = $region45
    $region44: #{_lambda_.1} parent=1 // pred_region
      %s5322 = ssub.s32 64, 64
      %5323 = vsyncadd [#allocation3], %s5322
      %s5325 = sshll.u32 [#allocation2], 4
      %s5326 = int_to_ptr.vmem [resolvable:$true] %s5325
      %5328 = dma.vmem_to_hbm [thread:$0]  %s5326, 64, %s10, [#allocation3]
    $region45: #{_lambda_.1} parent=1 // pred_fallthru
      _
    // Predicated region
    $region46: #{_lambda_.1} parent=1 // pred_check
      _
    $region47: #{_lambda_.1} parent=1 // pred_check_branch
      %5330 = sbr.rel (0) target = $region49
    $region48: #{_lambda_.1} parent=1 // pred_region
      %5331 = dma.done [#allocation3], 64
    $region49: #{_lambda_.1} parent=1 // pred_fallthru
      _
    %5332 = vsyncpa [#allocation3], 1

</llo_original>
